<compile_context>
chip_gen: v6e
topology: v6e:2x2x1
jax: 0.10.0
libtpu: 0.0.40
codegen_flags: <defaults>
</compile_context>

<pallas_src>
import functools

import jax
import jax.numpy as jnp
from jax.experimental import pallas as pl
from jax.experimental.pallas import tpu as pltpu

EPS = 1e-5


def _transformer_block_kernel(qh_ref, kh_ref, vh_ref, qres_ref,
                              wq_ref, wk_ref, wv_ref,
                              wo_ref, bo_ref,
                              g1_ref, be1_ref,
                              w1_ref, b1_ref,
                              w2_ref, b2_ref,
                              g2_ref, be2_ref,
                              o_ref,
                              *, heads, head_dim, embed, seq, nb):
    bf16 = jnp.bfloat16
    bh = nb * heads          # fused (batch, head) dim for batched attention matmuls
    m = nb * seq             # fused (batch, seq) row dim presented to the MXU

    # Head-major activations (transposed in the wrapper): (nb, H, L, D) -> (nb*H, L, D).
    # Leading-dim-only reshapes: layout no-ops.
    qh = qh_ref[...].reshape(bh, seq, head_dim)
    kh = kh_ref[...].reshape(bh, seq, head_dim)
    vh = vh_ref[...].reshape(bh, seq, head_dim)

    # Per-head linear projections fused into a single matmul each (M = bh*L rows, f32 acc).
    def proj(x, w_ref):
        y = jnp.dot(x.reshape(bh * seq, head_dim), w_ref[...],
                    preferred_element_type=jnp.float32)
        return y.reshape(bh, seq, head_dim)

    scale = 1.0 / (embed ** 0.5)
    qp = (proj(qh, wq_ref) * scale).astype(bf16)   # fold score scale into Q (cheaper than L*L)
    kp = proj(kh, wk_ref).astype(bf16)
    vp = proj(vh, wv_ref).astype(bf16)

    # Attention scores, batched over (batch*head); softmax in f32.
    s = jnp.einsum("bqd,bkd->bqk", qp, kp, preferred_element_type=jnp.float32)
    s = s - jnp.max(s, axis=-1, keepdims=True)
    p = jnp.exp(s)
    inv = pl.reciprocal(jnp.sum(p, axis=-1, keepdims=True), approx=True)
    attn = (p * inv).astype(bf16)

    ctx = jnp.einsum("bqk,bkd->bqd", attn, vp,
                     preferred_element_type=jnp.float32)             # (bh, L, D)
    ctx = ctx.reshape(nb, heads, seq, head_dim).astype(bf16)

    # fc_out: accumulate per-head (m, D) x (D, E) matmuls (lane-dense E output, f32 acc).
    acc = jnp.zeros((m, embed), jnp.float32)
    for h in range(heads):                                           # static unroll (few heads)
        acc = acc + jnp.dot(ctx[:, h].reshape(m, head_dim), wo_ref[h],
                            preferred_element_type=jnp.float32)
    attn_out = acc + bo_ref[...]

    # Residual + LayerNorm 1 (f32). Dropout = identity (eval mode).
    x = attn_out + qres_ref[...].reshape(m, embed)
    mu = jnp.mean(x, axis=-1, keepdims=True)
    var = jnp.mean((x - mu) ** 2, axis=-1, keepdims=True)
    x = (x - mu) * jax.lax.rsqrt(var + EPS) * g1_ref[...] + be1_ref[...]

    # Feed-forward (bf16 MXU operands, f32 accumulation / elementwise math).
    h1 = jnp.dot(x.astype(bf16), w1_ref[...],
                 preferred_element_type=jnp.float32) + b1_ref[...]
    h1 = jnp.maximum(h1, 0.0).astype(bf16)
    ff = jnp.dot(h1, w2_ref[...],
                 preferred_element_type=jnp.float32) + b2_ref[...]

    # Residual + LayerNorm 2 (f32). Dropout = identity (eval mode).
    y = ff + x
    mu2 = jnp.mean(y, axis=-1, keepdims=True)
    var2 = jnp.mean((y - mu2) ** 2, axis=-1, keepdims=True)
    out = (y - mu2) * jax.lax.rsqrt(var2 + EPS) * g2_ref[...] + be2_ref[...]

    o_ref[...] = out.reshape(nb, seq, embed).astype(o_ref.dtype)
    # TODO(synk): dropout is stochastic in PyTorch train mode; eval-mode (identity) implemented here.
    # TODO(synk): for long L / large FE, tile the (L,L) scores (flash pattern) and the FFN over FE.


def transformer_block(value, key, query, params, *, heads):
    N, L, E = query.shape
    D = E // heads
    FE = params["w1"].shape[0]  # forward_expansion * E
    bf16 = jnp.bfloat16
    f32 = jnp.float32

    # Pack batch elements per grid step so matmuls see a large M; keep >= 2 grid
    # steps when possible so both TensorCores (v7x megacore) get work.
    nb = max(1, min(N, 256 // max(L, 1)))
    if N >= 2:
        nb = max(1, min(nb, N // 2))
    while N % nb:
        nb -= 1
    grid = (N // nb,)

    # Head-major activations so heads become a batch dim of fused contractions.
    def to_heads(x):
        return x.reshape(N, L, heads, D).transpose(0, 2, 1, 3).astype(bf16)

    qh, kh, vh = to_heads(query), to_heads(key), to_heads(value)
    q_res = query.astype(f32)

    # Pre-transpose weights so kernel matmuls are plain x @ W; bf16 MXU operands.
    wq_t = params["wq"].T.astype(bf16)                       # (D, D)
    wk_t = params["wk"].T.astype(bf16)
    wv_t = params["wv"].T.astype(bf16)
    wo3 = params["wo"].T.reshape(heads, D, E).astype(bf16)   # (H, D, E)
    w1_t = params["w1"].T.astype(bf16)                       # (E, FE)
    w2_t = params["w2"].T.astype(bf16)                       # (FE, E)
    bo = params["bo"].reshape(1, E).astype(f32)
    b1 = params["b1"].reshape(1, FE).astype(f32)
    b2 = params["b2"].reshape(1, E).astype(f32)
    g1 = params["g1"].reshape(1, E).astype(f32)
    be1 = params["be1"].reshape(1, E).astype(f32)
    g2 = params["g2"].reshape(1, E).astype(f32)
    be2 = params["be2"].reshape(1, E).astype(f32)

    head_spec = pl.BlockSpec((nb, heads, L, D), lambda n: (n, 0, 0, 0))
    seq_spec = pl.BlockSpec((nb, L, E), lambda n: (n, 0, 0))

    def full_spec(shape):
        return pl.BlockSpec(shape, lambda n: (0,) * len(shape))

    kernel = functools.partial(_transformer_block_kernel,
                               heads=heads, head_dim=D, embed=E, seq=L, nb=nb)

    flops = int(3 * 2 * N * heads * L * D * D          # q/k/v projections
                + 2 * 2 * N * heads * L * L * D        # scores + attn @ V
                + 2 * N * L * E * E                    # fc_out
                + 2 * 2 * N * L * E * FE)              # FFN
    transcendentals = int(N * heads * L * L)
    bytes_accessed = int(3 * N * L * E * 2 + 2 * N * L * E * 4
                         + (3 * D * D + E * E + 2 * E * FE) * 2
                         + (6 * E + FE) * 4)

    return pl.pallas_call(
        kernel,
        out_shape=jax.ShapeDtypeStruct((N, L, E), query.dtype),
        grid=grid,
        in_specs=[
            head_spec, head_spec, head_spec, seq_spec,
            full_spec((D, D)), full_spec((D, D)), full_spec((D, D)),
            full_spec((heads, D, E)), full_spec((1, E)),
            full_spec((1, E)), full_spec((1, E)),
            full_spec((E, FE)), full_spec((1, FE)),
            full_spec((FE, E)), full_spec((1, E)),
            full_spec((1, E)), full_spec((1, E)),
        ],
        out_specs=seq_spec,
        compiler_params=pltpu.CompilerParams(
            dimension_semantics=("parallel",),
            vmem_limit_bytes=48 * 1024 * 1024),
        cost_estimate=pl.CostEstimate(flops=flops,
                                      transcendentals=transcendentals,
                                      bytes_accessed=bytes_accessed),
    )(qh, kh, vh, q_res,
      wq_t, wk_t, wv_t,
      wo3, bo,
      g1, be1,
      w1_t, b1,
      w2_t, b2,
      g2, be2)


def transformer_block_ref(value, key, query, params, *, heads):
    """Pure-JAX reference mirroring the PyTorch forward (eval mode)."""
    N, L, E = query.shape
    D = E // heads

    def proj(x, w):  # x: (N, L, H, D), Linear(D, D, bias=False): y = x @ W.T
        return jnp.einsum("nlhd,ed->nlhe", x, w)

    v = proj(value.reshape(N, L, heads, D), params["wv"])
    k = proj(key.reshape(N, L, heads, D), params["wk"])
    q = proj(query.reshape(N, L, heads, D), params["wq"])

    energy = jnp.einsum("nqhd,nkhd->nhqk", q, k) / (E ** 0.5)
    attn = jax.nn.softmax(energy, axis=3)
    out = jnp.einsum("nhql,nlhd->nqhd", attn, v).reshape(N, L, E)
    out = out @ params["wo"].T + params["bo"]

    def ln(x, g, b):
        mu = jnp.mean(x, axis=-1, keepdims=True)
        var = jnp.mean((x - mu) ** 2, axis=-1, keepdims=True)
        return (x - mu) * jax.lax.rsqrt(var + EPS) * g + b

    x = ln(out + query, params["g1"], params["be1"])
    ff = jnp.maximum(x @ params["w1"].T + params["b1"], 0.0) @ params["w2"].T + params["b2"]
    return ln(ff + x, params["g2"], params["be2"])


def init_params(key, embed_size, heads, forward_expansion):
    D = embed_size // heads
    FE = forward_expansion * embed_size
    ks = jax.random.split(key, 8)
    scale = 0.05
    return {
        "wv": scale * jax.random.normal(ks[0], (D, D), jnp.float32),
        "wk": scale * jax.random.normal(ks[1], (D, D), jnp.float32),
        "wq": scale * jax.random.normal(ks[2], (D, D), jnp.float32),
        "wo": scale * jax.random.normal(ks[3], (embed_size, embed_size), jnp.float32),
        "bo": scale * jax.random.normal(ks[4], (embed_size,), jnp.float32),
        "w1": scale * jax.random.normal(ks[5], (FE, embed_size), jnp.float32),
        "b1": scale * jax.random.normal(ks[6], (FE,), jnp.float32),
        "w2": scale * jax.random.normal(ks[7], (embed_size, FE), jnp.float32),
        "b2": jnp.zeros((embed_size,), jnp.float32),
        "g1": jnp.ones((embed_size,), jnp.float32),
        "be1": jnp.zeros((embed_size,), jnp.float32),
        "g2": jnp.ones((embed_size,), jnp.float32),
        "be2": jnp.zeros((embed_size,), jnp.float32),
    }


if __name__ == "__main__":
    # Lane-dense small shapes: batch=4, seq=16, embed=128, heads=4, forward_expansion=4.
    N, L, E, H, FWD = 4, 16, 128, 4, 4

    root = jax.random.PRNGKey(0)
    kp, kv, kk, kq = jax.random.split(root, 4)
    params = init_params(kp, E, H, FWD)

    value = jax.random.normal(kv, (N, L, E), jnp.float32)
    key = jax.random.normal(kk, (N, L, E), jnp.float32)
    query = jax.random.normal(kq, (N, L, E), jnp.float32)

    out = transformer_block(value, key, query, params, heads=H)
    out = jax.block_until_ready(out)

    ref = transformer_block_ref(value, key, query, params, heads=H)
    assert out.shape == (N, L, E)
    assert jnp.allclose(out, ref, atol=5e-2, rtol=5e-2), (
        "mismatch vs reference, max abs diff = %f" % float(jnp.max(jnp.abs(out - ref))))

    print("KERNEL_OK")
</pallas_src>

<mosaic_0001>
module attributes {stable_mosaic.version = 11 : i64} {
  func.func @_transformer_block_kernel(%arg0: i32, %arg1: memref<2x4x16x32xbf16, #tpu.memory_space<vmem>>, %arg2: memref<2x4x16x32xbf16, #tpu.memory_space<vmem>>, %arg3: memref<2x4x16x32xbf16, #tpu.memory_space<vmem>>, %arg4: memref<2x16x128xf32, #tpu.memory_space<vmem>>, %arg5: memref<32x32xbf16, #tpu.memory_space<vmem>>, %arg6: memref<32x32xbf16, #tpu.memory_space<vmem>>, %arg7: memref<32x32xbf16, #tpu.memory_space<vmem>>, %arg8: memref<4x32x128xbf16, #tpu.memory_space<vmem>>, %arg9: memref<1x128xf32, #tpu.memory_space<vmem>>, %arg10: memref<1x128xf32, #tpu.memory_space<vmem>>, %arg11: memref<1x128xf32, #tpu.memory_space<vmem>>, %arg12: memref<128x512xbf16, #tpu.memory_space<vmem>>, %arg13: memref<1x512xf32, #tpu.memory_space<vmem>>, %arg14: memref<512x128xbf16, #tpu.memory_space<vmem>>, %arg15: memref<1x128xf32, #tpu.memory_space<vmem>>, %arg16: memref<1x128xf32, #tpu.memory_space<vmem>>, %arg17: memref<1x128xf32, #tpu.memory_space<vmem>>, %arg18: memref<2x16x128xf32, #tpu.memory_space<vmem>>) attributes {dimension_semantics = [#tpu.dimension_semantics<parallel>], iteration_bounds = array<i64: 2>, scalar_prefetch = 0 : i64, scratch_operands = 0 : i64, tpu.core_type = #tpu.core_type<tc>, window_params = [{transform_indices = @transform_0, window_bounds = array<i64: 2, 4, 16, 32>}, {transform_indices = @transform_1, window_bounds = array<i64: 2, 4, 16, 32>}, {transform_indices = @transform_2, window_bounds = array<i64: 2, 4, 16, 32>}, {transform_indices = @transform_3, window_bounds = array<i64: 2, 16, 128>}, {pipeline_mode = #tpu.pipeline_mode<synchronous>, transform_indices = @transform_4, window_bounds = array<i64: 32, 32>}, {pipeline_mode = #tpu.pipeline_mode<synchronous>, transform_indices = @transform_5, window_bounds = array<i64: 32, 32>}, {pipeline_mode = #tpu.pipeline_mode<synchronous>, transform_indices = @transform_6, window_bounds = array<i64: 32, 32>}, {pipeline_mode = #tpu.pipeline_mode<synchronous>, transform_indices = @transform_7, window_bounds = array<i64: 4, 32, 128>}, {pipeline_mode = #tpu.pipeline_mode<synchronous>, transform_indices = @transform_8, window_bounds = array<i64: 1, 128>}, {pipeline_mode = #tpu.pipeline_mode<synchronous>, transform_indices = @transform_9, window_bounds = array<i64: 1, 128>}, {pipeline_mode = #tpu.pipeline_mode<synchronous>, transform_indices = @transform_10, window_bounds = array<i64: 1, 128>}, {pipeline_mode = #tpu.pipeline_mode<synchronous>, transform_indices = @transform_11, window_bounds = array<i64: 128, 512>}, {pipeline_mode = #tpu.pipeline_mode<synchronous>, transform_indices = @transform_12, window_bounds = array<i64: 1, 512>}, {pipeline_mode = #tpu.pipeline_mode<synchronous>, transform_indices = @transform_13, window_bounds = array<i64: 512, 128>}, {pipeline_mode = #tpu.pipeline_mode<synchronous>, transform_indices = @transform_14, window_bounds = array<i64: 1, 128>}, {pipeline_mode = #tpu.pipeline_mode<synchronous>, transform_indices = @transform_15, window_bounds = array<i64: 1, 128>}, {pipeline_mode = #tpu.pipeline_mode<synchronous>, transform_indices = @transform_16, window_bounds = array<i64: 1, 128>}, {transform_indices = @transform_17, window_bounds = array<i64: 2, 16, 128>}]} {
    %c0 = arith.constant 0 : index
    %c0_0 = arith.constant 0 : index
    %c0_1 = arith.constant 0 : index
    %c0_2 = arith.constant 0 : index
    %0 = vector.load %arg1[%c0, %c0_0, %c0_1, %c0_2] : memref<2x4x16x32xbf16, #tpu.memory_space<vmem>>, vector<2x4x16x32xbf16>
    %1 = vector.shape_cast %0 : vector<2x4x16x32xbf16> to vector<8x16x32xbf16>
    %c0_3 = arith.constant 0 : index
    %c0_4 = arith.constant 0 : index
    %c0_5 = arith.constant 0 : index
    %c0_6 = arith.constant 0 : index
    %2 = vector.load %arg2[%c0_3, %c0_4, %c0_5, %c0_6] : memref<2x4x16x32xbf16, #tpu.memory_space<vmem>>, vector<2x4x16x32xbf16>
    %3 = vector.shape_cast %2 : vector<2x4x16x32xbf16> to vector<8x16x32xbf16>
    %c0_7 = arith.constant 0 : index
    %c0_8 = arith.constant 0 : index
    %c0_9 = arith.constant 0 : index
    %c0_10 = arith.constant 0 : index
    %4 = vector.load %arg3[%c0_7, %c0_8, %c0_9, %c0_10] : memref<2x4x16x32xbf16, #tpu.memory_space<vmem>>, vector<2x4x16x32xbf16>
    %5 = vector.shape_cast %4 : vector<2x4x16x32xbf16> to vector<8x16x32xbf16>
    %6 = vector.shape_cast %1 : vector<8x16x32xbf16> to vector<128x32xbf16>
    %c0_11 = arith.constant 0 : index
    %c0_12 = arith.constant 0 : index
    %7 = vector.load %arg5[%c0_11, %c0_12] : memref<32x32xbf16, #tpu.memory_space<vmem>>, vector<32x32xbf16>
    %cst = arith.constant dense<0.000000e+00> : vector<128x32xf32>
    %8 = tpu.matmul %6, %7, %cst {dimension_numbers = #tpu.dot_dimension_numbers<[1], [0], [0], [1], [0, 0, 1, 1], [], []>} : vector<128x32xbf16>, vector<32x32xbf16>, vector<128x32xf32> -> vector<128x32xf32>
    %9 = vector.shape_cast %8 : vector<128x32xf32> to vector<8x16x32xf32>
    %cst_13 = arith.constant 0.0883883461 : f32
    %10 = vector.broadcast %cst_13 : f32 to vector<8x16x32xf32>
    %11 = arith.mulf %9, %10 : vector<8x16x32xf32>
    %12 = arith.truncf %11 : vector<8x16x32xf32> to vector<8x16x32xbf16>
    %13 = vector.shape_cast %3 : vector<8x16x32xbf16> to vector<128x32xbf16>
    %c0_14 = arith.constant 0 : index
    %c0_15 = arith.constant 0 : index
    %14 = vector.load %arg6[%c0_14, %c0_15] : memref<32x32xbf16, #tpu.memory_space<vmem>>, vector<32x32xbf16>
    %cst_16 = arith.constant dense<0.000000e+00> : vector<128x32xf32>
    %15 = tpu.matmul %13, %14, %cst_16 {dimension_numbers = #tpu.dot_dimension_numbers<[1], [0], [0], [1], [0, 0, 1, 1], [], []>} : vector<128x32xbf16>, vector<32x32xbf16>, vector<128x32xf32> -> vector<128x32xf32>
    %16 = vector.shape_cast %15 : vector<128x32xf32> to vector<8x16x32xf32>
    %17 = arith.truncf %16 : vector<8x16x32xf32> to vector<8x16x32xbf16>
    %18 = vector.shape_cast %5 : vector<8x16x32xbf16> to vector<128x32xbf16>
    %c0_17 = arith.constant 0 : index
    %c0_18 = arith.constant 0 : index
    %19 = vector.load %arg7[%c0_17, %c0_18] : memref<32x32xbf16, #tpu.memory_space<vmem>>, vector<32x32xbf16>
    %cst_19 = arith.constant dense<0.000000e+00> : vector<128x32xf32>
    %20 = tpu.matmul %18, %19, %cst_19 {dimension_numbers = #tpu.dot_dimension_numbers<[1], [0], [0], [1], [0, 0, 1, 1], [], []>} : vector<128x32xbf16>, vector<32x32xbf16>, vector<128x32xf32> -> vector<128x32xf32>
    %21 = vector.shape_cast %20 : vector<128x32xf32> to vector<8x16x32xf32>
    %22 = arith.truncf %21 : vector<8x16x32xf32> to vector<8x16x32xbf16>
    "tpu.trace_start"() <{level = 10 : i32, message = "bqd,bkd->bqk"}> : () -> ()
    %cst_20 = arith.constant dense<0.000000e+00> : vector<8x16x16xf32>
    %23 = tpu.matmul %12, %17, %cst_20 {dimension_numbers = #tpu.dot_dimension_numbers<[2], [2], [1], [1], [0, 0, 0, 1, 1, 1], [0], [0]>} : vector<8x16x32xbf16>, vector<8x16x32xbf16>, vector<8x16x16xf32> -> vector<8x16x16xf32>
    "tpu.trace_stop"() : () -> ()
    %cst_21 = arith.constant dense<0xFF800000> : vector<8x16xf32>
    %24 = vector.multi_reduction <maximumf>, %23, %cst_21 [2] : vector<8x16x16xf32> to vector<8x16xf32>
    %25 = vector.shape_cast %24 : vector<8x16xf32> to vector<8x16x1xf32>
    %26 = vector.broadcast %25 : vector<8x16x1xf32> to vector<8x16x16xf32>
    %27 = arith.subf %23, %26 : vector<8x16x16xf32>
    %28 = math.exp %27 : vector<8x16x16xf32>
    %cst_22 = arith.constant dense<0.000000e+00> : vector<8x16xf32>
    %29 = vector.multi_reduction <add>, %28, %cst_22 [2] : vector<8x16x16xf32> to vector<8x16xf32>
    %30 = vector.shape_cast %29 : vector<8x16xf32> to vector<8x16x1xf32>
    %31 = tpu.reciprocal %30 {approx = true} : vector<8x16x1xf32> -> vector<8x16x1xf32>
    %32 = vector.broadcast %31 : vector<8x16x1xf32> to vector<8x16x16xf32>
    %33 = arith.mulf %28, %32 : vector<8x16x16xf32>
    %34 = arith.truncf %33 : vector<8x16x16xf32> to vector<8x16x16xbf16>
    "tpu.trace_start"() <{level = 10 : i32, message = "bqk,bkd->bqd"}> : () -> ()
    %cst_23 = arith.constant dense<0.000000e+00> : vector<8x16x32xf32>
    %35 = tpu.matmul %34, %22, %cst_23 {dimension_numbers = #tpu.dot_dimension_numbers<[2], [1], [1], [2], [0, 0, 0, 1, 1, 2], [0], [0]>} : vector<8x16x16xbf16>, vector<8x16x32xbf16>, vector<8x16x32xf32> -> vector<8x16x32xf32>
    "tpu.trace_stop"() : () -> ()
    %36 = vector.shape_cast %35 : vector<8x16x32xf32> to vector<2x4x16x32xf32>
    %37 = arith.truncf %36 : vector<2x4x16x32xf32> to vector<2x4x16x32xbf16>
    %cst_24 = arith.constant 0.000000e+00 : f32
    %38 = vector.broadcast %cst_24 : f32 to vector<32x128xf32>
    %39 = vector.extract_strided_slice %37 {offsets = [0, 0, 0, 0], sizes = [2, 1, 16, 32], strides = [1, 1, 1, 1]} : vector<2x4x16x32xbf16> to vector<2x1x16x32xbf16>
    %40 = vector.shape_cast %39 : vector<2x1x16x32xbf16> to vector<2x16x32xbf16>
    %41 = vector.shape_cast %40 : vector<2x16x32xbf16> to vector<32x32xbf16>
    %c0_25 = arith.constant 0 : index
    %c0_26 = arith.constant 0 : index
    %c0_27 = arith.constant 0 : index
    %42 = vector.load %arg8[%c0_25, %c0_26, %c0_27] : memref<4x32x128xbf16, #tpu.memory_space<vmem>>, vector<1x32x128xbf16>
    %43 = vector.shape_cast %42 : vector<1x32x128xbf16> to vector<32x128xbf16>
    %cst_28 = arith.constant dense<0.000000e+00> : vector<32x128xf32>
    %44 = tpu.matmul %41, %43, %cst_28 {dimension_numbers = #tpu.dot_dimension_numbers<[1], [0], [0], [1], [0, 0, 1, 1], [], []>} : vector<32x32xbf16>, vector<32x128xbf16>, vector<32x128xf32> -> vector<32x128xf32>
    %45 = arith.addf %38, %44 : vector<32x128xf32>
    %46 = vector.extract_strided_slice %37 {offsets = [0, 1, 0, 0], sizes = [2, 1, 16, 32], strides = [1, 1, 1, 1]} : vector<2x4x16x32xbf16> to vector<2x1x16x32xbf16>
    %47 = vector.shape_cast %46 : vector<2x1x16x32xbf16> to vector<2x16x32xbf16>
    %48 = vector.shape_cast %47 : vector<2x16x32xbf16> to vector<32x32xbf16>
    %c1 = arith.constant 1 : index
    %c0_29 = arith.constant 0 : index
    %c0_30 = arith.constant 0 : index
    %49 = vector.load %arg8[%c1, %c0_29, %c0_30] : memref<4x32x128xbf16, #tpu.memory_space<vmem>>, vector<1x32x128xbf16>
    %50 = vector.shape_cast %49 : vector<1x32x128xbf16> to vector<32x128xbf16>
    %cst_31 = arith.constant dense<0.000000e+00> : vector<32x128xf32>
    %51 = tpu.matmul %48, %50, %cst_31 {dimension_numbers = #tpu.dot_dimension_numbers<[1], [0], [0], [1], [0, 0, 1, 1], [], []>} : vector<32x32xbf16>, vector<32x128xbf16>, vector<32x128xf32> -> vector<32x128xf32>
    %52 = arith.addf %45, %51 : vector<32x128xf32>
    %53 = vector.extract_strided_slice %37 {offsets = [0, 2, 0, 0], sizes = [2, 1, 16, 32], strides = [1, 1, 1, 1]} : vector<2x4x16x32xbf16> to vector<2x1x16x32xbf16>
    %54 = vector.shape_cast %53 : vector<2x1x16x32xbf16> to vector<2x16x32xbf16>
    %55 = vector.shape_cast %54 : vector<2x16x32xbf16> to vector<32x32xbf16>
    %c2 = arith.constant 2 : index
    %c0_32 = arith.constant 0 : index
    %c0_33 = arith.constant 0 : index
    %56 = vector.load %arg8[%c2, %c0_32, %c0_33] : memref<4x32x128xbf16, #tpu.memory_space<vmem>>, vector<1x32x128xbf16>
    %57 = vector.shape_cast %56 : vector<1x32x128xbf16> to vector<32x128xbf16>
    %cst_34 = arith.constant dense<0.000000e+00> : vector<32x128xf32>
    %58 = tpu.matmul %55, %57, %cst_34 {dimension_numbers = #tpu.dot_dimension_numbers<[1], [0], [0], [1], [0, 0, 1, 1], [], []>} : vector<32x32xbf16>, vector<32x128xbf16>, vector<32x128xf32> -> vector<32x128xf32>
    %59 = arith.addf %52, %58 : vector<32x128xf32>
    %60 = vector.extract_strided_slice %37 {offsets = [0, 3, 0, 0], sizes = [2, 1, 16, 32], strides = [1, 1, 1, 1]} : vector<2x4x16x32xbf16> to vector<2x1x16x32xbf16>
    %61 = vector.shape_cast %60 : vector<2x1x16x32xbf16> to vector<2x16x32xbf16>
    %62 = vector.shape_cast %61 : vector<2x16x32xbf16> to vector<32x32xbf16>
    %c3 = arith.constant 3 : index
    %c0_35 = arith.constant 0 : index
    %c0_36 = arith.constant 0 : index
    %63 = vector.load %arg8[%c3, %c0_35, %c0_36] : memref<4x32x128xbf16, #tpu.memory_space<vmem>>, vector<1x32x128xbf16>
    %64 = vector.shape_cast %63 : vector<1x32x128xbf16> to vector<32x128xbf16>
    %cst_37 = arith.constant dense<0.000000e+00> : vector<32x128xf32>
    %65 = tpu.matmul %62, %64, %cst_37 {dimension_numbers = #tpu.dot_dimension_numbers<[1], [0], [0], [1], [0, 0, 1, 1], [], []>} : vector<32x32xbf16>, vector<32x128xbf16>, vector<32x128xf32> -> vector<32x128xf32>
    %66 = arith.addf %59, %65 : vector<32x128xf32>
    %c0_38 = arith.constant 0 : index
    %c0_39 = arith.constant 0 : index
    %67 = vector.load %arg9[%c0_38, %c0_39] : memref<1x128xf32, #tpu.memory_space<vmem>>, vector<1x128xf32>
    %68 = vector.broadcast %67 : vector<1x128xf32> to vector<32x128xf32>
    %69 = arith.addf %66, %68 : vector<32x128xf32>
    %c0_40 = arith.constant 0 : index
    %c0_41 = arith.constant 0 : index
    %c0_42 = arith.constant 0 : index
    %70 = vector.load %arg4[%c0_40, %c0_41, %c0_42] : memref<2x16x128xf32, #tpu.memory_space<vmem>>, vector<2x16x128xf32>
    %71 = vector.shape_cast %70 : vector<2x16x128xf32> to vector<32x128xf32>
    %72 = arith.addf %69, %71 : vector<32x128xf32>
    %cst_43 = arith.constant dense<0.000000e+00> : vector<32xf32>
    %73 = vector.multi_reduction <add>, %72, %cst_43 [1] : vector<32x128xf32> to vector<32xf32>
    %74 = vector.shape_cast %73 : vector<32xf32> to vector<32x1xf32>
    %cst_44 = arith.constant 1.280000e+02 : f32
    %75 = vector.broadcast %cst_44 : f32 to vector<32x1xf32>
    %76 = arith.divf %74, %75 : vector<32x1xf32>
    %77 = vector.broadcast %76 : vector<32x1xf32> to vector<32x128xf32>
    %78 = arith.subf %72, %77 : vector<32x128xf32>
    %79 = arith.mulf %78, %78 : vector<32x128xf32>
    %cst_45 = arith.constant dense<0.000000e+00> : vector<32xf32>
    %80 = vector.multi_reduction <add>, %79, %cst_45 [1] : vector<32x128xf32> to vector<32xf32>
    %81 = vector.shape_cast %80 : vector<32xf32> to vector<32x1xf32>
    %cst_46 = arith.constant 1.280000e+02 : f32
    %82 = vector.broadcast %cst_46 : f32 to vector<32x1xf32>
    %83 = arith.divf %81, %82 : vector<32x1xf32>
    %84 = vector.broadcast %76 : vector<32x1xf32> to vector<32x128xf32>
    %85 = arith.subf %72, %84 : vector<32x128xf32>
    %cst_47 = arith.constant 9.99999974E-6 : f32
    %86 = vector.broadcast %cst_47 : f32 to vector<32x1xf32>
    %87 = arith.addf %83, %86 : vector<32x1xf32>
    %88 = math.rsqrt %87 : vector<32x1xf32>
    %89 = vector.broadcast %88 : vector<32x1xf32> to vector<32x128xf32>
    %90 = arith.mulf %85, %89 : vector<32x128xf32>
    %c0_48 = arith.constant 0 : index
    %c0_49 = arith.constant 0 : index
    %91 = vector.load %arg10[%c0_48, %c0_49] : memref<1x128xf32, #tpu.memory_space<vmem>>, vector<1x128xf32>
    %92 = vector.broadcast %91 : vector<1x128xf32> to vector<32x128xf32>
    %93 = arith.mulf %90, %92 : vector<32x128xf32>
    %c0_50 = arith.constant 0 : index
    %c0_51 = arith.constant 0 : index
    %94 = vector.load %arg11[%c0_50, %c0_51] : memref<1x128xf32, #tpu.memory_space<vmem>>, vector<1x128xf32>
    %95 = vector.broadcast %94 : vector<1x128xf32> to vector<32x128xf32>
    %96 = arith.addf %93, %95 : vector<32x128xf32>
    %97 = arith.truncf %96 : vector<32x128xf32> to vector<32x128xbf16>
    %c0_52 = arith.constant 0 : index
    %c0_53 = arith.constant 0 : index
    %98 = vector.load %arg12[%c0_52, %c0_53] : memref<128x512xbf16, #tpu.memory_space<vmem>>, vector<128x512xbf16>
    %cst_54 = arith.constant dense<0.000000e+00> : vector<32x512xf32>
    %99 = tpu.matmul %97, %98, %cst_54 {dimension_numbers = #tpu.dot_dimension_numbers<[1], [0], [0], [1], [0, 0, 1, 1], [], []>} : vector<32x128xbf16>, vector<128x512xbf16>, vector<32x512xf32> -> vector<32x512xf32>
    %c0_55 = arith.constant 0 : index
    %c0_56 = arith.constant 0 : index
    %100 = vector.load %arg13[%c0_55, %c0_56] : memref<1x512xf32, #tpu.memory_space<vmem>>, vector<1x512xf32>
    %101 = vector.broadcast %100 : vector<1x512xf32> to vector<32x512xf32>
    %102 = arith.addf %99, %101 : vector<32x512xf32>
    %cst_57 = arith.constant 0.000000e+00 : f32
    %103 = vector.broadcast %cst_57 : f32 to vector<32x512xf32>
    %104 = arith.maximumf %102, %103 : vector<32x512xf32>
    %105 = arith.truncf %104 : vector<32x512xf32> to vector<32x512xbf16>
    %c0_58 = arith.constant 0 : index
    %c0_59 = arith.constant 0 : index
    %106 = vector.load %arg14[%c0_58, %c0_59] : memref<512x128xbf16, #tpu.memory_space<vmem>>, vector<512x128xbf16>
    %cst_60 = arith.constant dense<0.000000e+00> : vector<32x128xf32>
    %107 = tpu.matmul %105, %106, %cst_60 {dimension_numbers = #tpu.dot_dimension_numbers<[1], [0], [0], [1], [0, 0, 1, 1], [], []>} : vector<32x512xbf16>, vector<512x128xbf16>, vector<32x128xf32> -> vector<32x128xf32>
    %c0_61 = arith.constant 0 : index
    %c0_62 = arith.constant 0 : index
    %108 = vector.load %arg15[%c0_61, %c0_62] : memref<1x128xf32, #tpu.memory_space<vmem>>, vector<1x128xf32>
    %109 = vector.broadcast %108 : vector<1x128xf32> to vector<32x128xf32>
    %110 = arith.addf %107, %109 : vector<32x128xf32>
    %111 = arith.addf %110, %96 : vector<32x128xf32>
    %cst_63 = arith.constant dense<0.000000e+00> : vector<32xf32>
    %112 = vector.multi_reduction <add>, %111, %cst_63 [1] : vector<32x128xf32> to vector<32xf32>
    %113 = vector.shape_cast %112 : vector<32xf32> to vector<32x1xf32>
    %cst_64 = arith.constant 1.280000e+02 : f32
    %114 = vector.broadcast %cst_64 : f32 to vector<32x1xf32>
    %115 = arith.divf %113, %114 : vector<32x1xf32>
    %116 = vector.broadcast %115 : vector<32x1xf32> to vector<32x128xf32>
    %117 = arith.subf %111, %116 : vector<32x128xf32>
    %118 = arith.mulf %117, %117 : vector<32x128xf32>
    %cst_65 = arith.constant dense<0.000000e+00> : vector<32xf32>
    %119 = vector.multi_reduction <add>, %118, %cst_65 [1] : vector<32x128xf32> to vector<32xf32>
    %120 = vector.shape_cast %119 : vector<32xf32> to vector<32x1xf32>
    %cst_66 = arith.constant 1.280000e+02 : f32
    %121 = vector.broadcast %cst_66 : f32 to vector<32x1xf32>
    %122 = arith.divf %120, %121 : vector<32x1xf32>
    %123 = vector.broadcast %115 : vector<32x1xf32> to vector<32x128xf32>
    %124 = arith.subf %111, %123 : vector<32x128xf32>
    %cst_67 = arith.constant 9.99999974E-6 : f32
    %125 = vector.broadcast %cst_67 : f32 to vector<32x1xf32>
    %126 = arith.addf %122, %125 : vector<32x1xf32>
    %127 = math.rsqrt %126 : vector<32x1xf32>
    %128 = vector.broadcast %127 : vector<32x1xf32> to vector<32x128xf32>
    %129 = arith.mulf %124, %128 : vector<32x128xf32>
    %c0_68 = arith.constant 0 : index
    %c0_69 = arith.constant 0 : index
    %130 = vector.load %arg16[%c0_68, %c0_69] : memref<1x128xf32, #tpu.memory_space<vmem>>, vector<1x128xf32>
    %131 = vector.broadcast %130 : vector<1x128xf32> to vector<32x128xf32>
    %132 = arith.mulf %129, %131 : vector<32x128xf32>
    %c0_70 = arith.constant 0 : index
    %c0_71 = arith.constant 0 : index
    %133 = vector.load %arg17[%c0_70, %c0_71] : memref<1x128xf32, #tpu.memory_space<vmem>>, vector<1x128xf32>
    %134 = vector.broadcast %133 : vector<1x128xf32> to vector<32x128xf32>
    %135 = arith.addf %132, %134 : vector<32x128xf32>
    %136 = vector.shape_cast %135 : vector<32x128xf32> to vector<2x16x128xf32>
    %c0_72 = arith.constant 0 : index
    %c0_73 = arith.constant 0 : index
    %c0_74 = arith.constant 0 : index
    %137 = vector.load %arg18[%c0_72, %c0_73, %c0_74] : memref<2x16x128xf32, #tpu.memory_space<vmem>>, vector<2x16x128xf32>
    tpu.vector_store %arg18[%c0_72, %c0_73, %c0_74], %136 {strides = array<i32>} : memref<2x16x128xf32, #tpu.memory_space<vmem>>, vector<2x16x128xf32>,
    return
  }
  func.func @transform_0(%arg0: i32) -> (i32, i32, i32, i32) {
    %c0_i32 = arith.constant 0 : i32
    %c0_i32_0 = arith.constant 0 : i32
    %c0_i32_1 = arith.constant 0 : i32
    %c0_i32_2 = arith.constant 0 : i32
    return %arg0, %c0_i32, %c0_i32_0, %c0_i32_1 : i32, i32, i32, i32
  }
  func.func @transform_1(%arg0: i32) -> (i32, i32, i32, i32) {
    %c0_i32 = arith.constant 0 : i32
    %c0_i32_0 = arith.constant 0 : i32
    %c0_i32_1 = arith.constant 0 : i32
    %c0_i32_2 = arith.constant 0 : i32
    return %arg0, %c0_i32, %c0_i32_0, %c0_i32_1 : i32, i32, i32, i32
  }
  func.func @transform_2(%arg0: i32) -> (i32, i32, i32, i32) {
    %c0_i32 = arith.constant 0 : i32
    %c0_i32_0 = arith.constant 0 : i32
    %c0_i32_1 = arith.constant 0 : i32
    %c0_i32_2 = arith.constant 0 : i32
    return %arg0, %c0_i32, %c0_i32_0, %c0_i32_1 : i32, i32, i32, i32
  }
  func.func @transform_3(%arg0: i32) -> (i32, i32, i32) {
    %c0_i32 = arith.constant 0 : i32
    %c0_i32_0 = arith.constant 0 : i32
    %c0_i32_1 = arith.constant 0 : i32
    return %arg0, %c0_i32, %c0_i32_0 : i32, i32, i32
  }
  func.func @transform_4(%arg0: i32) -> (i32, i32) {
    %c0_i32 = arith.constant 0 : i32
    %c0_i32_0 = arith.constant 0 : i32
    %c0_i32_1 = arith.constant 0 : i32
    return %c0_i32, %c0_i32_0 : i32, i32
  }
  func.func @transform_5(%arg0: i32) -> (i32, i32) {
    %c0_i32 = arith.constant 0 : i32
    %c0_i32_0 = arith.constant 0 : i32
    %c0_i32_1 = arith.constant 0 : i32
    return %c0_i32, %c0_i32_0 : i32, i32
  }
  func.func @transform_6(%arg0: i32) -> (i32, i32) {
    %c0_i32 = arith.constant 0 : i32
    %c0_i32_0 = arith.constant 0 : i32
    %c0_i32_1 = arith.constant 0 : i32
    return %c0_i32, %c0_i32_0 : i32, i32
  }
  func.func @transform_7(%arg0: i32) -> (i32, i32, i32) {
    %c0_i32 = arith.constant 0 : i32
    %c0_i32_0 = arith.constant 0 : i32
    %c0_i32_1 = arith.constant 0 : i32
    %c0_i32_2 = arith.constant 0 : i32
    return %c0_i32, %c0_i32_0, %c0_i32_1 : i32, i32, i32
  }
  func.func @transform_8(%arg0: i32) -> (i32, i32) {
    %c0_i32 = arith.constant 0 : i32
    %c0_i32_0 = arith.constant 0 : i32
    %c0_i32_1 = arith.constant 0 : i32
    return %c0_i32, %c0_i32_0 : i32, i32
  }
  func.func @transform_9(%arg0: i32) -> (i32, i32) {
    %c0_i32 = arith.constant 0 : i32
    %c0_i32_0 = arith.constant 0 : i32
    %c0_i32_1 = arith.constant 0 : i32
    return %c0_i32, %c0_i32_0 : i32, i32
  }
  func.func @transform_10(%arg0: i32) -> (i32, i32) {
    %c0_i32 = arith.constant 0 : i32
    %c0_i32_0 = arith.constant 0 : i32
    %c0_i32_1 = arith.constant 0 : i32
    return %c0_i32, %c0_i32_0 : i32, i32
  }
  func.func @transform_11(%arg0: i32) -> (i32, i32) {
    %c0_i32 = arith.constant 0 : i32
    %c0_i32_0 = arith.constant 0 : i32
    %c0_i32_1 = arith.constant 0 : i32
    return %c0_i32, %c0_i32_0 : i32, i32
  }
  func.func @transform_12(%arg0: i32) -> (i32, i32) {
    %c0_i32 = arith.constant 0 : i32
    %c0_i32_0 = arith.constant 0 : i32
    %c0_i32_1 = arith.constant 0 : i32
    return %c0_i32, %c0_i32_0 : i32, i32
  }
  func.func @transform_13(%arg0: i32) -> (i32, i32) {
    %c0_i32 = arith.constant 0 : i32
    %c0_i32_0 = arith.constant 0 : i32
    %c0_i32_1 = arith.constant 0 : i32
    return %c0_i32, %c0_i32_0 : i32, i32
  }
  func.func @transform_14(%arg0: i32) -> (i32, i32) {
    %c0_i32 = arith.constant 0 : i32
    %c0_i32_0 = arith.constant 0 : i32
    %c0_i32_1 = arith.constant 0 : i32
    return %c0_i32, %c0_i32_0 : i32, i32
  }
  func.func @transform_15(%arg0: i32) -> (i32, i32) {
    %c0_i32 = arith.constant 0 : i32
    %c0_i32_0 = arith.constant 0 : i32
    %c0_i32_1 = arith.constant 0 : i32
    return %c0_i32, %c0_i32_0 : i32, i32
  }
  func.func @transform_16(%arg0: i32) -> (i32, i32) {
    %c0_i32 = arith.constant 0 : i32
    %c0_i32_0 = arith.constant 0 : i32
    %c0_i32_1 = arith.constant 0 : i32
    return %c0_i32, %c0_i32_0 : i32, i32
  }
  func.func @transform_17(%arg0: i32) -> (i32, i32, i32) {
    %c0_i32 = arith.constant 0 : i32
    %c0_i32_0 = arith.constant 0 : i32
    %c0_i32_1 = arith.constant 0 : i32
    return %arg0, %c0_i32, %c0_i32_0 : i32, i32, i32
  }
}

</mosaic_0001>

<llo_original>
// kernel: tpu_custom_call.1
$region0: #{tpu_custom_call.1}
  #allocation0 [shape = 'u32[]', space=smem, size = 0x4, offset = 0x4, fixed_abs, tag = 'smem constant byte address 0x4 - core index']
  #allocation1 [shape = 'u32[144,128]{1,0:T(1,128)}', space=vmem, size = 0x12000, scoped, tag = 'internal scratch']
  %s0 = inlined_call_operand.hbm [shape: bf16[4,4,16,32], index: 0, kind: input, shape index: {}]
  %s1 = inlined_call_operand.hbm [shape: bf16[4,4,16,32], index: 1, kind: input, shape index: {}]
  %s2 = inlined_call_operand.hbm [shape: bf16[4,4,16,32], index: 2, kind: input, shape index: {}]
  %s3 = inlined_call_operand.hbm [shape: f32[4,16,128], index: 3, kind: input, shape index: {}]
  %s4 = inlined_call_operand.hbm [shape: bf16[32,32], index: 4, kind: input, shape index: {}]
  %s5 = inlined_call_operand.hbm [shape: bf16[32,32], index: 5, kind: input, shape index: {}]
  %s6 = inlined_call_operand.hbm [shape: bf16[32,32], index: 6, kind: input, shape index: {}]
  %s7 = inlined_call_operand.hbm [shape: bf16[4,32,128], index: 7, kind: input, shape index: {}]
  %s8 = inlined_call_operand.vmem [shape: f32[1,128], index: 8, kind: input, shape index: {}]
  %s9 = inlined_call_operand.vmem [shape: f32[1,128], index: 9, kind: input, shape index: {}]
  %s10 = inlined_call_operand.vmem [shape: f32[1,128], index: 10, kind: input, shape index: {}]
  %s11 = inlined_call_operand.hbm [shape: bf16[128,512], index: 11, kind: input, shape index: {}]
  %s12 = inlined_call_operand.vmem [shape: f32[1,512], index: 12, kind: input, shape index: {}]
  %s13 = inlined_call_operand.hbm [shape: bf16[512,128], index: 13, kind: input, shape index: {}]
  %s14 = inlined_call_operand.vmem [shape: f32[1,128], index: 14, kind: input, shape index: {}]
  %s15 = inlined_call_operand.vmem [shape: f32[1,128], index: 15, kind: input, shape index: {}]
  %s16 = inlined_call_operand.vmem [shape: f32[1,128], index: 16, kind: input, shape index: {}]
  %s17 = inlined_call_operand.hbm [shape: f32[4,16,128], index: 17, kind: output, shape index: {}]
  %s18 = sld [smem:[#allocation0]]
  $region141: #{tpu_custom_call.1} parent=0
    _
  %s20 = ssub.s32 1, %s18
  %s21 = scalar_select 0, %s20, %s18
  $region1: #{tpu_custom_call.1} parent=0
    #allocation2 [shape = 'u8[65536]{0}', space=vmem, size = 0x10000, scoped, tag = 'input window, operand 0']
    #allocation3 [shape = 's32[2]{0}', space=sflag, size = 0x8, scoped, tag = 'scoped memory for tpu_custom_call.1']
    #allocation4 [shape = 's32[2]{0}', space=sflag, size = 0x8, scoped, tag = 'scoped memory for tpu_custom_call.1']
    #allocation5 [shape = 'u8[65536]{0}', space=vmem, size = 0x10000, scoped, tag = 'input window, operand 1']
    #allocation6 [shape = 's32[2]{0}', space=sflag, size = 0x8, scoped, tag = 'scoped memory for tpu_custom_call.1']
    #allocation7 [shape = 'u8[65536]{0}', space=vmem, size = 0x10000, scoped, tag = 'input window, operand 2']
    #allocation8 [shape = 'u8[32768]{0}', space=vmem, size = 0x8000, scoped, tag = 'input window, operand 3']
    #allocation9 [shape = 's32[2]{0}', space=sflag, size = 0x8, scoped, tag = 'scoped memory for tpu_custom_call.1']
    #allocation10 [shape = 'u8[8192]{0}', space=vmem, size = 0x2000, scoped, tag = 'input window, operand 4, single buffered']
    #allocation11 [shape = 'u8[8192]{0}', space=vmem, size = 0x2000, scoped, tag = 'input window, operand 5, single buffered']
    #allocation12 [shape = 's32[1]{0}', space=sflag, size = 0x4, scoped, tag = 'scoped memory for tpu_custom_call.1']
    #allocation13 [shape = 'u8[8192]{0}', space=vmem, size = 0x2000, scoped, tag = 'input window, operand 6, single buffered']
    #allocation14 [shape = 'u8[32768]{0}', space=vmem, size = 0x8000, scoped, tag = 'input window, operand 7, single buffered']
    #allocation15 [shape = 's32[1]{0}', space=sflag, size = 0x4, scoped, tag = 'scoped memory for tpu_custom_call.1']
    #allocation16 [shape = 'u8[131072]{0}', space=vmem, size = 0x20000, scoped, tag = 'input window, operand 11, single buffered']
    #allocation17 [shape = 'u8[131072]{0}', space=vmem, size = 0x20000, scoped, tag = 'input window, operand 13, single buffered']
    #allocation18 [shape = 's32[1]{0}', space=sflag, size = 0x4, scoped, tag = 'scoped memory for tpu_custom_call.1']
    #allocation19 [shape = 'u8[32768]{0}', space=vmem, size = 0x8000, scoped, tag = 'output window, operand 0']
    %22 = vsyncpa [#allocation3], 0
    %s23 = scalar_lea.sflag [#allocation3], 1
    %24 = vsyncpa %s23, 0
    %25 = vsyncpa [#allocation6], 0
    %s26 = scalar_lea.sflag [#allocation6], 1
    %27 = vsyncpa %s26, 0
    %28 = vsyncpa [#allocation9], 0
    %s29 = scalar_lea.sflag [#allocation9], 1
    %30 = vsyncpa %s29, 0
    %31 = vsyncpa [#allocation12], 0
    %32 = vsyncpa [#allocation15], 0
    %33 = vsyncpa [#allocation18], 0
    %34 = vsyncpa [#allocation4], 0
    %s35 = scalar_lea.sflag [#allocation4], 1
    %36 = vsyncpa %s35, 0
    loop: start=0, step=1, limit=4
    $region2: #{tpu_custom_call.1} parent=1 // loop_pre_header
      _
    $region3: #{tpu_custom_call.1} parent=1 // loop_header
      %s38 = sphi 0, %s42
      %p39 = scmp.ge.s32.totalorder %s38, 4
      %s48 = sphi 0, %s50
      %s51 = sphi 0, %s48
      %s52 = sphi 0, %s51
      %s68 = sphi 0, %s52
      %s74 = sphi 0, %s76
      %s77 = sphi 0, %s74
      %s78 = sphi 0, %s77
      %s94 = sphi 0, %s78
      %s100 = sphi 0, %s102
      %s103 = sphi 0, %s100
      %s104 = sphi 0, %s103
      %s120 = sphi 0, %s104
      %s126 = sphi 0, %s128
      %s129 = sphi 0, %s126
      %s130 = sphi 0, %s129
      %s146 = sphi 0, %s130
      %s150 = sphi 0, %s150
      %s152 = sphi 0, %s150
      %s153 = sphi 0, %s152
      %s167 = sphi 0, %s153
      %s171 = sphi 0, %s171
      %s173 = sphi 0, %s171
      %s174 = sphi 0, %s173
      %s188 = sphi 0, %s174
      %s192 = sphi 0, %s192
      %s194 = sphi 0, %s192
      %s195 = sphi 0, %s194
      %s209 = sphi 0, %s195
      %s213 = sphi 0, %s213
      %s215 = sphi 0, %s213
      %s216 = sphi 0, %s215
      %s230 = sphi 0, %s216
      %s234 = sphi 0, %s234
      %s236 = sphi 0, %s234
      %s237 = sphi 0, %s236
      %s251 = sphi 0, %s237
      %s255 = sphi 0, %s255
      %s257 = sphi 0, %s255
      %s258 = sphi 0, %s257
      %s272 = sphi 0, %s258
      %s276 = sphi 0, %s276
      %s278 = sphi 0, %s276
      %s279 = sphi 0, %s278
      %s293 = sphi 0, %s279
      %s297 = sphi 0, %s297
      %s299 = sphi 0, %s297
      %s300 = sphi 0, %s299
      %s314 = sphi 0, %s300
      %s318 = sphi 0, %s318
      %s320 = sphi 0, %s318
      %s321 = sphi 0, %s320
      %s335 = sphi 0, %s321
      %s339 = sphi 0, %s339
      %s341 = sphi 0, %s339
      %s342 = sphi 0, %s341
      %s356 = sphi 0, %s342
      %s360 = sphi 0, %s360
      %s362 = sphi 0, %s360
      %s363 = sphi 0, %s362
      %s377 = sphi 0, %s363
      %s381 = sphi 0, %s381
      %s383 = sphi 0, %s381
      %s384 = sphi 0, %s383
      %s398 = sphi 0, %s384
      %s402 = sphi 0, %s402
      %s404 = sphi 0, %s402
      %s405 = sphi 0, %s404
      %s419 = sphi 0, %s405
      %s425 = sphi 0, %s427
      %s428 = sphi 0, %s425
      %s429 = sphi 0, %s428
      %s445 = sphi 0, %s429
    $region4: #{tpu_custom_call.1} parent=1 // loop_header_branch
      %41 = sbr.rel (%p39) target = $region8
    $region5: #{tpu_custom_call.1} parent=1 // loop_body
      %s43 = ssub.s32 %s38, 1
      %s44 = ssub.s32 %s38, 2
      %s45 = sadd.s32 %s38, 1
      %s46 = ssub.s32 %s38, %s45
      %p47 = scmp.eq.s32.totalorder %s46, 0
      %s49 = sadd.s32 %s48, 1
      %s50 = scalar_select %p47, %s48, %s49
      %p53 = pneg %p47
      %p54 = scmp.eq.s32.totalorder %s38, 1
      %p55 = por %p53, %p54
      %p56 = scmp.ne.s32.totalorder %s48, %s51
      %p57 = scmp.eq.s32.totalorder %s38, 0
      %p58 = por %p56, %p57
      %p59 = scmp.ne.s32.totalorder %s48, %s51
      %p60 = scmp.eq.s32.totalorder %s43, 1
      %p61 = por %p59, %p60
      %p62 = scmp.ne.s32.totalorder %s51, %s52
      %p63 = scmp.eq.s32.totalorder %s43, 0
      %p64 = por %p62, %p63
      %p65 = scmp.ne.s32.totalorder %s51, %s52
      %p66 = scmp.eq.s32.totalorder %s44, 1
      %p67 = por %p65, %p66
      %p69 = scmp.ne.s32.totalorder %s52, %s68
      %p70 = scmp.eq.s32.totalorder %s44, 0
      %p71 = por %p69, %p70
      %s72 = ssub.s32 %s38, %s45
      %p73 = scmp.eq.s32.totalorder %s72, 0
      %s75 = sadd.s32 %s74, 1
      %s76 = scalar_select %p73, %s74, %s75
      %p79 = pneg %p73
      %p80 = scmp.eq.s32.totalorder %s38, 1
      %p81 = por %p79, %p80
      %p82 = scmp.ne.s32.totalorder %s74, %s77
      %p83 = scmp.eq.s32.totalorder %s38, 0
      %p84 = por %p82, %p83
      %p85 = scmp.ne.s32.totalorder %s74, %s77
      %p86 = scmp.eq.s32.totalorder %s43, 1
      %p87 = por %p85, %p86
      %p88 = scmp.ne.s32.totalorder %s77, %s78
      %p89 = scmp.eq.s32.totalorder %s43, 0
      %p90 = por %p88, %p89
      %p91 = scmp.ne.s32.totalorder %s77, %s78
      %p92 = scmp.eq.s32.totalorder %s44, 1
      %p93 = por %p91, %p92
      %p95 = scmp.ne.s32.totalorder %s78, %s94
      %p96 = scmp.eq.s32.totalorder %s44, 0
      %p97 = por %p95, %p96
      %s98 = ssub.s32 %s38, %s45
      %p99 = scmp.eq.s32.totalorder %s98, 0
      %s101 = sadd.s32 %s100, 1
      %s102 = scalar_select %p99, %s100, %s101
      %p105 = pneg %p99
      %p106 = scmp.eq.s32.totalorder %s38, 1
      %p107 = por %p105, %p106
      %p108 = scmp.ne.s32.totalorder %s100, %s103
      %p109 = scmp.eq.s32.totalorder %s38, 0
      %p110 = por %p108, %p109
      %p111 = scmp.ne.s32.totalorder %s100, %s103
      %p112 = scmp.eq.s32.totalorder %s43, 1
      %p113 = por %p111, %p112
      %p114 = scmp.ne.s32.totalorder %s103, %s104
      %p115 = scmp.eq.s32.totalorder %s43, 0
      %p116 = por %p114, %p115
      %p117 = scmp.ne.s32.totalorder %s103, %s104
      %p118 = scmp.eq.s32.totalorder %s44, 1
      %p119 = por %p117, %p118
      %p121 = scmp.ne.s32.totalorder %s104, %s120
      %p122 = scmp.eq.s32.totalorder %s44, 0
      %p123 = por %p121, %p122
      %s124 = ssub.s32 %s38, %s45
      %p125 = scmp.eq.s32.totalorder %s124, 0
      %s127 = sadd.s32 %s126, 1
      %s128 = scalar_select %p125, %s126, %s127
      %p131 = pneg %p125
      %p132 = scmp.eq.s32.totalorder %s38, 1
      %p133 = por %p131, %p132
      %p134 = scmp.ne.s32.totalorder %s126, %s129
      %p135 = scmp.eq.s32.totalorder %s38, 0
      %p136 = por %p134, %p135
      %p137 = scmp.ne.s32.totalorder %s126, %s129
      %p138 = scmp.eq.s32.totalorder %s43, 1
      %p139 = por %p137, %p138
      %p140 = scmp.ne.s32.totalorder %s129, %s130
      %p141 = scmp.eq.s32.totalorder %s43, 0
      %p142 = por %p140, %p141
      %p143 = scmp.ne.s32.totalorder %s129, %s130
      %p144 = scmp.eq.s32.totalorder %s44, 1
      %p145 = por %p143, %p144
      %p147 = scmp.ne.s32.totalorder %s130, %s146
      %p148 = scmp.eq.s32.totalorder %s44, 0
      %p149 = por %p147, %p148
      %s151 = sadd.s32 %s150, 1
      %p154 = scmp.eq.s32.totalorder %s38, 1
      %p155 = scmp.ne.s32.totalorder %s150, %s152
      %p156 = scmp.eq.s32.totalorder %s38, 0
      %p157 = por %p155, %p156
      %p158 = scmp.ne.s32.totalorder %s150, %s152
      %p159 = scmp.eq.s32.totalorder %s43, 1
      %p160 = por %p158, %p159
      %p161 = scmp.ne.s32.totalorder %s152, %s153
      %p162 = scmp.eq.s32.totalorder %s43, 0
      %p163 = por %p161, %p162
      %p164 = scmp.ne.s32.totalorder %s152, %s153
      %p165 = scmp.eq.s32.totalorder %s44, 1
      %p166 = por %p164, %p165
      %p168 = scmp.ne.s32.totalorder %s153, %s167
      %p169 = scmp.eq.s32.totalorder %s44, 0
      %p170 = por %p168, %p169
      %s172 = sadd.s32 %s171, 1
      %p175 = scmp.eq.s32.totalorder %s38, 1
      %p176 = scmp.ne.s32.totalorder %s171, %s173
      %p177 = scmp.eq.s32.totalorder %s38, 0
      %p178 = por %p176, %p177
      %p179 = scmp.ne.s32.totalorder %s171, %s173
      %p180 = scmp.eq.s32.totalorder %s43, 1
      %p181 = por %p179, %p180
      %p182 = scmp.ne.s32.totalorder %s173, %s174
      %p183 = scmp.eq.s32.totalorder %s43, 0
      %p184 = por %p182, %p183
      %p185 = scmp.ne.s32.totalorder %s173, %s174
      %p186 = scmp.eq.s32.totalorder %s44, 1
      %p187 = por %p185, %p186
      %p189 = scmp.ne.s32.totalorder %s174, %s188
      %p190 = scmp.eq.s32.totalorder %s44, 0
      %p191 = por %p189, %p190
      %s193 = sadd.s32 %s192, 1
      %p196 = scmp.eq.s32.totalorder %s38, 1
      %p197 = scmp.ne.s32.totalorder %s192, %s194
      %p198 = scmp.eq.s32.totalorder %s38, 0
      %p199 = por %p197, %p198
      %p200 = scmp.ne.s32.totalorder %s192, %s194
      %p201 = scmp.eq.s32.totalorder %s43, 1
      %p202 = por %p200, %p201
      %p203 = scmp.ne.s32.totalorder %s194, %s195
      %p204 = scmp.eq.s32.totalorder %s43, 0
      %p205 = por %p203, %p204
      %p206 = scmp.ne.s32.totalorder %s194, %s195
      %p207 = scmp.eq.s32.totalorder %s44, 1
      %p208 = por %p206, %p207
      %p210 = scmp.ne.s32.totalorder %s195, %s209
      %p211 = scmp.eq.s32.totalorder %s44, 0
      %p212 = por %p210, %p211
      %s214 = sadd.s32 %s213, 1
      %p217 = scmp.eq.s32.totalorder %s38, 1
      %p218 = scmp.ne.s32.totalorder %s213, %s215
      %p219 = scmp.eq.s32.totalorder %s38, 0
      %p220 = por %p218, %p219
      %p221 = scmp.ne.s32.totalorder %s213, %s215
      %p222 = scmp.eq.s32.totalorder %s43, 1
      %p223 = por %p221, %p222
      %p224 = scmp.ne.s32.totalorder %s215, %s216
      %p225 = scmp.eq.s32.totalorder %s43, 0
      %p226 = por %p224, %p225
      %p227 = scmp.ne.s32.totalorder %s215, %s216
      %p228 = scmp.eq.s32.totalorder %s44, 1
      %p229 = por %p227, %p228
      %p231 = scmp.ne.s32.totalorder %s216, %s230
      %p232 = scmp.eq.s32.totalorder %s44, 0
      %p233 = por %p231, %p232
      %s235 = sadd.s32 %s234, 1
      %p238 = scmp.eq.s32.totalorder %s38, 1
      %p239 = scmp.ne.s32.totalorder %s234, %s236
      %p240 = scmp.eq.s32.totalorder %s38, 0
      %p241 = por %p239, %p240
      %p242 = scmp.ne.s32.totalorder %s234, %s236
      %p243 = scmp.eq.s32.totalorder %s43, 1
      %p244 = por %p242, %p243
      %p245 = scmp.ne.s32.totalorder %s236, %s237
      %p246 = scmp.eq.s32.totalorder %s43, 0
      %p247 = por %p245, %p246
      %p248 = scmp.ne.s32.totalorder %s236, %s237
      %p249 = scmp.eq.s32.totalorder %s44, 1
      %p250 = por %p248, %p249
      %p252 = scmp.ne.s32.totalorder %s237, %s251
      %p253 = scmp.eq.s32.totalorder %s44, 0
      %p254 = por %p252, %p253
      %s256 = sadd.s32 %s255, 1
      %p259 = scmp.eq.s32.totalorder %s38, 1
      %p260 = scmp.ne.s32.totalorder %s255, %s257
      %p261 = scmp.eq.s32.totalorder %s38, 0
      %p262 = por %p260, %p261
      %p263 = scmp.ne.s32.totalorder %s255, %s257
      %p264 = scmp.eq.s32.totalorder %s43, 1
      %p265 = por %p263, %p264
      %p266 = scmp.ne.s32.totalorder %s257, %s258
      %p267 = scmp.eq.s32.totalorder %s43, 0
      %p268 = por %p266, %p267
      %p269 = scmp.ne.s32.totalorder %s257, %s258
      %p270 = scmp.eq.s32.totalorder %s44, 1
      %p271 = por %p269, %p270
      %p273 = scmp.ne.s32.totalorder %s258, %s272
      %p274 = scmp.eq.s32.totalorder %s44, 0
      %p275 = por %p273, %p274
      %s277 = sadd.s32 %s276, 1
      %p280 = scmp.eq.s32.totalorder %s38, 1
      %p281 = scmp.ne.s32.totalorder %s276, %s278
      %p282 = scmp.eq.s32.totalorder %s38, 0
      %p283 = por %p281, %p282
      %p284 = scmp.ne.s32.totalorder %s276, %s278
      %p285 = scmp.eq.s32.totalorder %s43, 1
      %p286 = por %p284, %p285
      %p287 = scmp.ne.s32.totalorder %s278, %s279
      %p288 = scmp.eq.s32.totalorder %s43, 0
      %p289 = por %p287, %p288
      %p290 = scmp.ne.s32.totalorder %s278, %s279
      %p291 = scmp.eq.s32.totalorder %s44, 1
      %p292 = por %p290, %p291
      %p294 = scmp.ne.s32.totalorder %s279, %s293
      %p295 = scmp.eq.s32.totalorder %s44, 0
      %p296 = por %p294, %p295
      %s298 = sadd.s32 %s297, 1
      %p301 = scmp.eq.s32.totalorder %s38, 1
      %p302 = scmp.ne.s32.totalorder %s297, %s299
      %p303 = scmp.eq.s32.totalorder %s38, 0
      %p304 = por %p302, %p303
      %p305 = scmp.ne.s32.totalorder %s297, %s299
      %p306 = scmp.eq.s32.totalorder %s43, 1
      %p307 = por %p305, %p306
      %p308 = scmp.ne.s32.totalorder %s299, %s300
      %p309 = scmp.eq.s32.totalorder %s43, 0
      %p310 = por %p308, %p309
      %p311 = scmp.ne.s32.totalorder %s299, %s300
      %p312 = scmp.eq.s32.totalorder %s44, 1
      %p313 = por %p311, %p312
      %p315 = scmp.ne.s32.totalorder %s300, %s314
      %p316 = scmp.eq.s32.totalorder %s44, 0
      %p317 = por %p315, %p316
      %s319 = sadd.s32 %s318, 1
      %p322 = scmp.eq.s32.totalorder %s38, 1
      %p323 = scmp.ne.s32.totalorder %s318, %s320
      %p324 = scmp.eq.s32.totalorder %s38, 0
      %p325 = por %p323, %p324
      %p326 = scmp.ne.s32.totalorder %s318, %s320
      %p327 = scmp.eq.s32.totalorder %s43, 1
      %p328 = por %p326, %p327
      %p329 = scmp.ne.s32.totalorder %s320, %s321
      %p330 = scmp.eq.s32.totalorder %s43, 0
      %p331 = por %p329, %p330
      %p332 = scmp.ne.s32.totalorder %s320, %s321
      %p333 = scmp.eq.s32.totalorder %s44, 1
      %p334 = por %p332, %p333
      %p336 = scmp.ne.s32.totalorder %s321, %s335
      %p337 = scmp.eq.s32.totalorder %s44, 0
      %p338 = por %p336, %p337
      %s340 = sadd.s32 %s339, 1
      %p343 = scmp.eq.s32.totalorder %s38, 1
      %p344 = scmp.ne.s32.totalorder %s339, %s341
      %p345 = scmp.eq.s32.totalorder %s38, 0
      %p346 = por %p344, %p345
      %p347 = scmp.ne.s32.totalorder %s339, %s341
      %p348 = scmp.eq.s32.totalorder %s43, 1
      %p349 = por %p347, %p348
      %p350 = scmp.ne.s32.totalorder %s341, %s342
      %p351 = scmp.eq.s32.totalorder %s43, 0
      %p352 = por %p350, %p351
      %p353 = scmp.ne.s32.totalorder %s341, %s342
      %p354 = scmp.eq.s32.totalorder %s44, 1
      %p355 = por %p353, %p354
      %p357 = scmp.ne.s32.totalorder %s342, %s356
      %p358 = scmp.eq.s32.totalorder %s44, 0
      %p359 = por %p357, %p358
      %s361 = sadd.s32 %s360, 1
      %p364 = scmp.eq.s32.totalorder %s38, 1
      %p365 = scmp.ne.s32.totalorder %s360, %s362
      %p366 = scmp.eq.s32.totalorder %s38, 0
      %p367 = por %p365, %p366
      %p368 = scmp.ne.s32.totalorder %s360, %s362
      %p369 = scmp.eq.s32.totalorder %s43, 1
      %p370 = por %p368, %p369
      %p371 = scmp.ne.s32.totalorder %s362, %s363
      %p372 = scmp.eq.s32.totalorder %s43, 0
      %p373 = por %p371, %p372
      %p374 = scmp.ne.s32.totalorder %s362, %s363
      %p375 = scmp.eq.s32.totalorder %s44, 1
      %p376 = por %p374, %p375
      %p378 = scmp.ne.s32.totalorder %s363, %s377
      %p379 = scmp.eq.s32.totalorder %s44, 0
      %p380 = por %p378, %p379
      %s382 = sadd.s32 %s381, 1
      %p385 = scmp.eq.s32.totalorder %s38, 1
      %p386 = scmp.ne.s32.totalorder %s381, %s383
      %p387 = scmp.eq.s32.totalorder %s38, 0
      %p388 = por %p386, %p387
      %p389 = scmp.ne.s32.totalorder %s381, %s383
      %p390 = scmp.eq.s32.totalorder %s43, 1
      %p391 = por %p389, %p390
      %p392 = scmp.ne.s32.totalorder %s383, %s384
      %p393 = scmp.eq.s32.totalorder %s43, 0
      %p394 = por %p392, %p393
      %p395 = scmp.ne.s32.totalorder %s383, %s384
      %p396 = scmp.eq.s32.totalorder %s44, 1
      %p397 = por %p395, %p396
      %p399 = scmp.ne.s32.totalorder %s384, %s398
      %p400 = scmp.eq.s32.totalorder %s44, 0
      %p401 = por %p399, %p400
      %s403 = sadd.s32 %s402, 1
      %p406 = scmp.eq.s32.totalorder %s38, 1
      %p407 = scmp.ne.s32.totalorder %s402, %s404
      %p408 = scmp.eq.s32.totalorder %s38, 0
      %p409 = por %p407, %p408
      %p410 = scmp.ne.s32.totalorder %s402, %s404
      %p411 = scmp.eq.s32.totalorder %s43, 1
      %p412 = por %p410, %p411
      %p413 = scmp.ne.s32.totalorder %s404, %s405
      %p414 = scmp.eq.s32.totalorder %s43, 0
      %p415 = por %p413, %p414
      %p416 = scmp.ne.s32.totalorder %s404, %s405
      %p417 = scmp.eq.s32.totalorder %s44, 1
      %p418 = por %p416, %p417
      %p420 = scmp.ne.s32.totalorder %s405, %s419
      %p421 = scmp.eq.s32.totalorder %s44, 0
      %p422 = por %p420, %p421
      %s423 = ssub.s32 %s38, %s45
      %p424 = scmp.eq.s32.totalorder %s423, 0
      %s426 = sadd.s32 %s425, 1
      %s427 = scalar_select %p424, %s425, %s426
      %p430 = pneg %p424
      %p431 = scmp.eq.s32.totalorder %s38, 1
      %p432 = por %p430, %p431
      %p433 = scmp.ne.s32.totalorder %s425, %s428
      %p434 = scmp.eq.s32.totalorder %s38, 0
      %p435 = por %p433, %p434
      %p436 = scmp.ne.s32.totalorder %s425, %s428
      %p437 = scmp.eq.s32.totalorder %s43, 1
      %p438 = por %p436, %p437
      %p439 = scmp.ne.s32.totalorder %s428, %s429
      %p440 = scmp.eq.s32.totalorder %s43, 0
      %p441 = por %p439, %p440
      %p442 = scmp.ne.s32.totalorder %s428, %s429
      %p443 = scmp.eq.s32.totalorder %s44, 1
      %p444 = por %p442, %p443
      %p446 = scmp.ne.s32.totalorder %s429, %s445
      %p447 = scmp.eq.s32.totalorder %s44, 0
      %p448 = por %p446, %p447
      %p449 = scmp.le.s32.totalorder 1, %s38
      %p450 = scmp.lt.s32.totalorder %s38, 3
      %p451 = pnand %p449, %p450
      %p452 = pneg %p451
      // Predicated region
      $region9: #{tpu_custom_call.1} parent=5 // pred_check
        _
      $region10: #{tpu_custom_call.1} parent=5 // pred_check_branch
        %454 = sbr.rel (%p451) target = $region12
      $region11: #{tpu_custom_call.1} parent=5 // pred_region
        %s455 = ssub.s32 %s38, 1
        // Predicated region
        $region13: #{tpu_custom_call.1} parent=11 // pred_check
          %p456 = pneg %p163
        $region14: #{tpu_custom_call.1} parent=11 // pred_check_branch
          %458 = sbr.rel (%p456) target = $region16
        $region15: #{tpu_custom_call.1} parent=11 // pred_region
          %s460 = ssub.s32 256, 256
          %461 = vsyncadd [#allocation9], %s460
          %s462 = sshll.u32 [#allocation10], 4
          %s463 = int_to_ptr.vmem [resolvable:$true] %s462
          %468 = dma.hbm_to_vmem [thread:$0]  %s4, 256, %s463, [#allocation9], 64, 64, 4
        $region16: #{tpu_custom_call.1} parent=11 // pred_fallthru
          _
        // Predicated region
        $region17: #{tpu_custom_call.1} parent=11 // pred_check
          %p469 = pneg %p184
        $region18: #{tpu_custom_call.1} parent=11 // pred_check_branch
          %471 = sbr.rel (%p469) target = $region20
        $region19: #{tpu_custom_call.1} parent=11 // pred_region
          %s473 = ssub.s32 256, 256
          %474 = vsyncadd [#allocation12], %s473
          %s475 = sshll.u32 [#allocation11], 4
          %s476 = int_to_ptr.vmem [resolvable:$true] %s475
          %481 = dma.hbm_to_vmem [thread:$0]  %s5, 256, %s476, [#allocation12], 64, 64, 4
        $region20: #{tpu_custom_call.1} parent=11 // pred_fallthru
          _
        // Predicated region
        $region21: #{tpu_custom_call.1} parent=11 // pred_check
          %p482 = pneg %p205
        $region22: #{tpu_custom_call.1} parent=11 // pred_check_branch
          %484 = sbr.rel (%p482) target = $region24
        $region23: #{tpu_custom_call.1} parent=11 // pred_region
          %s486 = ssub.s32 256, 256
          %487 = vsyncadd [#allocation12], %s486
          %s488 = sshll.u32 [#allocation13], 4
          %s489 = int_to_ptr.vmem [resolvable:$true] %s488
          %494 = dma.hbm_to_vmem [thread:$0]  %s6, 256, %s489, [#allocation12], 64, 64, 4
        $region24: #{tpu_custom_call.1} parent=11 // pred_fallthru
          _
        // Predicated region
        $region25: #{tpu_custom_call.1} parent=11 // pred_check
          %p495 = pneg %p226
        $region26: #{tpu_custom_call.1} parent=11 // pred_check_branch
          %497 = sbr.rel (%p495) target = $region28
        $region27: #{tpu_custom_call.1} parent=11 // pred_region
          %s499 = ssub.s32 1024, 1024
          %500 = vsyncadd [#allocation15], %s499
          %s501 = sshll.u32 [#allocation14], 4
          %s502 = int_to_ptr.vmem [resolvable:$true] %s501
          %507 = dma.hbm_to_vmem [thread:$0]  %s7, 1024, %s502, [#allocation15], 64, 64, 4
        $region28: #{tpu_custom_call.1} parent=11 // pred_fallthru
          _
        // Predicated region
        $region29: #{tpu_custom_call.1} parent=11 // pred_check
          %p508 = pneg %p247
        $region30: #{tpu_custom_call.1} parent=11 // pred_check_branch
          %510 = sbr.rel (%p508) target = $region32
        $region31: #{tpu_custom_call.1} parent=11 // pred_region
          _
        $region32: #{tpu_custom_call.1} parent=11 // pred_fallthru
          _
        // Predicated region
        $region33: #{tpu_custom_call.1} parent=11 // pred_check
          %p511 = pneg %p268
        $region34: #{tpu_custom_call.1} parent=11 // pred_check_branch
          %513 = sbr.rel (%p511) target = $region36
        $region35: #{tpu_custom_call.1} parent=11 // pred_region
          _
        $region36: #{tpu_custom_call.1} parent=11 // pred_fallthru
          _
        // Predicated region
        $region37: #{tpu_custom_call.1} parent=11 // pred_check
          %p514 = pneg %p289
        $region38: #{tpu_custom_call.1} parent=11 // pred_check_branch
          %516 = sbr.rel (%p514) target = $region40
        $region39: #{tpu_custom_call.1} parent=11 // pred_region
          _
        $region40: #{tpu_custom_call.1} parent=11 // pred_fallthru
          _
        // Predicated region
        $region41: #{tpu_custom_call.1} parent=11 // pred_check
          %p517 = pneg %p310
        $region42: #{tpu_custom_call.1} parent=11 // pred_check_branch
          %519 = sbr.rel (%p517) target = $region44
        $region43: #{tpu_custom_call.1} parent=11 // pred_region
          %s521 = ssub.s32 4096, 4096
          %522 = vsyncadd [#allocation15], %s521
          %s523 = sshll.u32 [#allocation16], 4
          %s524 = int_to_ptr.vmem [resolvable:$true] %s523
          %529 = dma.hbm_to_vmem [thread:$0]  %s11, 4096, %s524, [#allocation15], 256, 256, 16
        $region44: #{tpu_custom_call.1} parent=11 // pred_fallthru
          _
        // Predicated region
        $region45: #{tpu_custom_call.1} parent=11 // pred_check
          %p530 = pneg %p331
        $region46: #{tpu_custom_call.1} parent=11 // pred_check_branch
          %532 = sbr.rel (%p530) target = $region48
        $region47: #{tpu_custom_call.1} parent=11 // pred_region
          _
        $region48: #{tpu_custom_call.1} parent=11 // pred_fallthru
          _
        // Predicated region
        $region49: #{tpu_custom_call.1} parent=11 // pred_check
          %p533 = pneg %p352
        $region50: #{tpu_custom_call.1} parent=11 // pred_check_branch
          %535 = sbr.rel (%p533) target = $region52
        $region51: #{tpu_custom_call.1} parent=11 // pred_region
          %s537 = ssub.s32 4096, 4096
          %538 = vsyncadd [#allocation18], %s537
          %s539 = sshll.u32 [#allocation17], 4
          %s540 = int_to_ptr.vmem [resolvable:$true] %s539
          %545 = dma.hbm_to_vmem [thread:$0]  %s13, 4096, %s540, [#allocation18], 64, 64, 4
        $region52: #{tpu_custom_call.1} parent=11 // pred_fallthru
          _
        // Predicated region
        $region53: #{tpu_custom_call.1} parent=11 // pred_check
          %p546 = pneg %p373
        $region54: #{tpu_custom_call.1} parent=11 // pred_check_branch
          %548 = sbr.rel (%p546) target = $region56
        $region55: #{tpu_custom_call.1} parent=11 // pred_region
          _
        $region56: #{tpu_custom_call.1} parent=11 // pred_fallthru
          _
        // Predicated region
        $region57: #{tpu_custom_call.1} parent=11 // pred_check
          %p549 = pneg %p394
        $region58: #{tpu_custom_call.1} parent=11 // pred_check_branch
          %551 = sbr.rel (%p549) target = $region60
        $region59: #{tpu_custom_call.1} parent=11 // pred_region
          _
        $region60: #{tpu_custom_call.1} parent=11 // pred_fallthru
          _
        // Predicated region
        $region61: #{tpu_custom_call.1} parent=11 // pred_check
          %p552 = pneg %p415
        $region62: #{tpu_custom_call.1} parent=11 // pred_check_branch
          %554 = sbr.rel (%p552) target = $region64
        $region63: #{tpu_custom_call.1} parent=11 // pred_region
          _
        $region64: #{tpu_custom_call.1} parent=11 // pred_fallthru
          _
      $region12: #{tpu_custom_call.1} parent=5 // pred_fallthru
        _
      %p555 = scmp.lt.s32.totalorder %s38, 2
      // Predicated region
      $region65: #{tpu_custom_call.1} parent=5 // pred_check
        %p556 = pneg %p555
      $region66: #{tpu_custom_call.1} parent=5 // pred_check_branch
        %558 = sbr.rel (%p556) target = $region68
      $region67: #{tpu_custom_call.1} parent=5 // pred_region
        // Predicated region
        $region69: #{tpu_custom_call.1} parent=67 // pred_check
          %p559 = pneg %p58
        $region70: #{tpu_custom_call.1} parent=67 // pred_check_branch
          %561 = sbr.rel (%p559) target = $region72
        $region71: #{tpu_custom_call.1} parent=67 // pred_region
          %s562 = sand.u32 %s48, 1
          %s563 = scalar_lea.sflag [#allocation3], %s562
          %s564 = sand.u32 %s48, 1
          %s565 = smul.addr %s564, 64
          %s566 = scalar_lea.vmem [#allocation2], %s565
          %s567 = smul.u32 2, %s38
          %s569 = ssub.s32 1024, 1024
          %570 = vsyncadd %s563, %s569
          %s571 = smul.addr %s567, 8
          %s572 = smul.addr %s571, 64
          %s573 = scalar_lea.hbm %s0, %s572
          %s574 = sshll.u32 %s566, 4
          %s575 = int_to_ptr.vmem [resolvable:$true] %s574
          %580 = dma.hbm_to_vmem [thread:$0]  %s573, 1024, %s575, %s563, 64, 64, 4
        $region72: #{tpu_custom_call.1} parent=67 // pred_fallthru
          _
        // Predicated region
        $region73: #{tpu_custom_call.1} parent=67 // pred_check
          %p581 = pneg %p84
        $region74: #{tpu_custom_call.1} parent=67 // pred_check_branch
          %583 = sbr.rel (%p581) target = $region76
        $region75: #{tpu_custom_call.1} parent=67 // pred_region
          %s584 = sand.u32 %s38, 1
          %s585 = scalar_lea.sflag [#allocation6], %s584
          %s586 = sand.u32 %s74, 1
          %s587 = smul.addr %s586, 64
          %s588 = scalar_lea.vmem [#allocation5], %s587
          %s589 = smul.u32 2, %s38
          %s591 = ssub.s32 1024, 1024
          %592 = vsyncadd %s585, %s591
          %s593 = smul.addr %s589, 8
          %s594 = smul.addr %s593, 64
          %s595 = scalar_lea.hbm %s1, %s594
          %s596 = sshll.u32 %s588, 4
          %s597 = int_to_ptr.vmem [resolvable:$true] %s596
          %602 = dma.hbm_to_vmem [thread:$0]  %s595, 1024, %s597, %s585, 64, 64, 4
        $region76: #{tpu_custom_call.1} parent=67 // pred_fallthru
          _
        // Predicated region
        $region77: #{tpu_custom_call.1} parent=67 // pred_check
          %p603 = pneg %p110
        $region78: #{tpu_custom_call.1} parent=67 // pred_check_branch
          %605 = sbr.rel (%p603) target = $region80
        $region79: #{tpu_custom_call.1} parent=67 // pred_region
          %s606 = sand.u32 %s38, 1
          %s607 = scalar_lea.sflag [#allocation6], %s606
          %s608 = sand.u32 %s100, 1
          %s609 = smul.addr %s608, 64
          %s610 = scalar_lea.vmem [#allocation7], %s609
          %s611 = smul.u32 2, %s38
          %s613 = ssub.s32 1024, 1024
          %614 = vsyncadd %s607, %s613
          %s615 = smul.addr %s611, 8
          %s616 = smul.addr %s615, 64
          %s617 = scalar_lea.hbm %s2, %s616
          %s618 = sshll.u32 %s610, 4
          %s619 = int_to_ptr.vmem [resolvable:$true] %s618
          %624 = dma.hbm_to_vmem [thread:$0]  %s617, 1024, %s619, %s607, 64, 64, 4
        $region80: #{tpu_custom_call.1} parent=67 // pred_fallthru
          _
        // Predicated region
        $region81: #{tpu_custom_call.1} parent=67 // pred_check
          %p625 = pneg %p136
        $region82: #{tpu_custom_call.1} parent=67 // pred_check_branch
          %627 = sbr.rel (%p625) target = $region84
        $region83: #{tpu_custom_call.1} parent=67 // pred_region
          %s628 = sand.u32 %s38, 1
          %s629 = scalar_lea.sflag [#allocation9], %s628
          %s630 = sand.u32 %s126, 1
          %s631 = smul.addr %s630, 32
          %s632 = scalar_lea.vmem [#allocation8], %s631
          %s633 = smul.u32 2, %s38
          %s635 = ssub.s32 512, 512
          %636 = vsyncadd %s629, %s635
          %s637 = smul.addr %s633, 2
          %s638 = smul.addr %s637, 128
          %s639 = scalar_lea.hbm %s3, %s638
          %s640 = sshll.u32 %s632, 4
          %s641 = int_to_ptr.vmem [resolvable:$true] %s640
          %646 = dma.hbm_to_vmem [thread:$0]  %s639, 512, %s641, %s629, 128, 128, 8
        $region84: #{tpu_custom_call.1} parent=67 // pred_fallthru
          _
      $region68: #{tpu_custom_call.1} parent=5 // pred_fallthru
        _
      %p647 = scmp.le.s32.totalorder 1, %s38
      %p648 = scmp.lt.s32.totalorder %s38, 3
      %p649 = pnand %p647, %p648
      %p650 = pneg %p649
      // Predicated region
      $region85: #{tpu_custom_call.1} parent=5 // pred_check
        _
      $region86: #{tpu_custom_call.1} parent=5 // pred_check_branch
        %652 = sbr.rel (%p649) target = $region88
      $region87: #{tpu_custom_call.1} parent=5 // pred_region
        %s653 = ssub.s32 %s38, 1
        %s654 = sand.u32 %s51, 1
        %s655 = scalar_lea.sflag [#allocation3], %s654
        %s656 = sand.u32 %s51, 1
        %s657 = smul.addr %s656, 64
        %s658 = scalar_lea.vmem [#allocation2], %s657
        // Predicated region
        $region89: #{tpu_custom_call.1} parent=87 // pred_check
          %p659 = pneg %p64
        $region90: #{tpu_custom_call.1} parent=87 // pred_check_branch
          %661 = sbr.rel (%p659) target = $region92
        $region91: #{tpu_custom_call.1} parent=87 // pred_region
          %662 = dma.done %s655, 1024
        $region92: #{tpu_custom_call.1} parent=87 // pred_fallthru
          _
        %s663 = sand.u32 %s43, 1
        %s664 = scalar_lea.sflag [#allocation6], %s663
        %s665 = sand.u32 %s77, 1
        %s666 = smul.addr %s665, 64
        %s667 = scalar_lea.vmem [#allocation5], %s666
        // Predicated region
        $region93: #{tpu_custom_call.1} parent=87 // pred_check
          %p668 = pneg %p90
        $region94: #{tpu_custom_call.1} parent=87 // pred_check_branch
          %670 = sbr.rel (%p668) target = $region96
        $region95: #{tpu_custom_call.1} parent=87 // pred_region
          %671 = dma.done %s664, 1024
        $region96: #{tpu_custom_call.1} parent=87 // pred_fallthru
          _
        %s672 = sand.u32 %s43, 1
        %s673 = scalar_lea.sflag [#allocation6], %s672
        %s674 = sand.u32 %s103, 1
        %s675 = smul.addr %s674, 64
        %s676 = scalar_lea.vmem [#allocation7], %s675
        // Predicated region
        $region97: #{tpu_custom_call.1} parent=87 // pred_check
          %p677 = pneg %p116
        $region98: #{tpu_custom_call.1} parent=87 // pred_check_branch
          %679 = sbr.rel (%p677) target = $region100
        $region99: #{tpu_custom_call.1} parent=87 // pred_region
          %680 = dma.done %s673, 1024
        $region100: #{tpu_custom_call.1} parent=87 // pred_fallthru
          _
        %s681 = sand.u32 %s43, 1
        %s682 = scalar_lea.sflag [#allocation9], %s681
        %s683 = sand.u32 %s129, 1
        %s684 = smul.addr %s683, 32
        %s685 = scalar_lea.vmem [#allocation8], %s684
        // Predicated region
        $region101: #{tpu_custom_call.1} parent=87 // pred_check
          %p686 = pneg %p142
        $region102: #{tpu_custom_call.1} parent=87 // pred_check_branch
          %688 = sbr.rel (%p686) target = $region104
        $region103: #{tpu_custom_call.1} parent=87 // pred_region
          %689 = dma.done %s682, 512
        $region104: #{tpu_custom_call.1} parent=87 // pred_fallthru
          _
        // Predicated region
        $region105: #{tpu_custom_call.1} parent=87 // pred_check
          %p690 = pneg %p163
        $region106: #{tpu_custom_call.1} parent=87 // pred_check_branch
          %692 = sbr.rel (%p690) target = $region108
        $region107: #{tpu_custom_call.1} parent=87 // pred_region
          %693 = dma.done [#allocation9], 256
        $region108: #{tpu_custom_call.1} parent=87 // pred_fallthru
          _
        // Predicated region
        $region109: #{tpu_custom_call.1} parent=87 // pred_check
          %p694 = pneg %p184
        $region110: #{tpu_custom_call.1} parent=87 // pred_check_branch
          %696 = sbr.rel (%p694) target = $region112
        $region111: #{tpu_custom_call.1} parent=87 // pred_region
          %697 = dma.done [#allocation12], 256
        $region112: #{tpu_custom_call.1} parent=87 // pred_fallthru
          _
        // Predicated region
        $region113: #{tpu_custom_call.1} parent=87 // pred_check
          %p698 = pneg %p205
        $region114: #{tpu_custom_call.1} parent=87 // pred_check_branch
          %700 = sbr.rel (%p698) target = $region116
        $region115: #{tpu_custom_call.1} parent=87 // pred_region
          %701 = dma.done [#allocation12], 256
        $region116: #{tpu_custom_call.1} parent=87 // pred_fallthru
          _
        // Predicated region
        $region117: #{tpu_custom_call.1} parent=87 // pred_check
          %p702 = pneg %p226
        $region118: #{tpu_custom_call.1} parent=87 // pred_check_branch
          %704 = sbr.rel (%p702) target = $region120
        $region119: #{tpu_custom_call.1} parent=87 // pred_region
          %705 = dma.done [#allocation15], 1024
        $region120: #{tpu_custom_call.1} parent=87 // pred_fallthru
          _
        // Predicated region
        $region121: #{tpu_custom_call.1} parent=87 // pred_check
          %p706 = pneg %p310
        $region122: #{tpu_custom_call.1} parent=87 // pred_check_branch
          %708 = sbr.rel (%p706) target = $region124
        $region123: #{tpu_custom_call.1} parent=87 // pred_region
          %709 = dma.done [#allocation15], 4096
        $region124: #{tpu_custom_call.1} parent=87 // pred_fallthru
          _
        // Predicated region
        $region125: #{tpu_custom_call.1} parent=87 // pred_check
          %p710 = pneg %p352
        $region126: #{tpu_custom_call.1} parent=87 // pred_check_branch
          %712 = sbr.rel (%p710) target = $region128
        $region127: #{tpu_custom_call.1} parent=87 // pred_region
          %713 = dma.done [#allocation18], 4096
        $region128: #{tpu_custom_call.1} parent=87 // pred_fallthru
          _
        %s714 = sand.u32 %s51, 1
        %s715 = scalar_lea.sflag [#allocation3], %s714
        %s716 = sand.u32 %s51, 1
        %s717 = smul.addr %s716, 64
        %s718 = scalar_lea.vmem [#allocation2], %s717
        %p719 = pneg %p64
        %p720 = pneg %p61
        %s721 = sand.u32 %s43, 1
        %s722 = scalar_lea.sflag [#allocation6], %s721
        %s723 = sand.u32 %s77, 1
        %s724 = smul.addr %s723, 64
        %s725 = scalar_lea.vmem [#allocation5], %s724
        %p726 = pneg %p90
        %p727 = pneg %p87
        %s728 = sand.u32 %s43, 1
        %s729 = scalar_lea.sflag [#allocation6], %s728
        %s730 = sand.u32 %s103, 1
        %s731 = smul.addr %s730, 64
        %s732 = scalar_lea.vmem [#allocation7], %s731
        %p733 = pneg %p116
        %p734 = pneg %p113
        %s735 = sand.u32 %s43, 1
        %s736 = scalar_lea.sflag [#allocation9], %s735
        %s737 = sand.u32 %s129, 1
        %s738 = smul.addr %s737, 32
        %s739 = scalar_lea.vmem [#allocation8], %s738
        %p740 = pneg %p142
        %p741 = pneg %p139
        %p742 = pneg %p163
        %p743 = pneg %p160
        %p744 = pneg %p184
        %p745 = pneg %p181
        %p746 = pneg %p205
        %p747 = pneg %p202
        %p748 = pneg %p226
        %p749 = pneg %p223
        %p750 = pneg %p247
        %p751 = pneg %p244
        %p752 = pneg %p268
        %p753 = pneg %p265
        %p754 = pneg %p289
        %p755 = pneg %p286
        %p756 = pneg %p310
        %p757 = pneg %p307
        %p758 = pneg %p331
        %p759 = pneg %p328
        %p760 = pneg %p352
        %p761 = pneg %p349
        %p762 = pneg %p373
        %p763 = pneg %p370
        %p764 = pneg %p394
        %p765 = pneg %p391
        %p766 = pneg %p415
        %p767 = pneg %p412
        %p768 = pneg %p441
        %p769 = pneg %p438
        %s770 = sand.u32 %s428, 1
        %s771 = scalar_lea.sflag [#allocation4], %s770
        %s772 = sand.u32 %s428, 1
        %s773 = smul.addr %s772, 32
        %s774 = scalar_lea.vmem [#allocation19], %s773
        %s775 = smul.u32 2, %s43
        %s776 = smul.u32 2, %s43
        %s777 = smul.u32 2, %s43
        %s778 = smul.u32 2, %s43
        %s779 = smul.u32 2, %s43
        %v781 = vld [vmem:[%s658] sm:$0xf]
        %v782 = vld [vmem:[%s658 + $0x4] sm:$0xf]
        %v783 = vld [vmem:[%s658 + $0x8] sm:$0xf]
        %v784 = vld [vmem:[%s658 + $0xc] sm:$0xf]
        %v785 = vld [vmem:[%s658 + $0x10] sm:$0xf]
        %v786 = vld [vmem:[%s658 + $0x14] sm:$0xf]
        %v787 = vld [vmem:[%s658 + $0x18] sm:$0xf]
        %v788 = vld [vmem:[%s658 + $0x1c] sm:$0xf]
        %v789 = vld [vmem:[%s658 + $0x20] sm:$0xf]
        %v790 = vld [vmem:[%s658 + $0x24] sm:$0xf]
        %v791 = vld [vmem:[%s658 + $0x28] sm:$0xf]
        %v792 = vld [vmem:[%s658 + $0x2c] sm:$0xf]
        %v793 = vld [vmem:[%s658 + $0x30] sm:$0xf]
        %v794 = vld [vmem:[%s658 + $0x34] sm:$0xf]
        %v795 = vld [vmem:[%s658 + $0x38] sm:$0xf]
        %v796 = vld [vmem:[%s658 + $0x3c] sm:$0xf]
        %v797 = vld [vmem:[%s667] sm:$0xf]
        %v798 = vld [vmem:[%s667 + $0x4] sm:$0xf]
        %v799 = vld [vmem:[%s667 + $0x8] sm:$0xf]
        %v800 = vld [vmem:[%s667 + $0xc] sm:$0xf]
        %v801 = vld [vmem:[%s667 + $0x10] sm:$0xf]
        %v802 = vld [vmem:[%s667 + $0x14] sm:$0xf]
        %v803 = vld [vmem:[%s667 + $0x18] sm:$0xf]
        %v804 = vld [vmem:[%s667 + $0x1c] sm:$0xf]
        %v805 = vld [vmem:[%s667 + $0x20] sm:$0xf]
        %v806 = vld [vmem:[%s667 + $0x24] sm:$0xf]
        %v807 = vld [vmem:[%s667 + $0x28] sm:$0xf]
        %v808 = vld [vmem:[%s667 + $0x2c] sm:$0xf]
        %v809 = vld [vmem:[%s667 + $0x30] sm:$0xf]
        %v810 = vld [vmem:[%s667 + $0x34] sm:$0xf]
        %v811 = vld [vmem:[%s667 + $0x38] sm:$0xf]
        %v812 = vld [vmem:[%s667 + $0x3c] sm:$0xf]
        %v813 = vld [vmem:[%s676] sm:$0xf]
        %v814 = vld [vmem:[%s676 + $0x4] sm:$0xf]
        %v815 = vld [vmem:[%s676 + $0x8] sm:$0xf]
        %v816 = vld [vmem:[%s676 + $0xc] sm:$0xf]
        %v817 = vld [vmem:[%s676 + $0x10] sm:$0xf]
        %v818 = vld [vmem:[%s676 + $0x14] sm:$0xf]
        %v819 = vld [vmem:[%s676 + $0x18] sm:$0xf]
        %v820 = vld [vmem:[%s676 + $0x1c] sm:$0xf]
        %v821 = vld [vmem:[%s676 + $0x20] sm:$0xf]
        %v822 = vld [vmem:[%s676 + $0x24] sm:$0xf]
        %v823 = vld [vmem:[%s676 + $0x28] sm:$0xf]
        %v824 = vld [vmem:[%s676 + $0x2c] sm:$0xf]
        %v825 = vld [vmem:[%s676 + $0x30] sm:$0xf]
        %v826 = vld [vmem:[%s676 + $0x34] sm:$0xf]
        %v827 = vld [vmem:[%s676 + $0x38] sm:$0xf]
        %v828 = vld [vmem:[%s676 + $0x3c] sm:$0xf]
        %v829 = vld [vmem:[#allocation10] sm:$0xf]
        %v830 = vld [vmem:[#allocation10 + $0x4] sm:$0xf]
        %v831 = vld [vmem:[#allocation10 + $0x8] sm:$0xf]
        %v832 = vld [vmem:[#allocation10 + $0xc] sm:$0xf]
        %v849 = vunpack.c.l.b16 %v781
        %v850 = vunpack.c.l.b16 %v782
        %v851 = vunpack.c.l.b16 %v783
        %v852 = vunpack.c.l.b16 %v784
        %v853 = vunpack.c.l.b16 %v785
        %v854 = vunpack.c.l.b16 %v786
        %v855 = vunpack.c.l.b16 %v787
        %v856 = vunpack.c.l.b16 %v788
        %v857 = vunpack.c.l.b16 %v789
        %v858 = vunpack.c.l.b16 %v790
        %v859 = vunpack.c.l.b16 %v791
        %v860 = vunpack.c.l.b16 %v792
        %v861 = vunpack.c.l.b16 %v793
        %v862 = vunpack.c.l.b16 %v794
        %v863 = vunpack.c.l.b16 %v795
        %v864 = vunpack.c.l.b16 %v796
        %v865 = vpack.c.b16 %v850, %v849
        %v866 = vpack.c.b16 %v852, %v851
        %v867 = vpack.c.b16 %v854, %v853
        %v868 = vpack.c.b16 %v856, %v855
        %v869 = vpack.c.b16 %v858, %v857
        %v870 = vpack.c.b16 %v860, %v859
        %v871 = vpack.c.b16 %v862, %v861
        %v872 = vpack.c.b16 %v864, %v863
        %v877 = vunpack.c.l.b16 %v829
        %v878 = vunpack.c.l.b16 %v830
        %v879 = vunpack.c.l.b16 %v831
        %v880 = vunpack.c.l.b16 %v832
        %v881 = vpack.c.b16 %v878, %v877
        %v882 = vpack.c.b16 %v880, %v879
        %vm885 = vcmask 261120
        %v887 = vsel %vm885, %v865, 0
        %v890 = vsel %vm885, %v866, 0
        %v893 = vsel %vm885, %v867, 0
        %v896 = vsel %vm885, %v868, 0
        %v899 = vsel %vm885, %v869, 0
        %v902 = vsel %vm885, %v870, 0
        %v905 = vsel %vm885, %v871, 0
        %v908 = vsel %vm885, %v872, 0
        %910 = vmatprep.subr.bf16.mxu0 0
        %911 = vmatpush1.bf16.msra.mxu0 0
        %912 = vmatprep.subr.bf16.mxu0 0
        %913 = vmatpush1.bf16.msra.mxu0 0
        %914 = vmatprep.subr.bf16.mxu0 0
        %915 = vmatpush1.bf16.msra.mxu0 0
        %916 = vmatprep.subr.bf16.mxu0 0
        %917 = vmatpush1.bf16.msra.mxu0 0
        %918 = vmatprep.subr.bf16.mxu0 0
        %919 = vmatpush1.bf16.msra.mxu0 0
        %920 = vmatprep.subr.bf16.mxu0 0
        %921 = vmatpush1.bf16.msra.mxu0 0
        %922 = vmatprep.subr.bf16.mxu0 0
        %923 = vmatpush1.bf16.msra.mxu0 %v882
        %924 = vmatprep.subr.bf16.mxu0 0
        %925 = vmatpush1.bf16.msra.mxu0 %v881
        %926 = vmatprep.subr.bf16.mxu0 0
        %927 = vmatpush2.bf16.msra.mxu0 0
        %928 = vmatprep.subr.bf16.mxu0 0
        %929 = vmatpush2.bf16.msra.mxu0 0
        %930 = vmatprep.subr.bf16.mxu0 0
        %931 = vmatpush2.bf16.msra.mxu0 0
        %932 = vmatprep.subr.bf16.mxu0 0
        %933 = vmatpush2.bf16.msra.mxu0 0
        %934 = vmatprep.subr.bf16.mxu0 0
        %935 = vmatpush2.bf16.msra.mxu0 0
        %936 = vmatprep.subr.bf16.mxu0 0
        %937 = vmatpush2.bf16.msra.mxu0 0
        %938 = vmatprep.subr.bf16.mxu0 0
        %939 = vmatpush2.bf16.msra.mxu0 0
        %940 = vmatprep.subr.bf16.mxu0 0
        %941 = vmatpush2.bf16.msra.mxu0 0
        %942 = vmatprep.mubr.bf16.mxu0 0
        %943 = vmatmul.mubr.bf16.gmra.mxu0 %v887
        %v944 = vpop.f32.mrf.mxu0
        %v945 = vadd.f32 0.0, %v944
        %v946 = vpop.f32.mrf.mxu0
        %v947 = vpop.f32.mrf.mxu0
        %v948 = vadd.f32 0.0, %v947
        %v949 = vpop.f32.mrf.mxu0
        %950 = vmatprep.mubr.bf16.mxu0 0
        %951 = vmatmul.mubr.bf16.gmra.mxu0 %v890
        %v952 = vpop.f32.mrf.mxu0
        %v953 = vadd.f32 0.0, %v952
        %v954 = vpop.f32.mrf.mxu0
        %v955 = vpop.f32.mrf.mxu0
        %v956 = vadd.f32 0.0, %v955
        %v957 = vpop.f32.mrf.mxu0
        %958 = vmatprep.mubr.bf16.mxu0 0
        %959 = vmatmul.mubr.bf16.gmra.mxu0 %v893
        %v960 = vpop.f32.mrf.mxu0
        %v961 = vadd.f32 0.0, %v960
        %v962 = vpop.f32.mrf.mxu0
        %v963 = vpop.f32.mrf.mxu0
        %v964 = vadd.f32 0.0, %v963
        %v965 = vpop.f32.mrf.mxu0
        %966 = vmatprep.mubr.bf16.mxu0 0
        %967 = vmatmul.mubr.bf16.gmra.mxu0 %v896
        %v968 = vpop.f32.mrf.mxu0
        %v969 = vadd.f32 0.0, %v968
        %v970 = vpop.f32.mrf.mxu0
        %v971 = vpop.f32.mrf.mxu0
        %v972 = vadd.f32 0.0, %v971
        %v973 = vpop.f32.mrf.mxu0
        %974 = vmatprep.mubr.bf16.mxu0 0
        %975 = vmatmul.mubr.bf16.gmra.mxu0 %v899
        %v976 = vpop.f32.mrf.mxu0
        %v977 = vadd.f32 0.0, %v976
        %v978 = vpop.f32.mrf.mxu0
        %v979 = vpop.f32.mrf.mxu0
        %v980 = vadd.f32 0.0, %v979
        %v981 = vpop.f32.mrf.mxu0
        %982 = vmatprep.mubr.bf16.mxu0 0
        %983 = vmatmul.mubr.bf16.gmra.mxu0 %v902
        %v984 = vpop.f32.mrf.mxu0
        %v985 = vadd.f32 0.0, %v984
        %v986 = vpop.f32.mrf.mxu0
        %v987 = vpop.f32.mrf.mxu0
        %v988 = vadd.f32 0.0, %v987
        %v989 = vpop.f32.mrf.mxu0
        %990 = vmatprep.mubr.bf16.mxu0 0
        %991 = vmatmul.mubr.bf16.gmra.mxu0 %v905
        %v992 = vpop.f32.mrf.mxu0
        %v993 = vadd.f32 0.0, %v992
        %v994 = vpop.f32.mrf.mxu0
        %v995 = vpop.f32.mrf.mxu0
        %v996 = vadd.f32 0.0, %v995
        %v997 = vpop.f32.mrf.mxu0
        %998 = vmatprep.mubr.bf16.mxu0 0
        %999 = vmatmul.mubr.bf16.gmra.mxu0 %v908
        %v1000 = vpop.f32.mrf.mxu0
        %v1001 = vadd.f32 0.0, %v1000
        %v1002 = vpop.f32.mrf.mxu0
        %v1003 = vpop.f32.mrf.mxu0
        %v1004 = vadd.f32 0.0, %v1003
        %v1005 = vpop.f32.mrf.mxu0
        %1006 = vdwg.mxu0
        %v1007 = vmul.f32 %v945, 0.088388346
        %v1008 = vmul.f32 %v948, 0.088388346
        %v1009 = vmul.f32 %v953, 0.088388346
        %v1010 = vmul.f32 %v956, 0.088388346
        %v1011 = vmul.f32 %v961, 0.088388346
        %v1012 = vmul.f32 %v964, 0.088388346
        %v1013 = vmul.f32 %v969, 0.088388346
        %v1014 = vmul.f32 %v972, 0.088388346
        %v1015 = vmul.f32 %v977, 0.088388346
        %v1016 = vmul.f32 %v980, 0.088388346
        %v1017 = vmul.f32 %v985, 0.088388346
        %v1018 = vmul.f32 %v988, 0.088388346
        %v1019 = vmul.f32 %v993, 0.088388346
        %v1020 = vmul.f32 %v996, 0.088388346
        %v1021 = vmul.f32 %v1001, 0.088388346
        %v1022 = vmul.f32 %v1004, 0.088388346
        %v1023 = vpack.c.bf16 %v1008, %v1007
        %v1024 = vpack.c.bf16 %v1010, %v1009
        %v1025 = vpack.c.bf16 %v1012, %v1011
        %v1026 = vpack.c.bf16 %v1014, %v1013
        %v1027 = vpack.c.bf16 %v1016, %v1015
        %v1028 = vpack.c.bf16 %v1018, %v1017
        %v1029 = vpack.c.bf16 %v1020, %v1019
        %v1030 = vpack.c.bf16 %v1022, %v1021
        %v1031 = vld [vmem:[#allocation11] sm:$0xf]
        %v1032 = vld [vmem:[#allocation11 + $0x4] sm:$0xf]
        %v1033 = vld [vmem:[#allocation11 + $0x8] sm:$0xf]
        %v1034 = vld [vmem:[#allocation11 + $0xc] sm:$0xf]
        %v1051 = vunpack.c.l.b16 %v797
        %v1052 = vunpack.c.l.b16 %v798
        %v1053 = vunpack.c.l.b16 %v799
        %v1054 = vunpack.c.l.b16 %v800
        %v1055 = vunpack.c.l.b16 %v801
        %v1056 = vunpack.c.l.b16 %v802
        %v1057 = vunpack.c.l.b16 %v803
        %v1058 = vunpack.c.l.b16 %v804
        %v1059 = vunpack.c.l.b16 %v805
        %v1060 = vunpack.c.l.b16 %v806
        %v1061 = vunpack.c.l.b16 %v807
        %v1062 = vunpack.c.l.b16 %v808
        %v1063 = vunpack.c.l.b16 %v809
        %v1064 = vunpack.c.l.b16 %v810
        %v1065 = vunpack.c.l.b16 %v811
        %v1066 = vunpack.c.l.b16 %v812
        %v1067 = vpack.c.b16 %v1052, %v1051
        %v1068 = vpack.c.b16 %v1054, %v1053
        %v1069 = vpack.c.b16 %v1056, %v1055
        %v1070 = vpack.c.b16 %v1058, %v1057
        %v1071 = vpack.c.b16 %v1060, %v1059
        %v1072 = vpack.c.b16 %v1062, %v1061
        %v1073 = vpack.c.b16 %v1064, %v1063
        %v1074 = vpack.c.b16 %v1066, %v1065
        %v1079 = vunpack.c.l.b16 %v1031
        %v1080 = vunpack.c.l.b16 %v1032
        %v1081 = vunpack.c.l.b16 %v1033
        %v1082 = vunpack.c.l.b16 %v1034
        %v1083 = vpack.c.b16 %v1080, %v1079
        %v1084 = vpack.c.b16 %v1082, %v1081
        %v1088 = vsel %vm885, %v1067, 0
        %v1091 = vsel %vm885, %v1068, 0
        %v1094 = vsel %vm885, %v1069, 0
        %v1097 = vsel %vm885, %v1070, 0
        %v1100 = vsel %vm885, %v1071, 0
        %v1103 = vsel %vm885, %v1072, 0
        %v1106 = vsel %vm885, %v1073, 0
        %v1109 = vsel %vm885, %v1074, 0
        %1111 = vmatprep.subr.bf16.mxu0 0
        %1112 = vmatpush1.bf16.msra.mxu0 0
        %1113 = vmatprep.subr.bf16.mxu0 0
        %1114 = vmatpush1.bf16.msra.mxu0 0
        %1115 = vmatprep.subr.bf16.mxu0 0
        %1116 = vmatpush1.bf16.msra.mxu0 0
        %1117 = vmatprep.subr.bf16.mxu0 0
        %1118 = vmatpush1.bf16.msra.mxu0 0
        %1119 = vmatprep.subr.bf16.mxu0 0
        %1120 = vmatpush1.bf16.msra.mxu0 0
        %1121 = vmatprep.subr.bf16.mxu0 0
        %1122 = vmatpush1.bf16.msra.mxu0 0
        %1123 = vmatprep.subr.bf16.mxu0 0
        %1124 = vmatpush1.bf16.msra.mxu0 %v1084
        %1125 = vmatprep.subr.bf16.mxu0 0
        %1126 = vmatpush1.bf16.msra.mxu0 %v1083
        %1127 = vmatprep.subr.bf16.mxu0 0
        %1128 = vmatpush2.bf16.msra.mxu0 0
        %1129 = vmatprep.subr.bf16.mxu0 0
        %1130 = vmatpush2.bf16.msra.mxu0 0
        %1131 = vmatprep.subr.bf16.mxu0 0
        %1132 = vmatpush2.bf16.msra.mxu0 0
        %1133 = vmatprep.subr.bf16.mxu0 0
        %1134 = vmatpush2.bf16.msra.mxu0 0
        %1135 = vmatprep.subr.bf16.mxu0 0
        %1136 = vmatpush2.bf16.msra.mxu0 0
        %1137 = vmatprep.subr.bf16.mxu0 0
        %1138 = vmatpush2.bf16.msra.mxu0 0
        %1139 = vmatprep.subr.bf16.mxu0 0
        %1140 = vmatpush2.bf16.msra.mxu0 0
        %1141 = vmatprep.subr.bf16.mxu0 0
        %1142 = vmatpush2.bf16.msra.mxu0 0
        %1143 = vmatprep.mubr.bf16.mxu0 0
        %1144 = vmatmul.mubr.bf16.gmra.mxu0 %v1088
        %v1145 = vpop.f32.mrf.mxu0
        %v1146 = vadd.f32 0.0, %v1145
        %v1147 = vpop.f32.mrf.mxu0
        %v1148 = vpop.f32.mrf.mxu0
        %v1149 = vadd.f32 0.0, %v1148
        %v1150 = vpop.f32.mrf.mxu0
        %1151 = vmatprep.mubr.bf16.mxu0 0
        %1152 = vmatmul.mubr.bf16.gmra.mxu0 %v1091
        %v1153 = vpop.f32.mrf.mxu0
        %v1154 = vadd.f32 0.0, %v1153
        %v1155 = vpop.f32.mrf.mxu0
        %v1156 = vpop.f32.mrf.mxu0
        %v1157 = vadd.f32 0.0, %v1156
        %v1158 = vpop.f32.mrf.mxu0
        %1159 = vmatprep.mubr.bf16.mxu0 0
        %1160 = vmatmul.mubr.bf16.gmra.mxu0 %v1094
        %v1161 = vpop.f32.mrf.mxu0
        %v1162 = vadd.f32 0.0, %v1161
        %v1163 = vpop.f32.mrf.mxu0
        %v1164 = vpop.f32.mrf.mxu0
        %v1165 = vadd.f32 0.0, %v1164
        %v1166 = vpop.f32.mrf.mxu0
        %1167 = vmatprep.mubr.bf16.mxu0 0
        %1168 = vmatmul.mubr.bf16.gmra.mxu0 %v1097
        %v1169 = vpop.f32.mrf.mxu0
        %v1170 = vadd.f32 0.0, %v1169
        %v1171 = vpop.f32.mrf.mxu0
        %v1172 = vpop.f32.mrf.mxu0
        %v1173 = vadd.f32 0.0, %v1172
        %v1174 = vpop.f32.mrf.mxu0
        %1175 = vmatprep.mubr.bf16.mxu0 0
        %1176 = vmatmul.mubr.bf16.gmra.mxu0 %v1100
        %v1177 = vpop.f32.mrf.mxu0
        %v1178 = vadd.f32 0.0, %v1177
        %v1179 = vpop.f32.mrf.mxu0
        %v1180 = vpop.f32.mrf.mxu0
        %v1181 = vadd.f32 0.0, %v1180
        %v1182 = vpop.f32.mrf.mxu0
        %1183 = vmatprep.mubr.bf16.mxu0 0
        %1184 = vmatmul.mubr.bf16.gmra.mxu0 %v1103
        %v1185 = vpop.f32.mrf.mxu0
        %v1186 = vadd.f32 0.0, %v1185
        %v1187 = vpop.f32.mrf.mxu0
        %v1188 = vpop.f32.mrf.mxu0
        %v1189 = vadd.f32 0.0, %v1188
        %v1190 = vpop.f32.mrf.mxu0
        %1191 = vmatprep.mubr.bf16.mxu0 0
        %1192 = vmatmul.mubr.bf16.gmra.mxu0 %v1106
        %v1193 = vpop.f32.mrf.mxu0
        %v1194 = vadd.f32 0.0, %v1193
        %v1195 = vpop.f32.mrf.mxu0
        %v1196 = vpop.f32.mrf.mxu0
        %v1197 = vadd.f32 0.0, %v1196
        %v1198 = vpop.f32.mrf.mxu0
        %1199 = vmatprep.mubr.bf16.mxu0 0
        %1200 = vmatmul.mubr.bf16.gmra.mxu0 %v1109
        %v1201 = vpop.f32.mrf.mxu0
        %v1202 = vadd.f32 0.0, %v1201
        %v1203 = vpop.f32.mrf.mxu0
        %v1204 = vpop.f32.mrf.mxu0
        %v1205 = vadd.f32 0.0, %v1204
        %v1206 = vpop.f32.mrf.mxu0
        %1207 = vdwg.mxu0
        %v1208 = vpack.c.bf16 %v1149, %v1146
        %v1209 = vpack.c.bf16 %v1157, %v1154
        %v1210 = vpack.c.bf16 %v1165, %v1162
        %v1211 = vpack.c.bf16 %v1173, %v1170
        %v1212 = vpack.c.bf16 %v1181, %v1178
        %v1213 = vpack.c.bf16 %v1189, %v1186
        %v1214 = vpack.c.bf16 %v1197, %v1194
        %v1215 = vpack.c.bf16 %v1205, %v1202
        %v1216 = vld [vmem:[#allocation13] sm:$0xf]
        %v1217 = vld [vmem:[#allocation13 + $0x4] sm:$0xf]
        %v1218 = vld [vmem:[#allocation13 + $0x8] sm:$0xf]
        %v1219 = vld [vmem:[#allocation13 + $0xc] sm:$0xf]
        %v1236 = vunpack.c.l.b16 %v813
        %v1237 = vunpack.c.l.b16 %v814
        %v1238 = vunpack.c.l.b16 %v815
        %v1239 = vunpack.c.l.b16 %v816
        %v1240 = vunpack.c.l.b16 %v817
        %v1241 = vunpack.c.l.b16 %v818
        %v1242 = vunpack.c.l.b16 %v819
        %v1243 = vunpack.c.l.b16 %v820
        %v1244 = vunpack.c.l.b16 %v821
        %v1245 = vunpack.c.l.b16 %v822
        %v1246 = vunpack.c.l.b16 %v823
        %v1247 = vunpack.c.l.b16 %v824
        %v1248 = vunpack.c.l.b16 %v825
        %v1249 = vunpack.c.l.b16 %v826
        %v1250 = vunpack.c.l.b16 %v827
        %v1251 = vunpack.c.l.b16 %v828
        %v1252 = vpack.c.b16 %v1237, %v1236
        %v1253 = vpack.c.b16 %v1239, %v1238
        %v1254 = vpack.c.b16 %v1241, %v1240
        %v1255 = vpack.c.b16 %v1243, %v1242
        %v1256 = vpack.c.b16 %v1245, %v1244
        %v1257 = vpack.c.b16 %v1247, %v1246
        %v1258 = vpack.c.b16 %v1249, %v1248
        %v1259 = vpack.c.b16 %v1251, %v1250
        %v1264 = vunpack.c.l.b16 %v1216
        %v1265 = vunpack.c.l.b16 %v1217
        %v1266 = vunpack.c.l.b16 %v1218
        %v1267 = vunpack.c.l.b16 %v1219
        %v1268 = vpack.c.b16 %v1265, %v1264
        %v1269 = vpack.c.b16 %v1267, %v1266
        %v1273 = vsel %vm885, %v1252, 0
        %v1276 = vsel %vm885, %v1253, 0
        %v1279 = vsel %vm885, %v1254, 0
        %v1282 = vsel %vm885, %v1255, 0
        %v1285 = vsel %vm885, %v1256, 0
        %v1288 = vsel %vm885, %v1257, 0
        %v1291 = vsel %vm885, %v1258, 0
        %v1294 = vsel %vm885, %v1259, 0
        %1296 = vmatprep.subr.bf16.mxu0 0
        %1297 = vmatpush1.bf16.msra.mxu0 0
        %1298 = vmatprep.subr.bf16.mxu0 0
        %1299 = vmatpush1.bf16.msra.mxu0 0
        %1300 = vmatprep.subr.bf16.mxu0 0
        %1301 = vmatpush1.bf16.msra.mxu0 0
        %1302 = vmatprep.subr.bf16.mxu0 0
        %1303 = vmatpush1.bf16.msra.mxu0 0
        %1304 = vmatprep.subr.bf16.mxu0 0
        %1305 = vmatpush1.bf16.msra.mxu0 0
        %1306 = vmatprep.subr.bf16.mxu0 0
        %1307 = vmatpush1.bf16.msra.mxu0 0
        %1308 = vmatprep.subr.bf16.mxu0 0
        %1309 = vmatpush1.bf16.msra.mxu0 %v1269
        %1310 = vmatprep.subr.bf16.mxu0 0
        %1311 = vmatpush1.bf16.msra.mxu0 %v1268
        %1312 = vmatprep.subr.bf16.mxu0 0
        %1313 = vmatpush2.bf16.msra.mxu0 0
        %1314 = vmatprep.subr.bf16.mxu0 0
        %1315 = vmatpush2.bf16.msra.mxu0 0
        %1316 = vmatprep.subr.bf16.mxu0 0
        %1317 = vmatpush2.bf16.msra.mxu0 0
        %1318 = vmatprep.subr.bf16.mxu0 0
        %1319 = vmatpush2.bf16.msra.mxu0 0
        %1320 = vmatprep.subr.bf16.mxu0 0
        %1321 = vmatpush2.bf16.msra.mxu0 0
        %1322 = vmatprep.subr.bf16.mxu0 0
        %1323 = vmatpush2.bf16.msra.mxu0 0
        %1324 = vmatprep.subr.bf16.mxu0 0
        %1325 = vmatpush2.bf16.msra.mxu0 0
        %1326 = vmatprep.subr.bf16.mxu0 0
        %1327 = vmatpush2.bf16.msra.mxu0 0
        %1328 = vmatprep.mubr.bf16.mxu0 0
        %1329 = vmatmul.mubr.bf16.gmra.mxu0 %v1273
        %v1330 = vpop.f32.mrf.mxu0
        %v1331 = vadd.f32 0.0, %v1330
        %v1332 = vpop.f32.mrf.mxu0
        %v1333 = vpop.f32.mrf.mxu0
        %v1334 = vadd.f32 0.0, %v1333
        %v1335 = vpop.f32.mrf.mxu0
        %1336 = vmatprep.mubr.bf16.mxu0 0
        %1337 = vmatmul.mubr.bf16.gmra.mxu0 %v1276
        %v1338 = vpop.f32.mrf.mxu0
        %v1339 = vadd.f32 0.0, %v1338
        %v1340 = vpop.f32.mrf.mxu0
        %v1341 = vpop.f32.mrf.mxu0
        %v1342 = vadd.f32 0.0, %v1341
        %v1343 = vpop.f32.mrf.mxu0
        %1344 = vmatprep.mubr.bf16.mxu0 0
        %1345 = vmatmul.mubr.bf16.gmra.mxu0 %v1279
        %v1346 = vpop.f32.mrf.mxu0
        %v1347 = vadd.f32 0.0, %v1346
        %v1348 = vpop.f32.mrf.mxu0
        %v1349 = vpop.f32.mrf.mxu0
        %v1350 = vadd.f32 0.0, %v1349
        %v1351 = vpop.f32.mrf.mxu0
        %1352 = vmatprep.mubr.bf16.mxu0 0
        %1353 = vmatmul.mubr.bf16.gmra.mxu0 %v1282
        %v1354 = vpop.f32.mrf.mxu0
        %v1355 = vadd.f32 0.0, %v1354
        %v1356 = vpop.f32.mrf.mxu0
        %v1357 = vpop.f32.mrf.mxu0
        %v1358 = vadd.f32 0.0, %v1357
        %v1359 = vpop.f32.mrf.mxu0
        %1360 = vmatprep.mubr.bf16.mxu0 0
        %1361 = vmatmul.mubr.bf16.gmra.mxu0 %v1285
        %v1362 = vpop.f32.mrf.mxu0
        %v1363 = vadd.f32 0.0, %v1362
        %v1364 = vpop.f32.mrf.mxu0
        %v1365 = vpop.f32.mrf.mxu0
        %v1366 = vadd.f32 0.0, %v1365
        %v1367 = vpop.f32.mrf.mxu0
        %1368 = vmatprep.mubr.bf16.mxu0 0
        %1369 = vmatmul.mubr.bf16.gmra.mxu0 %v1288
        %v1370 = vpop.f32.mrf.mxu0
        %v1371 = vadd.f32 0.0, %v1370
        %v1372 = vpop.f32.mrf.mxu0
        %v1373 = vpop.f32.mrf.mxu0
        %v1374 = vadd.f32 0.0, %v1373
        %v1375 = vpop.f32.mrf.mxu0
        %1376 = vmatprep.mubr.bf16.mxu0 0
        %1377 = vmatmul.mubr.bf16.gmra.mxu0 %v1291
        %v1378 = vpop.f32.mrf.mxu0
        %v1379 = vadd.f32 0.0, %v1378
        %v1380 = vpop.f32.mrf.mxu0
        %v1381 = vpop.f32.mrf.mxu0
        %v1382 = vadd.f32 0.0, %v1381
        %v1383 = vpop.f32.mrf.mxu0
        %1384 = vmatprep.mubr.bf16.mxu0 0
        %1385 = vmatmul.mubr.bf16.gmra.mxu0 %v1294
        %v1386 = vpop.f32.mrf.mxu0
        %v1387 = vadd.f32 0.0, %v1386
        %v1388 = vpop.f32.mrf.mxu0
        %v1389 = vpop.f32.mrf.mxu0
        %v1390 = vadd.f32 0.0, %v1389
        %v1391 = vpop.f32.mrf.mxu0
        %1392 = vdwg.mxu0
        %v1393 = vpack.c.bf16 %v1334, %v1331
        %v1394 = vpack.c.bf16 %v1342, %v1339
        %v1395 = vpack.c.bf16 %v1350, %v1347
        %v1396 = vpack.c.bf16 %v1358, %v1355
        %v1397 = vpack.c.bf16 %v1366, %v1363
        %v1398 = vpack.c.bf16 %v1374, %v1371
        %v1399 = vpack.c.bf16 %v1382, %v1379
        %v1400 = vpack.c.bf16 %v1390, %v1387
        %v1402 = vsel %vm885, %v1023, 0
        %v1405 = vsel %vm885, %v1208, 0
        %1407 = vmatprep.subr.bf16.mxu0 0
        %1408 = vmatpush1.bf16.xpose.msra.mxu0 0
        %1409 = vmatprep.subr.bf16.mxu0 0
        %1410 = vmatpush1.bf16.xpose.msra.mxu0 0
        %1411 = vmatprep.subr.bf16.mxu0 0
        %1412 = vmatpush1.bf16.xpose.msra.mxu0 0
        %1413 = vmatprep.subr.bf16.mxu0 0
        %1414 = vmatpush1.bf16.xpose.msra.mxu0 0
        %1415 = vmatprep.subr.bf16.mxu0 0
        %1416 = vmatpush1.bf16.xpose.msra.mxu0 0
        %1417 = vmatprep.subr.bf16.mxu0 0
        %1418 = vmatpush1.bf16.xpose.msra.mxu0 0
        %1419 = vmatprep.subr.bf16.mxu0 0
        %1420 = vmatpush1.bf16.xpose.msra.mxu0 0
        %1421 = vmatprep.subr.bf16.mxu0 0
        %1422 = vmatpush1.bf16.xpose.msra.mxu0 %v1405
        %1423 = vmatprep.subr.bf16.mxu0 0
        %1424 = vmatpush2.bf16.xpose.msra.mxu0 0
        %1425 = vmatprep.subr.bf16.mxu0 0
        %1426 = vmatpush2.bf16.xpose.msra.mxu0 0
        %1427 = vmatprep.subr.bf16.mxu0 0
        %1428 = vmatpush2.bf16.xpose.msra.mxu0 0
        %1429 = vmatprep.subr.bf16.mxu0 0
        %1430 = vmatpush2.bf16.xpose.msra.mxu0 0
        %1431 = vmatprep.subr.bf16.mxu0 0
        %1432 = vmatpush2.bf16.xpose.msra.mxu0 0
        %1433 = vmatprep.subr.bf16.mxu0 0
        %1434 = vmatpush2.bf16.xpose.msra.mxu0 0
        %1435 = vmatprep.subr.bf16.mxu0 0
        %1436 = vmatpush2.bf16.xpose.msra.mxu0 0
        %1437 = vmatprep.subr.bf16.mxu0 0
        %1438 = vmatpush2.bf16.xpose.msra.mxu0 0
        %1439 = vmatprep.mubr.bf16.mxu0 0
        %1440 = vmatmul.mubr.bf16.gmra.mxu0 %v1402
        %v1441 = vpop.f32.mrf.mxu0
        %v1442 = vadd.f32 0.0, %v1441
        %v1443 = vpop.f32.mrf.mxu0
        %v1444 = vpop.f32.mrf.mxu0
        %v1445 = vadd.f32 0.0, %v1444
        %v1446 = vpop.f32.mrf.mxu0
        %1447 = vdwg.mxu0
        %v1449 = vsel %vm885, %v1024, 0
        %v1452 = vsel %vm885, %v1209, 0
        %1454 = vmatprep.subr.bf16.mxu0 0
        %1455 = vmatpush1.bf16.xpose.msra.mxu0 0
        %1456 = vmatprep.subr.bf16.mxu0 0
        %1457 = vmatpush1.bf16.xpose.msra.mxu0 0
        %1458 = vmatprep.subr.bf16.mxu0 0
        %1459 = vmatpush1.bf16.xpose.msra.mxu0 0
        %1460 = vmatprep.subr.bf16.mxu0 0
        %1461 = vmatpush1.bf16.xpose.msra.mxu0 0
        %1462 = vmatprep.subr.bf16.mxu0 0
        %1463 = vmatpush1.bf16.xpose.msra.mxu0 0
        %1464 = vmatprep.subr.bf16.mxu0 0
        %1465 = vmatpush1.bf16.xpose.msra.mxu0 0
        %1466 = vmatprep.subr.bf16.mxu0 0
        %1467 = vmatpush1.bf16.xpose.msra.mxu0 0
        %1468 = vmatprep.subr.bf16.mxu0 0
        %1469 = vmatpush1.bf16.xpose.msra.mxu0 %v1452
        %1470 = vmatprep.subr.bf16.mxu0 0
        %1471 = vmatpush2.bf16.xpose.msra.mxu0 0
        %1472 = vmatprep.subr.bf16.mxu0 0
        %1473 = vmatpush2.bf16.xpose.msra.mxu0 0
        %1474 = vmatprep.subr.bf16.mxu0 0
        %1475 = vmatpush2.bf16.xpose.msra.mxu0 0
        %1476 = vmatprep.subr.bf16.mxu0 0
        %1477 = vmatpush2.bf16.xpose.msra.mxu0 0
        %1478 = vmatprep.subr.bf16.mxu0 0
        %1479 = vmatpush2.bf16.xpose.msra.mxu0 0
        %1480 = vmatprep.subr.bf16.mxu0 0
        %1481 = vmatpush2.bf16.xpose.msra.mxu0 0
        %1482 = vmatprep.subr.bf16.mxu0 0
        %1483 = vmatpush2.bf16.xpose.msra.mxu0 0
        %1484 = vmatprep.subr.bf16.mxu0 0
        %1485 = vmatpush2.bf16.xpose.msra.mxu0 0
        %1486 = vmatprep.mubr.bf16.mxu0 0
        %1487 = vmatmul.mubr.bf16.gmra.mxu0 %v1449
        %v1488 = vpop.f32.mrf.mxu0
        %v1489 = vadd.f32 0.0, %v1488
        %v1490 = vpop.f32.mrf.mxu0
        %v1491 = vpop.f32.mrf.mxu0
        %v1492 = vadd.f32 0.0, %v1491
        %v1493 = vpop.f32.mrf.mxu0
        %1494 = vdwg.mxu0
        %v1496 = vsel %vm885, %v1025, 0
        %v1499 = vsel %vm885, %v1210, 0
        %1501 = vmatprep.subr.bf16.mxu0 0
        %1502 = vmatpush1.bf16.xpose.msra.mxu0 0
        %1503 = vmatprep.subr.bf16.mxu0 0
        %1504 = vmatpush1.bf16.xpose.msra.mxu0 0
        %1505 = vmatprep.subr.bf16.mxu0 0
        %1506 = vmatpush1.bf16.xpose.msra.mxu0 0
        %1507 = vmatprep.subr.bf16.mxu0 0
        %1508 = vmatpush1.bf16.xpose.msra.mxu0 0
        %1509 = vmatprep.subr.bf16.mxu0 0
        %1510 = vmatpush1.bf16.xpose.msra.mxu0 0
        %1511 = vmatprep.subr.bf16.mxu0 0
        %1512 = vmatpush1.bf16.xpose.msra.mxu0 0
        %1513 = vmatprep.subr.bf16.mxu0 0
        %1514 = vmatpush1.bf16.xpose.msra.mxu0 0
        %1515 = vmatprep.subr.bf16.mxu0 0
        %1516 = vmatpush1.bf16.xpose.msra.mxu0 %v1499
        %1517 = vmatprep.subr.bf16.mxu0 0
        %1518 = vmatpush2.bf16.xpose.msra.mxu0 0
        %1519 = vmatprep.subr.bf16.mxu0 0
        %1520 = vmatpush2.bf16.xpose.msra.mxu0 0
        %1521 = vmatprep.subr.bf16.mxu0 0
        %1522 = vmatpush2.bf16.xpose.msra.mxu0 0
        %1523 = vmatprep.subr.bf16.mxu0 0
        %1524 = vmatpush2.bf16.xpose.msra.mxu0 0
        %1525 = vmatprep.subr.bf16.mxu0 0
        %1526 = vmatpush2.bf16.xpose.msra.mxu0 0
        %1527 = vmatprep.subr.bf16.mxu0 0
        %1528 = vmatpush2.bf16.xpose.msra.mxu0 0
        %1529 = vmatprep.subr.bf16.mxu0 0
        %1530 = vmatpush2.bf16.xpose.msra.mxu0 0
        %1531 = vmatprep.subr.bf16.mxu0 0
        %1532 = vmatpush2.bf16.xpose.msra.mxu0 0
        %1533 = vmatprep.mubr.bf16.mxu0 0
        %1534 = vmatmul.mubr.bf16.gmra.mxu0 %v1496
        %v1535 = vpop.f32.mrf.mxu0
        %v1536 = vadd.f32 0.0, %v1535
        %v1537 = vpop.f32.mrf.mxu0
        %v1538 = vpop.f32.mrf.mxu0
        %v1539 = vadd.f32 0.0, %v1538
        %v1540 = vpop.f32.mrf.mxu0
        %1541 = vdwg.mxu0
        %v1543 = vsel %vm885, %v1026, 0
        %v1546 = vsel %vm885, %v1211, 0
        %1548 = vmatprep.subr.bf16.mxu0 0
        %1549 = vmatpush1.bf16.xpose.msra.mxu0 0
        %1550 = vmatprep.subr.bf16.mxu0 0
        %1551 = vmatpush1.bf16.xpose.msra.mxu0 0
        %1552 = vmatprep.subr.bf16.mxu0 0
        %1553 = vmatpush1.bf16.xpose.msra.mxu0 0
        %1554 = vmatprep.subr.bf16.mxu0 0
        %1555 = vmatpush1.bf16.xpose.msra.mxu0 0
        %1556 = vmatprep.subr.bf16.mxu0 0
        %1557 = vmatpush1.bf16.xpose.msra.mxu0 0
        %1558 = vmatprep.subr.bf16.mxu0 0
        %1559 = vmatpush1.bf16.xpose.msra.mxu0 0
        %1560 = vmatprep.subr.bf16.mxu0 0
        %1561 = vmatpush1.bf16.xpose.msra.mxu0 0
        %1562 = vmatprep.subr.bf16.mxu0 0
        %1563 = vmatpush1.bf16.xpose.msra.mxu0 %v1546
        %1564 = vmatprep.subr.bf16.mxu0 0
        %1565 = vmatpush2.bf16.xpose.msra.mxu0 0
        %1566 = vmatprep.subr.bf16.mxu0 0
        %1567 = vmatpush2.bf16.xpose.msra.mxu0 0
        %1568 = vmatprep.subr.bf16.mxu0 0
        %1569 = vmatpush2.bf16.xpose.msra.mxu0 0
        %1570 = vmatprep.subr.bf16.mxu0 0
        %1571 = vmatpush2.bf16.xpose.msra.mxu0 0
        %1572 = vmatprep.subr.bf16.mxu0 0
        %1573 = vmatpush2.bf16.xpose.msra.mxu0 0
        %1574 = vmatprep.subr.bf16.mxu0 0
        %1575 = vmatpush2.bf16.xpose.msra.mxu0 0
        %1576 = vmatprep.subr.bf16.mxu0 0
        %1577 = vmatpush2.bf16.xpose.msra.mxu0 0
        %1578 = vmatprep.subr.bf16.mxu0 0
        %1579 = vmatpush2.bf16.xpose.msra.mxu0 0
        %1580 = vmatprep.mubr.bf16.mxu0 0
        %1581 = vmatmul.mubr.bf16.gmra.mxu0 %v1543
        %v1582 = vpop.f32.mrf.mxu0
        %v1583 = vadd.f32 0.0, %v1582
        %v1584 = vpop.f32.mrf.mxu0
        %v1585 = vpop.f32.mrf.mxu0
        %v1586 = vadd.f32 0.0, %v1585
        %v1587 = vpop.f32.mrf.mxu0
        %1588 = vdwg.mxu0
        %v1590 = vsel %vm885, %v1027, 0
        %v1593 = vsel %vm885, %v1212, 0
        %1595 = vmatprep.subr.bf16.mxu0 0
        %1596 = vmatpush1.bf16.xpose.msra.mxu0 0
        %1597 = vmatprep.subr.bf16.mxu0 0
        %1598 = vmatpush1.bf16.xpose.msra.mxu0 0
        %1599 = vmatprep.subr.bf16.mxu0 0
        %1600 = vmatpush1.bf16.xpose.msra.mxu0 0
        %1601 = vmatprep.subr.bf16.mxu0 0
        %1602 = vmatpush1.bf16.xpose.msra.mxu0 0
        %1603 = vmatprep.subr.bf16.mxu0 0
        %1604 = vmatpush1.bf16.xpose.msra.mxu0 0
        %1605 = vmatprep.subr.bf16.mxu0 0
        %1606 = vmatpush1.bf16.xpose.msra.mxu0 0
        %1607 = vmatprep.subr.bf16.mxu0 0
        %1608 = vmatpush1.bf16.xpose.msra.mxu0 0
        %1609 = vmatprep.subr.bf16.mxu0 0
        %1610 = vmatpush1.bf16.xpose.msra.mxu0 %v1593
        %1611 = vmatprep.subr.bf16.mxu0 0
        %1612 = vmatpush2.bf16.xpose.msra.mxu0 0
        %1613 = vmatprep.subr.bf16.mxu0 0
        %1614 = vmatpush2.bf16.xpose.msra.mxu0 0
        %1615 = vmatprep.subr.bf16.mxu0 0
        %1616 = vmatpush2.bf16.xpose.msra.mxu0 0
        %1617 = vmatprep.subr.bf16.mxu0 0
        %1618 = vmatpush2.bf16.xpose.msra.mxu0 0
        %1619 = vmatprep.subr.bf16.mxu0 0
        %1620 = vmatpush2.bf16.xpose.msra.mxu0 0
        %1621 = vmatprep.subr.bf16.mxu0 0
        %1622 = vmatpush2.bf16.xpose.msra.mxu0 0
        %1623 = vmatprep.subr.bf16.mxu0 0
        %1624 = vmatpush2.bf16.xpose.msra.mxu0 0
        %1625 = vmatprep.subr.bf16.mxu0 0
        %1626 = vmatpush2.bf16.xpose.msra.mxu0 0
        %1627 = vmatprep.mubr.bf16.mxu0 0
        %1628 = vmatmul.mubr.bf16.gmra.mxu0 %v1590
        %v1629 = vpop.f32.mrf.mxu0
        %v1630 = vadd.f32 0.0, %v1629
        %v1631 = vpop.f32.mrf.mxu0
        %v1632 = vpop.f32.mrf.mxu0
        %v1633 = vadd.f32 0.0, %v1632
        %v1634 = vpop.f32.mrf.mxu0
        %1635 = vdwg.mxu0
        %v1637 = vsel %vm885, %v1028, 0
        %v1640 = vsel %vm885, %v1213, 0
        %1642 = vmatprep.subr.bf16.mxu0 0
        %1643 = vmatpush1.bf16.xpose.msra.mxu0 0
        %1644 = vmatprep.subr.bf16.mxu0 0
        %1645 = vmatpush1.bf16.xpose.msra.mxu0 0
        %1646 = vmatprep.subr.bf16.mxu0 0
        %1647 = vmatpush1.bf16.xpose.msra.mxu0 0
        %1648 = vmatprep.subr.bf16.mxu0 0
        %1649 = vmatpush1.bf16.xpose.msra.mxu0 0
        %1650 = vmatprep.subr.bf16.mxu0 0
        %1651 = vmatpush1.bf16.xpose.msra.mxu0 0
        %1652 = vmatprep.subr.bf16.mxu0 0
        %1653 = vmatpush1.bf16.xpose.msra.mxu0 0
        %1654 = vmatprep.subr.bf16.mxu0 0
        %1655 = vmatpush1.bf16.xpose.msra.mxu0 0
        %1656 = vmatprep.subr.bf16.mxu0 0
        %1657 = vmatpush1.bf16.xpose.msra.mxu0 %v1640
        %1658 = vmatprep.subr.bf16.mxu0 0
        %1659 = vmatpush2.bf16.xpose.msra.mxu0 0
        %1660 = vmatprep.subr.bf16.mxu0 0
        %1661 = vmatpush2.bf16.xpose.msra.mxu0 0
        %1662 = vmatprep.subr.bf16.mxu0 0
        %1663 = vmatpush2.bf16.xpose.msra.mxu0 0
        %1664 = vmatprep.subr.bf16.mxu0 0
        %1665 = vmatpush2.bf16.xpose.msra.mxu0 0
        %1666 = vmatprep.subr.bf16.mxu0 0
        %1667 = vmatpush2.bf16.xpose.msra.mxu0 0
        %1668 = vmatprep.subr.bf16.mxu0 0
        %1669 = vmatpush2.bf16.xpose.msra.mxu0 0
        %1670 = vmatprep.subr.bf16.mxu0 0
        %1671 = vmatpush2.bf16.xpose.msra.mxu0 0
        %1672 = vmatprep.subr.bf16.mxu0 0
        %1673 = vmatpush2.bf16.xpose.msra.mxu0 0
        %1674 = vmatprep.mubr.bf16.mxu0 0
        %1675 = vmatmul.mubr.bf16.gmra.mxu0 %v1637
        %v1676 = vpop.f32.mrf.mxu0
        %v1677 = vadd.f32 0.0, %v1676
        %v1678 = vpop.f32.mrf.mxu0
        %v1679 = vpop.f32.mrf.mxu0
        %v1680 = vadd.f32 0.0, %v1679
        %v1681 = vpop.f32.mrf.mxu0
        %1682 = vdwg.mxu0
        %v1684 = vsel %vm885, %v1029, 0
        %v1687 = vsel %vm885, %v1214, 0
        %1689 = vmatprep.subr.bf16.mxu0 0
        %1690 = vmatpush1.bf16.xpose.msra.mxu0 0
        %1691 = vmatprep.subr.bf16.mxu0 0
        %1692 = vmatpush1.bf16.xpose.msra.mxu0 0
        %1693 = vmatprep.subr.bf16.mxu0 0
        %1694 = vmatpush1.bf16.xpose.msra.mxu0 0
        %1695 = vmatprep.subr.bf16.mxu0 0
        %1696 = vmatpush1.bf16.xpose.msra.mxu0 0
        %1697 = vmatprep.subr.bf16.mxu0 0
        %1698 = vmatpush1.bf16.xpose.msra.mxu0 0
        %1699 = vmatprep.subr.bf16.mxu0 0
        %1700 = vmatpush1.bf16.xpose.msra.mxu0 0
        %1701 = vmatprep.subr.bf16.mxu0 0
        %1702 = vmatpush1.bf16.xpose.msra.mxu0 0
        %1703 = vmatprep.subr.bf16.mxu0 0
        %1704 = vmatpush1.bf16.xpose.msra.mxu0 %v1687
        %1705 = vmatprep.subr.bf16.mxu0 0
        %1706 = vmatpush2.bf16.xpose.msra.mxu0 0
        %1707 = vmatprep.subr.bf16.mxu0 0
        %1708 = vmatpush2.bf16.xpose.msra.mxu0 0
        %1709 = vmatprep.subr.bf16.mxu0 0
        %1710 = vmatpush2.bf16.xpose.msra.mxu0 0
        %1711 = vmatprep.subr.bf16.mxu0 0
        %1712 = vmatpush2.bf16.xpose.msra.mxu0 0
        %1713 = vmatprep.subr.bf16.mxu0 0
        %1714 = vmatpush2.bf16.xpose.msra.mxu0 0
        %1715 = vmatprep.subr.bf16.mxu0 0
        %1716 = vmatpush2.bf16.xpose.msra.mxu0 0
        %1717 = vmatprep.subr.bf16.mxu0 0
        %1718 = vmatpush2.bf16.xpose.msra.mxu0 0
        %1719 = vmatprep.subr.bf16.mxu0 0
        %1720 = vmatpush2.bf16.xpose.msra.mxu0 0
        %1721 = vmatprep.mubr.bf16.mxu0 0
        %1722 = vmatmul.mubr.bf16.gmra.mxu0 %v1684
        %v1723 = vpop.f32.mrf.mxu0
        %v1724 = vadd.f32 0.0, %v1723
        %v1725 = vpop.f32.mrf.mxu0
        %v1726 = vpop.f32.mrf.mxu0
        %v1727 = vadd.f32 0.0, %v1726
        %v1728 = vpop.f32.mrf.mxu0
        %1729 = vdwg.mxu0
        %v1731 = vsel %vm885, %v1030, 0
        %v1734 = vsel %vm885, %v1215, 0
        %1736 = vmatprep.subr.bf16.mxu0 0
        %1737 = vmatpush1.bf16.xpose.msra.mxu0 0
        %1738 = vmatprep.subr.bf16.mxu0 0
        %1739 = vmatpush1.bf16.xpose.msra.mxu0 0
        %1740 = vmatprep.subr.bf16.mxu0 0
        %1741 = vmatpush1.bf16.xpose.msra.mxu0 0
        %1742 = vmatprep.subr.bf16.mxu0 0
        %1743 = vmatpush1.bf16.xpose.msra.mxu0 0
        %1744 = vmatprep.subr.bf16.mxu0 0
        %1745 = vmatpush1.bf16.xpose.msra.mxu0 0
        %1746 = vmatprep.subr.bf16.mxu0 0
        %1747 = vmatpush1.bf16.xpose.msra.mxu0 0
        %1748 = vmatprep.subr.bf16.mxu0 0
        %1749 = vmatpush1.bf16.xpose.msra.mxu0 0
        %1750 = vmatprep.subr.bf16.mxu0 0
        %1751 = vmatpush1.bf16.xpose.msra.mxu0 %v1734
        %1752 = vmatprep.subr.bf16.mxu0 0
        %1753 = vmatpush2.bf16.xpose.msra.mxu0 0
        %1754 = vmatprep.subr.bf16.mxu0 0
        %1755 = vmatpush2.bf16.xpose.msra.mxu0 0
        %1756 = vmatprep.subr.bf16.mxu0 0
        %1757 = vmatpush2.bf16.xpose.msra.mxu0 0
        %1758 = vmatprep.subr.bf16.mxu0 0
        %1759 = vmatpush2.bf16.xpose.msra.mxu0 0
        %1760 = vmatprep.subr.bf16.mxu0 0
        %1761 = vmatpush2.bf16.xpose.msra.mxu0 0
        %1762 = vmatprep.subr.bf16.mxu0 0
        %1763 = vmatpush2.bf16.xpose.msra.mxu0 0
        %1764 = vmatprep.subr.bf16.mxu0 0
        %1765 = vmatpush2.bf16.xpose.msra.mxu0 0
        %1766 = vmatprep.subr.bf16.mxu0 0
        %1767 = vmatpush2.bf16.xpose.msra.mxu0 0
        %1768 = vmatprep.mubr.bf16.mxu0 0
        %1769 = vmatmul.mubr.bf16.gmra.mxu0 %v1731
        %v1770 = vpop.f32.mrf.mxu0
        %v1771 = vadd.f32 0.0, %v1770
        %v1772 = vpop.f32.mrf.mxu0
        %v1773 = vpop.f32.mrf.mxu0
        %v1774 = vadd.f32 0.0, %v1773
        %v1775 = vpop.f32.mrf.mxu0
        %1776 = vdwg.mxu0
        %vm1777 = vcmask 130048
        %v1778 = vsel %vm1777, %v1442, -inf
        %1779 = vmax.xlane.f32.xlu0 %v1778
        %v1780 = vpop.xlane.xlu0 %1779
        %v1781 = vsel %vm1777, %v1445, -inf
        %1782 = vmax.xlane.f32.xlu0 %v1781
        %v1783 = vpop.xlane.xlu0 %1782
        %v1784 = vsel %vm1777, %v1489, -inf
        %1785 = vmax.xlane.f32.xlu0 %v1784
        %v1786 = vpop.xlane.xlu0 %1785
        %v1787 = vsel %vm1777, %v1492, -inf
        %1788 = vmax.xlane.f32.xlu0 %v1787
        %v1789 = vpop.xlane.xlu0 %1788
        %v1790 = vsel %vm1777, %v1536, -inf
        %1791 = vmax.xlane.f32.xlu0 %v1790
        %v1792 = vpop.xlane.xlu0 %1791
        %v1793 = vsel %vm1777, %v1539, -inf
        %1794 = vmax.xlane.f32.xlu0 %v1793
        %v1795 = vpop.xlane.xlu0 %1794
        %v1796 = vsel %vm1777, %v1583, -inf
        %1797 = vmax.xlane.f32.xlu0 %v1796
        %v1798 = vpop.xlane.xlu0 %1797
        %v1799 = vsel %vm1777, %v1586, -inf
        %1800 = vmax.xlane.f32.xlu0 %v1799
        %v1801 = vpop.xlane.xlu0 %1800
        %v1802 = vsel %vm1777, %v1630, -inf
        %1803 = vmax.xlane.f32.xlu0 %v1802
        %v1804 = vpop.xlane.xlu0 %1803
        %v1805 = vsel %vm1777, %v1633, -inf
        %1806 = vmax.xlane.f32.xlu0 %v1805
        %v1807 = vpop.xlane.xlu0 %1806
        %v1808 = vsel %vm1777, %v1677, -inf
        %1809 = vmax.xlane.f32.xlu0 %v1808
        %v1810 = vpop.xlane.xlu0 %1809
        %v1811 = vsel %vm1777, %v1680, -inf
        %1812 = vmax.xlane.f32.xlu0 %v1811
        %v1813 = vpop.xlane.xlu0 %1812
        %v1814 = vsel %vm1777, %v1724, -inf
        %1815 = vmax.xlane.f32.xlu0 %v1814
        %v1816 = vpop.xlane.xlu0 %1815
        %v1817 = vsel %vm1777, %v1727, -inf
        %1818 = vmax.xlane.f32.xlu0 %v1817
        %v1819 = vpop.xlane.xlu0 %1818
        %v1820 = vsel %vm1777, %v1771, -inf
        %1821 = vmax.xlane.f32.xlu0 %v1820
        %v1822 = vpop.xlane.xlu0 %1821
        %v1823 = vsel %vm1777, %v1774, -inf
        %1824 = vmax.xlane.f32.xlu0 %v1823
        %v1825 = vpop.xlane.xlu0 %1824
        %v1826 = vsub.f32 %v1442, %v1780
        %v1827 = vsub.f32 %v1445, %v1783
        %v1828 = vsub.f32 %v1489, %v1786
        %v1829 = vsub.f32 %v1492, %v1789
        %v1830 = vsub.f32 %v1536, %v1792
        %v1831 = vsub.f32 %v1539, %v1795
        %v1832 = vsub.f32 %v1583, %v1798
        %v1833 = vsub.f32 %v1586, %v1801
        %v1834 = vsub.f32 %v1630, %v1804
        %v1835 = vsub.f32 %v1633, %v1807
        %v1836 = vsub.f32 %v1677, %v1810
        %v1837 = vsub.f32 %v1680, %v1813
        %v1838 = vsub.f32 %v1724, %v1816
        %v1839 = vsub.f32 %v1727, %v1819
        %v1840 = vsub.f32 %v1771, %v1822
        %v1841 = vsub.f32 %v1774, %v1825
        %v1842 = vmul.f32 %v1826, 1.442695
        %v1843 = vpow.pop %v1842
        %v1844 = vmul.f32 %v1827, 1.442695
        %v1845 = vpow.pop %v1844
        %v1846 = vmul.f32 %v1828, 1.442695
        %v1847 = vpow.pop %v1846
        %v1848 = vmul.f32 %v1829, 1.442695
        %v1849 = vpow.pop %v1848
        %v1850 = vmul.f32 %v1830, 1.442695
        %v1851 = vpow.pop %v1850
        %v1852 = vmul.f32 %v1831, 1.442695
        %v1853 = vpow.pop %v1852
        %v1854 = vmul.f32 %v1832, 1.442695
        %v1855 = vpow.pop %v1854
        %v1856 = vmul.f32 %v1833, 1.442695
        %v1857 = vpow.pop %v1856
        %v1858 = vmul.f32 %v1834, 1.442695
        %v1859 = vpow.pop %v1858
        %v1860 = vmul.f32 %v1835, 1.442695
        %v1861 = vpow.pop %v1860
        %v1862 = vmul.f32 %v1836, 1.442695
        %v1863 = vpow.pop %v1862
        %v1864 = vmul.f32 %v1837, 1.442695
        %v1865 = vpow.pop %v1864
        %v1866 = vmul.f32 %v1838, 1.442695
        %v1867 = vpow.pop %v1866
        %v1868 = vmul.f32 %v1839, 1.442695
        %v1869 = vpow.pop %v1868
        %v1870 = vmul.f32 %v1840, 1.442695
        %v1871 = vpow.pop %v1870
        %v1872 = vmul.f32 %v1841, 1.442695
        %v1873 = vpow.pop %v1872
        %v1874 = vsel %vm1777, %v1843, 0.0
        %1875 = vadd.xlane.f32.xlu0 %v1874
        %v1876 = vpop.xlane.xlu0 %1875
        %v1877 = vsel %vm1777, %v1845, 0.0
        %1878 = vadd.xlane.f32.xlu0 %v1877
        %v1879 = vpop.xlane.xlu0 %1878
        %v1880 = vsel %vm1777, %v1847, 0.0
        %1881 = vadd.xlane.f32.xlu0 %v1880
        %v1882 = vpop.xlane.xlu0 %1881
        %v1883 = vsel %vm1777, %v1849, 0.0
        %1884 = vadd.xlane.f32.xlu0 %v1883
        %v1885 = vpop.xlane.xlu0 %1884
        %v1886 = vsel %vm1777, %v1851, 0.0
        %1887 = vadd.xlane.f32.xlu0 %v1886
        %v1888 = vpop.xlane.xlu0 %1887
        %v1889 = vsel %vm1777, %v1853, 0.0
        %1890 = vadd.xlane.f32.xlu0 %v1889
        %v1891 = vpop.xlane.xlu0 %1890
        %v1892 = vsel %vm1777, %v1855, 0.0
        %1893 = vadd.xlane.f32.xlu0 %v1892
        %v1894 = vpop.xlane.xlu0 %1893
        %v1895 = vsel %vm1777, %v1857, 0.0
        %1896 = vadd.xlane.f32.xlu0 %v1895
        %v1897 = vpop.xlane.xlu0 %1896
        %v1898 = vsel %vm1777, %v1859, 0.0
        %1899 = vadd.xlane.f32.xlu0 %v1898
        %v1900 = vpop.xlane.xlu0 %1899
        %v1901 = vsel %vm1777, %v1861, 0.0
        %1902 = vadd.xlane.f32.xlu0 %v1901
        %v1903 = vpop.xlane.xlu0 %1902
        %v1904 = vsel %vm1777, %v1863, 0.0
        %1905 = vadd.xlane.f32.xlu0 %v1904
        %v1906 = vpop.xlane.xlu0 %1905
        %v1907 = vsel %vm1777, %v1865, 0.0
        %1908 = vadd.xlane.f32.xlu0 %v1907
        %v1909 = vpop.xlane.xlu0 %1908
        %v1910 = vsel %vm1777, %v1867, 0.0
        %1911 = vadd.xlane.f32.xlu0 %v1910
        %v1912 = vpop.xlane.xlu0 %1911
        %v1913 = vsel %vm1777, %v1869, 0.0
        %1914 = vadd.xlane.f32.xlu0 %v1913
        %v1915 = vpop.xlane.xlu0 %1914
        %v1916 = vsel %vm1777, %v1871, 0.0
        %1917 = vadd.xlane.f32.xlu0 %v1916
        %v1918 = vpop.xlane.xlu0 %1917
        %v1919 = vsel %vm1777, %v1873, 0.0
        %1920 = vadd.xlane.f32.xlu0 %v1919
        %v1921 = vpop.xlane.xlu0 %1920
        %v1922 = vrcp.pop %v1876
        %v1923 = vrcp.pop %v1879
        %v1924 = vrcp.pop %v1882
        %v1925 = vrcp.pop %v1885
        %v1926 = vrcp.pop %v1888
        %v1927 = vrcp.pop %v1891
        %v1928 = vrcp.pop %v1894
        %v1929 = vrcp.pop %v1897
        %v1930 = vrcp.pop %v1900
        %v1931 = vrcp.pop %v1903
        %v1932 = vrcp.pop %v1906
        %v1933 = vrcp.pop %v1909
        %v1934 = vrcp.pop %v1912
        %v1935 = vrcp.pop %v1915
        %v1936 = vrcp.pop %v1918
        %v1937 = vrcp.pop %v1921
        %v1938 = vmul.f32 %v1843, %v1922
        %v1939 = vmul.f32 %v1845, %v1923
        %v1940 = vmul.f32 %v1847, %v1924
        %v1941 = vmul.f32 %v1849, %v1925
        %v1942 = vmul.f32 %v1851, %v1926
        %v1943 = vmul.f32 %v1853, %v1927
        %v1944 = vmul.f32 %v1855, %v1928
        %v1945 = vmul.f32 %v1857, %v1929
        %v1946 = vmul.f32 %v1859, %v1930
        %v1947 = vmul.f32 %v1861, %v1931
        %v1948 = vmul.f32 %v1863, %v1932
        %v1949 = vmul.f32 %v1865, %v1933
        %v1950 = vmul.f32 %v1867, %v1934
        %v1951 = vmul.f32 %v1869, %v1935
        %v1952 = vmul.f32 %v1871, %v1936
        %v1953 = vmul.f32 %v1873, %v1937
        %v1954 = vpack.c.bf16 %v1939, %v1938
        %v1955 = vpack.c.bf16 %v1941, %v1940
        %v1956 = vpack.c.bf16 %v1943, %v1942
        %v1957 = vpack.c.bf16 %v1945, %v1944
        %v1958 = vpack.c.bf16 %v1947, %v1946
        %v1959 = vpack.c.bf16 %v1949, %v1948
        %v1960 = vpack.c.bf16 %v1951, %v1950
        %v1961 = vpack.c.bf16 %v1953, %v1952
        %v1963 = vsel %vm1777, %v1954, 0
        %1965 = vmatprep.subr.bf16.mxu0 0
        %1966 = vmatpush1.bf16.msra.mxu0 0
        %1967 = vmatprep.subr.bf16.mxu0 0
        %1968 = vmatpush1.bf16.msra.mxu0 0
        %1969 = vmatprep.subr.bf16.mxu0 0
        %1970 = vmatpush1.bf16.msra.mxu0 0
        %1971 = vmatprep.subr.bf16.mxu0 0
        %1972 = vmatpush1.bf16.msra.mxu0 0
        %1973 = vmatprep.subr.bf16.mxu0 0
        %1974 = vmatpush1.bf16.msra.mxu0 0
        %1975 = vmatprep.subr.bf16.mxu0 0
        %1976 = vmatpush1.bf16.msra.mxu0 0
        %1977 = vmatprep.subr.bf16.mxu0 0
        %1978 = vmatpush1.bf16.msra.mxu0 0
        %1979 = vmatprep.subr.bf16.mxu0 0
        %1980 = vmatpush1.bf16.msra.mxu0 %v1393
        %1981 = vmatprep.subr.bf16.mxu0 0
        %1982 = vmatpush2.bf16.msra.mxu0 0
        %1983 = vmatprep.subr.bf16.mxu0 0
        %1984 = vmatpush2.bf16.msra.mxu0 0
        %1985 = vmatprep.subr.bf16.mxu0 0
        %1986 = vmatpush2.bf16.msra.mxu0 0
        %1987 = vmatprep.subr.bf16.mxu0 0
        %1988 = vmatpush2.bf16.msra.mxu0 0
        %1989 = vmatprep.subr.bf16.mxu0 0
        %1990 = vmatpush2.bf16.msra.mxu0 0
        %1991 = vmatprep.subr.bf16.mxu0 0
        %1992 = vmatpush2.bf16.msra.mxu0 0
        %1993 = vmatprep.subr.bf16.mxu0 0
        %1994 = vmatpush2.bf16.msra.mxu0 0
        %1995 = vmatprep.subr.bf16.mxu0 0
        %1996 = vmatpush2.bf16.msra.mxu0 0
        %1997 = vmatprep.mubr.bf16.mxu0 0
        %1998 = vmatmul.mubr.bf16.gmra.mxu0 %v1963
        %v1999 = vpop.f32.mrf.mxu0
        %v2000 = vadd.f32 0.0, %v1999
        %v2001 = vpop.f32.mrf.mxu0
        %v2002 = vpop.f32.mrf.mxu0
        %v2003 = vadd.f32 0.0, %v2002
        %v2004 = vpop.f32.mrf.mxu0
        %2005 = vdwg.mxu0
        %v2007 = vsel %vm1777, %v1955, 0
        %2009 = vmatprep.subr.bf16.mxu0 0
        %2010 = vmatpush1.bf16.msra.mxu0 0
        %2011 = vmatprep.subr.bf16.mxu0 0
        %2012 = vmatpush1.bf16.msra.mxu0 0
        %2013 = vmatprep.subr.bf16.mxu0 0
        %2014 = vmatpush1.bf16.msra.mxu0 0
        %2015 = vmatprep.subr.bf16.mxu0 0
        %2016 = vmatpush1.bf16.msra.mxu0 0
        %2017 = vmatprep.subr.bf16.mxu0 0
        %2018 = vmatpush1.bf16.msra.mxu0 0
        %2019 = vmatprep.subr.bf16.mxu0 0
        %2020 = vmatpush1.bf16.msra.mxu0 0
        %2021 = vmatprep.subr.bf16.mxu0 0
        %2022 = vmatpush1.bf16.msra.mxu0 0
        %2023 = vmatprep.subr.bf16.mxu0 0
        %2024 = vmatpush1.bf16.msra.mxu0 %v1394
        %2025 = vmatprep.subr.bf16.mxu0 0
        %2026 = vmatpush2.bf16.msra.mxu0 0
        %2027 = vmatprep.subr.bf16.mxu0 0
        %2028 = vmatpush2.bf16.msra.mxu0 0
        %2029 = vmatprep.subr.bf16.mxu0 0
        %2030 = vmatpush2.bf16.msra.mxu0 0
        %2031 = vmatprep.subr.bf16.mxu0 0
        %2032 = vmatpush2.bf16.msra.mxu0 0
        %2033 = vmatprep.subr.bf16.mxu0 0
        %2034 = vmatpush2.bf16.msra.mxu0 0
        %2035 = vmatprep.subr.bf16.mxu0 0
        %2036 = vmatpush2.bf16.msra.mxu0 0
        %2037 = vmatprep.subr.bf16.mxu0 0
        %2038 = vmatpush2.bf16.msra.mxu0 0
        %2039 = vmatprep.subr.bf16.mxu0 0
        %2040 = vmatpush2.bf16.msra.mxu0 0
        %2041 = vmatprep.mubr.bf16.mxu0 0
        %2042 = vmatmul.mubr.bf16.gmra.mxu0 %v2007
        %v2043 = vpop.f32.mrf.mxu0
        %v2044 = vadd.f32 0.0, %v2043
        %v2045 = vpop.f32.mrf.mxu0
        %v2046 = vpop.f32.mrf.mxu0
        %v2047 = vadd.f32 0.0, %v2046
        %v2048 = vpop.f32.mrf.mxu0
        %2049 = vdwg.mxu0
        %v2051 = vsel %vm1777, %v1956, 0
        %2053 = vmatprep.subr.bf16.mxu0 0
        %2054 = vmatpush1.bf16.msra.mxu0 0
        %2055 = vmatprep.subr.bf16.mxu0 0
        %2056 = vmatpush1.bf16.msra.mxu0 0
        %2057 = vmatprep.subr.bf16.mxu0 0
        %2058 = vmatpush1.bf16.msra.mxu0 0
        %2059 = vmatprep.subr.bf16.mxu0 0
        %2060 = vmatpush1.bf16.msra.mxu0 0
        %2061 = vmatprep.subr.bf16.mxu0 0
        %2062 = vmatpush1.bf16.msra.mxu0 0
        %2063 = vmatprep.subr.bf16.mxu0 0
        %2064 = vmatpush1.bf16.msra.mxu0 0
        %2065 = vmatprep.subr.bf16.mxu0 0
        %2066 = vmatpush1.bf16.msra.mxu0 0
        %2067 = vmatprep.subr.bf16.mxu0 0
        %2068 = vmatpush1.bf16.msra.mxu0 %v1395
        %2069 = vmatprep.subr.bf16.mxu0 0
        %2070 = vmatpush2.bf16.msra.mxu0 0
        %2071 = vmatprep.subr.bf16.mxu0 0
        %2072 = vmatpush2.bf16.msra.mxu0 0
        %2073 = vmatprep.subr.bf16.mxu0 0
        %2074 = vmatpush2.bf16.msra.mxu0 0
        %2075 = vmatprep.subr.bf16.mxu0 0
        %2076 = vmatpush2.bf16.msra.mxu0 0
        %2077 = vmatprep.subr.bf16.mxu0 0
        %2078 = vmatpush2.bf16.msra.mxu0 0
        %2079 = vmatprep.subr.bf16.mxu0 0
        %2080 = vmatpush2.bf16.msra.mxu0 0
        %2081 = vmatprep.subr.bf16.mxu0 0
        %2082 = vmatpush2.bf16.msra.mxu0 0
        %2083 = vmatprep.subr.bf16.mxu0 0
        %2084 = vmatpush2.bf16.msra.mxu0 0
        %2085 = vmatprep.mubr.bf16.mxu0 0
        %2086 = vmatmul.mubr.bf16.gmra.mxu0 %v2051
        %v2087 = vpop.f32.mrf.mxu0
        %v2088 = vadd.f32 0.0, %v2087
        %v2089 = vpop.f32.mrf.mxu0
        %v2090 = vpop.f32.mrf.mxu0
        %v2091 = vadd.f32 0.0, %v2090
        %v2092 = vpop.f32.mrf.mxu0
        %2093 = vdwg.mxu0
        %v2095 = vsel %vm1777, %v1957, 0
        %2097 = vmatprep.subr.bf16.mxu0 0
        %2098 = vmatpush1.bf16.msra.mxu0 0
        %2099 = vmatprep.subr.bf16.mxu0 0
        %2100 = vmatpush1.bf16.msra.mxu0 0
        %2101 = vmatprep.subr.bf16.mxu0 0
        %2102 = vmatpush1.bf16.msra.mxu0 0
        %2103 = vmatprep.subr.bf16.mxu0 0
        %2104 = vmatpush1.bf16.msra.mxu0 0
        %2105 = vmatprep.subr.bf16.mxu0 0
        %2106 = vmatpush1.bf16.msra.mxu0 0
        %2107 = vmatprep.subr.bf16.mxu0 0
        %2108 = vmatpush1.bf16.msra.mxu0 0
        %2109 = vmatprep.subr.bf16.mxu0 0
        %2110 = vmatpush1.bf16.msra.mxu0 0
        %2111 = vmatprep.subr.bf16.mxu0 0
        %2112 = vmatpush1.bf16.msra.mxu0 %v1396
        %2113 = vmatprep.subr.bf16.mxu0 0
        %2114 = vmatpush2.bf16.msra.mxu0 0
        %2115 = vmatprep.subr.bf16.mxu0 0
        %2116 = vmatpush2.bf16.msra.mxu0 0
        %2117 = vmatprep.subr.bf16.mxu0 0
        %2118 = vmatpush2.bf16.msra.mxu0 0
        %2119 = vmatprep.subr.bf16.mxu0 0
        %2120 = vmatpush2.bf16.msra.mxu0 0
        %2121 = vmatprep.subr.bf16.mxu0 0
        %2122 = vmatpush2.bf16.msra.mxu0 0
        %2123 = vmatprep.subr.bf16.mxu0 0
        %2124 = vmatpush2.bf16.msra.mxu0 0
        %2125 = vmatprep.subr.bf16.mxu0 0
        %2126 = vmatpush2.bf16.msra.mxu0 0
        %2127 = vmatprep.subr.bf16.mxu0 0
        %2128 = vmatpush2.bf16.msra.mxu0 0
        %2129 = vmatprep.mubr.bf16.mxu0 0
        %2130 = vmatmul.mubr.bf16.gmra.mxu0 %v2095
        %v2131 = vpop.f32.mrf.mxu0
        %v2132 = vadd.f32 0.0, %v2131
        %v2133 = vpop.f32.mrf.mxu0
        %v2134 = vpop.f32.mrf.mxu0
        %v2135 = vadd.f32 0.0, %v2134
        %v2136 = vpop.f32.mrf.mxu0
        %2137 = vdwg.mxu0
        %v2139 = vsel %vm1777, %v1958, 0
        %2141 = vmatprep.subr.bf16.mxu0 0
        %2142 = vmatpush1.bf16.msra.mxu0 0
        %2143 = vmatprep.subr.bf16.mxu0 0
        %2144 = vmatpush1.bf16.msra.mxu0 0
        %2145 = vmatprep.subr.bf16.mxu0 0
        %2146 = vmatpush1.bf16.msra.mxu0 0
        %2147 = vmatprep.subr.bf16.mxu0 0
        %2148 = vmatpush1.bf16.msra.mxu0 0
        %2149 = vmatprep.subr.bf16.mxu0 0
        %2150 = vmatpush1.bf16.msra.mxu0 0
        %2151 = vmatprep.subr.bf16.mxu0 0
        %2152 = vmatpush1.bf16.msra.mxu0 0
        %2153 = vmatprep.subr.bf16.mxu0 0
        %2154 = vmatpush1.bf16.msra.mxu0 0
        %2155 = vmatprep.subr.bf16.mxu0 0
        %2156 = vmatpush1.bf16.msra.mxu0 %v1397
        %2157 = vmatprep.subr.bf16.mxu0 0
        %2158 = vmatpush2.bf16.msra.mxu0 0
        %2159 = vmatprep.subr.bf16.mxu0 0
        %2160 = vmatpush2.bf16.msra.mxu0 0
        %2161 = vmatprep.subr.bf16.mxu0 0
        %2162 = vmatpush2.bf16.msra.mxu0 0
        %2163 = vmatprep.subr.bf16.mxu0 0
        %2164 = vmatpush2.bf16.msra.mxu0 0
        %2165 = vmatprep.subr.bf16.mxu0 0
        %2166 = vmatpush2.bf16.msra.mxu0 0
        %2167 = vmatprep.subr.bf16.mxu0 0
        %2168 = vmatpush2.bf16.msra.mxu0 0
        %2169 = vmatprep.subr.bf16.mxu0 0
        %2170 = vmatpush2.bf16.msra.mxu0 0
        %2171 = vmatprep.subr.bf16.mxu0 0
        %2172 = vmatpush2.bf16.msra.mxu0 0
        %2173 = vmatprep.mubr.bf16.mxu0 0
        %2174 = vmatmul.mubr.bf16.gmra.mxu0 %v2139
        %v2175 = vpop.f32.mrf.mxu0
        %v2176 = vadd.f32 0.0, %v2175
        %v2177 = vpop.f32.mrf.mxu0
        %v2178 = vpop.f32.mrf.mxu0
        %v2179 = vadd.f32 0.0, %v2178
        %v2180 = vpop.f32.mrf.mxu0
        %2181 = vdwg.mxu0
        %v2183 = vsel %vm1777, %v1959, 0
        %2185 = vmatprep.subr.bf16.mxu0 0
        %2186 = vmatpush1.bf16.msra.mxu0 0
        %2187 = vmatprep.subr.bf16.mxu0 0
        %2188 = vmatpush1.bf16.msra.mxu0 0
        %2189 = vmatprep.subr.bf16.mxu0 0
        %2190 = vmatpush1.bf16.msra.mxu0 0
        %2191 = vmatprep.subr.bf16.mxu0 0
        %2192 = vmatpush1.bf16.msra.mxu0 0
        %2193 = vmatprep.subr.bf16.mxu0 0
        %2194 = vmatpush1.bf16.msra.mxu0 0
        %2195 = vmatprep.subr.bf16.mxu0 0
        %2196 = vmatpush1.bf16.msra.mxu0 0
        %2197 = vmatprep.subr.bf16.mxu0 0
        %2198 = vmatpush1.bf16.msra.mxu0 0
        %2199 = vmatprep.subr.bf16.mxu0 0
        %2200 = vmatpush1.bf16.msra.mxu0 %v1398
        %2201 = vmatprep.subr.bf16.mxu0 0
        %2202 = vmatpush2.bf16.msra.mxu0 0
        %2203 = vmatprep.subr.bf16.mxu0 0
        %2204 = vmatpush2.bf16.msra.mxu0 0
        %2205 = vmatprep.subr.bf16.mxu0 0
        %2206 = vmatpush2.bf16.msra.mxu0 0
        %2207 = vmatprep.subr.bf16.mxu0 0
        %2208 = vmatpush2.bf16.msra.mxu0 0
        %2209 = vmatprep.subr.bf16.mxu0 0
        %2210 = vmatpush2.bf16.msra.mxu0 0
        %2211 = vmatprep.subr.bf16.mxu0 0
        %2212 = vmatpush2.bf16.msra.mxu0 0
        %2213 = vmatprep.subr.bf16.mxu0 0
        %2214 = vmatpush2.bf16.msra.mxu0 0
        %2215 = vmatprep.subr.bf16.mxu0 0
        %2216 = vmatpush2.bf16.msra.mxu0 0
        %2217 = vmatprep.mubr.bf16.mxu0 0
        %2218 = vmatmul.mubr.bf16.gmra.mxu0 %v2183
        %v2219 = vpop.f32.mrf.mxu0
        %v2220 = vadd.f32 0.0, %v2219
        %v2221 = vpop.f32.mrf.mxu0
        %v2222 = vpop.f32.mrf.mxu0
        %v2223 = vadd.f32 0.0, %v2222
        %v2224 = vpop.f32.mrf.mxu0
        %2225 = vdwg.mxu0
        %v2227 = vsel %vm1777, %v1960, 0
        %2229 = vmatprep.subr.bf16.mxu0 0
        %2230 = vmatpush1.bf16.msra.mxu0 0
        %2231 = vmatprep.subr.bf16.mxu0 0
        %2232 = vmatpush1.bf16.msra.mxu0 0
        %2233 = vmatprep.subr.bf16.mxu0 0
        %2234 = vmatpush1.bf16.msra.mxu0 0
        %2235 = vmatprep.subr.bf16.mxu0 0
        %2236 = vmatpush1.bf16.msra.mxu0 0
        %2237 = vmatprep.subr.bf16.mxu0 0
        %2238 = vmatpush1.bf16.msra.mxu0 0
        %2239 = vmatprep.subr.bf16.mxu0 0
        %2240 = vmatpush1.bf16.msra.mxu0 0
        %2241 = vmatprep.subr.bf16.mxu0 0
        %2242 = vmatpush1.bf16.msra.mxu0 0
        %2243 = vmatprep.subr.bf16.mxu0 0
        %2244 = vmatpush1.bf16.msra.mxu0 %v1399
        %2245 = vmatprep.subr.bf16.mxu0 0
        %2246 = vmatpush2.bf16.msra.mxu0 0
        %2247 = vmatprep.subr.bf16.mxu0 0
        %2248 = vmatpush2.bf16.msra.mxu0 0
        %2249 = vmatprep.subr.bf16.mxu0 0
        %2250 = vmatpush2.bf16.msra.mxu0 0
        %2251 = vmatprep.subr.bf16.mxu0 0
        %2252 = vmatpush2.bf16.msra.mxu0 0
        %2253 = vmatprep.subr.bf16.mxu0 0
        %2254 = vmatpush2.bf16.msra.mxu0 0
        %2255 = vmatprep.subr.bf16.mxu0 0
        %2256 = vmatpush2.bf16.msra.mxu0 0
        %2257 = vmatprep.subr.bf16.mxu0 0
        %2258 = vmatpush2.bf16.msra.mxu0 0
        %2259 = vmatprep.subr.bf16.mxu0 0
        %2260 = vmatpush2.bf16.msra.mxu0 0
        %2261 = vmatprep.mubr.bf16.mxu0 0
        %2262 = vmatmul.mubr.bf16.gmra.mxu0 %v2227
        %v2263 = vpop.f32.mrf.mxu0
        %v2264 = vadd.f32 0.0, %v2263
        %v2265 = vpop.f32.mrf.mxu0
        %v2266 = vpop.f32.mrf.mxu0
        %v2267 = vadd.f32 0.0, %v2266
        %v2268 = vpop.f32.mrf.mxu0
        %2269 = vdwg.mxu0
        %v2271 = vsel %vm1777, %v1961, 0
        %2273 = vmatprep.subr.bf16.mxu0 0
        %2274 = vmatpush1.bf16.msra.mxu0 0
        %2275 = vmatprep.subr.bf16.mxu0 0
        %2276 = vmatpush1.bf16.msra.mxu0 0
        %2277 = vmatprep.subr.bf16.mxu0 0
        %2278 = vmatpush1.bf16.msra.mxu0 0
        %2279 = vmatprep.subr.bf16.mxu0 0
        %2280 = vmatpush1.bf16.msra.mxu0 0
        %2281 = vmatprep.subr.bf16.mxu0 0
        %2282 = vmatpush1.bf16.msra.mxu0 0
        %2283 = vmatprep.subr.bf16.mxu0 0
        %2284 = vmatpush1.bf16.msra.mxu0 0
        %2285 = vmatprep.subr.bf16.mxu0 0
        %2286 = vmatpush1.bf16.msra.mxu0 0
        %2287 = vmatprep.subr.bf16.mxu0 0
        %2288 = vmatpush1.bf16.msra.mxu0 %v1400
        %2289 = vmatprep.subr.bf16.mxu0 0
        %2290 = vmatpush2.bf16.msra.mxu0 0
        %2291 = vmatprep.subr.bf16.mxu0 0
        %2292 = vmatpush2.bf16.msra.mxu0 0
        %2293 = vmatprep.subr.bf16.mxu0 0
        %2294 = vmatpush2.bf16.msra.mxu0 0
        %2295 = vmatprep.subr.bf16.mxu0 0
        %2296 = vmatpush2.bf16.msra.mxu0 0
        %2297 = vmatprep.subr.bf16.mxu0 0
        %2298 = vmatpush2.bf16.msra.mxu0 0
        %2299 = vmatprep.subr.bf16.mxu0 0
        %2300 = vmatpush2.bf16.msra.mxu0 0
        %2301 = vmatprep.subr.bf16.mxu0 0
        %2302 = vmatpush2.bf16.msra.mxu0 0
        %2303 = vmatprep.subr.bf16.mxu0 0
        %2304 = vmatpush2.bf16.msra.mxu0 0
        %2305 = vmatprep.mubr.bf16.mxu0 0
        %2306 = vmatmul.mubr.bf16.gmra.mxu0 %v2271
        %v2307 = vpop.f32.mrf.mxu0
        %v2308 = vadd.f32 0.0, %v2307
        %v2309 = vpop.f32.mrf.mxu0
        %v2310 = vpop.f32.mrf.mxu0
        %v2311 = vadd.f32 0.0, %v2310
        %v2312 = vpop.f32.mrf.mxu0
        %2313 = vdwg.mxu0
        %v2314 = vpack.c.bf16 %v2003, %v2000
        %v2315 = vpack.c.bf16 %v2047, %v2044
        %v2316 = vpack.c.bf16 %v2091, %v2088
        %v2317 = vpack.c.bf16 %v2135, %v2132
        %v2318 = vpack.c.bf16 %v2179, %v2176
        %v2319 = vpack.c.bf16 %v2223, %v2220
        %v2320 = vpack.c.bf16 %v2267, %v2264
        %v2321 = vpack.c.bf16 %v2311, %v2308
        %v2322 = vld [vmem:[#allocation14] sm:$0xf]
        %v2323 = vld [vmem:[#allocation14 + $0x4] sm:$0xf]
        %v2324 = vld [vmem:[#allocation14 + $0x8] sm:$0xf]
        %v2325 = vld [vmem:[#allocation14 + $0xc] sm:$0xf]
        %s2326 = scalar_lea.vmem [#allocation14], 16
        %v2327 = vld [vmem:[%s2326] sm:$0xf]
        %v2328 = vld [vmem:[%s2326 + $0x4] sm:$0xf]
        %v2329 = vld [vmem:[%s2326 + $0x8] sm:$0xf]
        %v2330 = vld [vmem:[%s2326 + $0xc] sm:$0xf]
        %v2335 = vunpack.c.l.b16 %v2327
        %v2336 = vunpack.c.l.b16 %v2328
        %v2337 = vunpack.c.l.b16 %v2329
        %v2338 = vunpack.c.l.b16 %v2330
        %v2339 = vpack.c.b16 %v2336, %v2335
        %v2340 = vpack.c.b16 %v2338, %v2337
        %v2344 = vsel %vm885, %v2315, 0
        %v2347 = vsel %vm885, %v2319, 0
        %2349 = vmatprep.subr.bf16.mxu0 0
        %2350 = vmatpush1.bf16.msra.mxu0 0
        %2351 = vmatprep.subr.bf16.mxu0 0
        %2352 = vmatpush1.bf16.msra.mxu0 0
        %2353 = vmatprep.subr.bf16.mxu0 0
        %2354 = vmatpush1.bf16.msra.mxu0 0
        %2355 = vmatprep.subr.bf16.mxu0 0
        %2356 = vmatpush1.bf16.msra.mxu0 0
        %2357 = vmatprep.subr.bf16.mxu0 0
        %2358 = vmatpush1.bf16.msra.mxu0 0
        %2359 = vmatprep.subr.bf16.mxu0 0
        %2360 = vmatpush1.bf16.msra.mxu0 0
        %2361 = vmatprep.subr.bf16.mxu0 0
        %2362 = vmatpush1.bf16.msra.mxu0 %v2340
        %2363 = vmatprep.subr.bf16.mxu0 0
        %2364 = vmatpush1.bf16.msra.mxu0 %v2339
        %2365 = vmatprep.subr.bf16.mxu0 0
        %2366 = vmatpush2.bf16.msra.mxu0 0
        %2367 = vmatprep.subr.bf16.mxu0 0
        %2368 = vmatpush2.bf16.msra.mxu0 0
        %2369 = vmatprep.subr.bf16.mxu0 0
        %2370 = vmatpush2.bf16.msra.mxu0 0
        %2371 = vmatprep.subr.bf16.mxu0 0
        %2372 = vmatpush2.bf16.msra.mxu0 0
        %2373 = vmatprep.subr.bf16.mxu0 0
        %2374 = vmatpush2.bf16.msra.mxu0 0
        %2375 = vmatprep.subr.bf16.mxu0 0
        %2376 = vmatpush2.bf16.msra.mxu0 0
        %2377 = vmatprep.subr.bf16.mxu0 0
        %2378 = vmatpush2.bf16.msra.mxu0 0
        %2379 = vmatprep.subr.bf16.mxu0 0
        %2380 = vmatpush2.bf16.msra.mxu0 0
        %2381 = vmatprep.mubr.bf16.mxu0 0
        %2382 = vmatmul.mubr.bf16.gmra.mxu0 %v2344
        %v2383 = vpop.f32.mrf.mxu0
        %v2384 = vadd.f32 0.0, %v2383
        %v2385 = vpop.f32.mrf.mxu0
        %v2386 = vpop.f32.mrf.mxu0
        %v2387 = vadd.f32 0.0, %v2386
        %v2388 = vpop.f32.mrf.mxu0
        %2389 = vmatprep.mubr.bf16.mxu0 0
        %2390 = vmatmul.mubr.bf16.gmra.mxu0 %v2347
        %v2391 = vpop.f32.mrf.mxu0
        %v2392 = vadd.f32 0.0, %v2391
        %v2393 = vpop.f32.mrf.mxu0
        %v2394 = vpop.f32.mrf.mxu0
        %v2395 = vadd.f32 0.0, %v2394
        %v2396 = vpop.f32.mrf.mxu0
        %2397 = vdwg.mxu0
        %v2402 = vunpack.c.l.b16 %v2322
        %v2403 = vunpack.c.l.b16 %v2323
        %v2404 = vunpack.c.l.b16 %v2324
        %v2405 = vunpack.c.l.b16 %v2325
        %v2406 = vpack.c.b16 %v2403, %v2402
        %v2407 = vpack.c.b16 %v2405, %v2404
        %v2411 = vsel %vm885, %v2314, 0
        %v2414 = vsel %vm885, %v2318, 0
        %2416 = vmatprep.subr.bf16.mxu0 0
        %2417 = vmatpush1.bf16.msra.mxu0 0
        %2418 = vmatprep.subr.bf16.mxu0 0
        %2419 = vmatpush1.bf16.msra.mxu0 0
        %2420 = vmatprep.subr.bf16.mxu0 0
        %2421 = vmatpush1.bf16.msra.mxu0 0
        %2422 = vmatprep.subr.bf16.mxu0 0
        %2423 = vmatpush1.bf16.msra.mxu0 0
        %2424 = vmatprep.subr.bf16.mxu0 0
        %2425 = vmatpush1.bf16.msra.mxu0 0
        %2426 = vmatprep.subr.bf16.mxu0 0
        %2427 = vmatpush1.bf16.msra.mxu0 0
        %2428 = vmatprep.subr.bf16.mxu0 0
        %2429 = vmatpush1.bf16.msra.mxu0 %v2407
        %2430 = vmatprep.subr.bf16.mxu0 0
        %2431 = vmatpush1.bf16.msra.mxu0 %v2406
        %2432 = vmatprep.subr.bf16.mxu0 0
        %2433 = vmatpush2.bf16.msra.mxu0 0
        %2434 = vmatprep.subr.bf16.mxu0 0
        %2435 = vmatpush2.bf16.msra.mxu0 0
        %2436 = vmatprep.subr.bf16.mxu0 0
        %2437 = vmatpush2.bf16.msra.mxu0 0
        %2438 = vmatprep.subr.bf16.mxu0 0
        %2439 = vmatpush2.bf16.msra.mxu0 0
        %2440 = vmatprep.subr.bf16.mxu0 0
        %2441 = vmatpush2.bf16.msra.mxu0 0
        %2442 = vmatprep.subr.bf16.mxu0 0
        %2443 = vmatpush2.bf16.msra.mxu0 0
        %2444 = vmatprep.subr.bf16.mxu0 0
        %2445 = vmatpush2.bf16.msra.mxu0 0
        %2446 = vmatprep.subr.bf16.mxu0 0
        %2447 = vmatpush2.bf16.msra.mxu0 0
        %2448 = vmatprep.mubr.bf16.mxu0 0
        %2449 = vmatmul.mubr.bf16.gmra.mxu0 %v2411
        %v2450 = vpop.f32.mrf.mxu0
        %v2451 = vadd.f32 %v2384, %v2450
        %v2452 = vpop.f32.mrf.mxu0
        %v2453 = vpop.f32.mrf.mxu0
        %v2454 = vadd.f32 %v2387, %v2453
        %v2455 = vpop.f32.mrf.mxu0
        %2456 = vmatprep.mubr.bf16.mxu0 0
        %2457 = vmatmul.mubr.bf16.gmra.mxu0 %v2414
        %v2458 = vpop.f32.mrf.mxu0
        %v2459 = vadd.f32 %v2392, %v2458
        %v2460 = vpop.f32.mrf.mxu0
        %v2461 = vpop.f32.mrf.mxu0
        %v2462 = vadd.f32 %v2395, %v2461
        %v2463 = vpop.f32.mrf.mxu0
        %2464 = vdwg.mxu0
        %s2465 = scalar_lea.vmem [#allocation14], 32
        %v2466 = vld [vmem:[%s2465] sm:$0xf]
        %v2467 = vld [vmem:[%s2465 + $0x4] sm:$0xf]
        %v2468 = vld [vmem:[%s2465 + $0x8] sm:$0xf]
        %v2469 = vld [vmem:[%s2465 + $0xc] sm:$0xf]
        %v2474 = vunpack.c.l.b16 %v2466
        %v2475 = vunpack.c.l.b16 %v2467
        %v2476 = vunpack.c.l.b16 %v2468
        %v2477 = vunpack.c.l.b16 %v2469
        %v2478 = vpack.c.b16 %v2475, %v2474
        %v2479 = vpack.c.b16 %v2477, %v2476
        %v2483 = vsel %vm885, %v2316, 0
        %v2486 = vsel %vm885, %v2320, 0
        %2488 = vmatprep.subr.bf16.mxu0 0
        %2489 = vmatpush1.bf16.msra.mxu0 0
        %2490 = vmatprep.subr.bf16.mxu0 0
        %2491 = vmatpush1.bf16.msra.mxu0 0
        %2492 = vmatprep.subr.bf16.mxu0 0
        %2493 = vmatpush1.bf16.msra.mxu0 0
        %2494 = vmatprep.subr.bf16.mxu0 0
        %2495 = vmatpush1.bf16.msra.mxu0 0
        %2496 = vmatprep.subr.bf16.mxu0 0
        %2497 = vmatpush1.bf16.msra.mxu0 0
        %2498 = vmatprep.subr.bf16.mxu0 0
        %2499 = vmatpush1.bf16.msra.mxu0 0
        %2500 = vmatprep.subr.bf16.mxu0 0
        %2501 = vmatpush1.bf16.msra.mxu0 %v2479
        %2502 = vmatprep.subr.bf16.mxu0 0
        %2503 = vmatpush1.bf16.msra.mxu0 %v2478
        %2504 = vmatprep.subr.bf16.mxu0 0
        %2505 = vmatpush2.bf16.msra.mxu0 0
        %2506 = vmatprep.subr.bf16.mxu0 0
        %2507 = vmatpush2.bf16.msra.mxu0 0
        %2508 = vmatprep.subr.bf16.mxu0 0
        %2509 = vmatpush2.bf16.msra.mxu0 0
        %2510 = vmatprep.subr.bf16.mxu0 0
        %2511 = vmatpush2.bf16.msra.mxu0 0
        %2512 = vmatprep.subr.bf16.mxu0 0
        %2513 = vmatpush2.bf16.msra.mxu0 0
        %2514 = vmatprep.subr.bf16.mxu0 0
        %2515 = vmatpush2.bf16.msra.mxu0 0
        %2516 = vmatprep.subr.bf16.mxu0 0
        %2517 = vmatpush2.bf16.msra.mxu0 0
        %2518 = vmatprep.subr.bf16.mxu0 0
        %2519 = vmatpush2.bf16.msra.mxu0 0
        %2520 = vmatprep.mubr.bf16.mxu0 0
        %2521 = vmatmul.mubr.bf16.gmra.mxu0 %v2483
        %v2522 = vpop.f32.mrf.mxu0
        %v2523 = vadd.f32 0.0, %v2522
        %v2524 = vpop.f32.mrf.mxu0
        %v2525 = vpop.f32.mrf.mxu0
        %v2526 = vadd.f32 0.0, %v2525
        %v2527 = vpop.f32.mrf.mxu0
        %2528 = vmatprep.mubr.bf16.mxu0 0
        %2529 = vmatmul.mubr.bf16.gmra.mxu0 %v2486
        %v2530 = vpop.f32.mrf.mxu0
        %v2531 = vadd.f32 0.0, %v2530
        %v2532 = vpop.f32.mrf.mxu0
        %v2533 = vpop.f32.mrf.mxu0
        %v2534 = vadd.f32 0.0, %v2533
        %v2535 = vpop.f32.mrf.mxu0
        %2536 = vdwg.mxu0
        %v2537 = vadd.f32 %v2451, %v2523
        %v2538 = vadd.f32 %v2454, %v2526
        %v2539 = vadd.f32 %v2459, %v2531
        %v2540 = vadd.f32 %v2462, %v2534
        %s2541 = scalar_lea.vmem [#allocation14], 48
        %v2542 = vld [vmem:[%s2541] sm:$0xf]
        %v2543 = vld [vmem:[%s2541 + $0x4] sm:$0xf]
        %v2544 = vld [vmem:[%s2541 + $0x8] sm:$0xf]
        %v2545 = vld [vmem:[%s2541 + $0xc] sm:$0xf]
        %v2550 = vunpack.c.l.b16 %v2542
        %v2551 = vunpack.c.l.b16 %v2543
        %v2552 = vunpack.c.l.b16 %v2544
        %v2553 = vunpack.c.l.b16 %v2545
        %v2554 = vpack.c.b16 %v2551, %v2550
        %v2555 = vpack.c.b16 %v2553, %v2552
        %v2559 = vsel %vm885, %v2317, 0
        %v2562 = vsel %vm885, %v2321, 0
        %2564 = vmatprep.subr.bf16.mxu0 0
        %2565 = vmatpush1.bf16.msra.mxu0 0
        %2566 = vmatprep.subr.bf16.mxu0 0
        %2567 = vmatpush1.bf16.msra.mxu0 0
        %2568 = vmatprep.subr.bf16.mxu0 0
        %2569 = vmatpush1.bf16.msra.mxu0 0
        %2570 = vmatprep.subr.bf16.mxu0 0
        %2571 = vmatpush1.bf16.msra.mxu0 0
        %2572 = vmatprep.subr.bf16.mxu0 0
        %2573 = vmatpush1.bf16.msra.mxu0 0
        %2574 = vmatprep.subr.bf16.mxu0 0
        %2575 = vmatpush1.bf16.msra.mxu0 0
        %2576 = vmatprep.subr.bf16.mxu0 0
        %2577 = vmatpush1.bf16.msra.mxu0 %v2555
        %2578 = vmatprep.subr.bf16.mxu0 0
        %2579 = vmatpush1.bf16.msra.mxu0 %v2554
        %2580 = vmatprep.subr.bf16.mxu0 0
        %2581 = vmatpush2.bf16.msra.mxu0 0
        %2582 = vmatprep.subr.bf16.mxu0 0
        %2583 = vmatpush2.bf16.msra.mxu0 0
        %2584 = vmatprep.subr.bf16.mxu0 0
        %2585 = vmatpush2.bf16.msra.mxu0 0
        %2586 = vmatprep.subr.bf16.mxu0 0
        %2587 = vmatpush2.bf16.msra.mxu0 0
        %2588 = vmatprep.subr.bf16.mxu0 0
        %2589 = vmatpush2.bf16.msra.mxu0 0
        %2590 = vmatprep.subr.bf16.mxu0 0
        %2591 = vmatpush2.bf16.msra.mxu0 0
        %2592 = vmatprep.subr.bf16.mxu0 0
        %2593 = vmatpush2.bf16.msra.mxu0 0
        %2594 = vmatprep.subr.bf16.mxu0 0
        %2595 = vmatpush2.bf16.msra.mxu0 0
        %2596 = vmatprep.mubr.bf16.mxu0 0
        %2597 = vmatmul.mubr.bf16.gmra.mxu0 %v2559
        %v2598 = vpop.f32.mrf.mxu0
        %v2599 = vadd.f32 0.0, %v2598
        %v2600 = vpop.f32.mrf.mxu0
        %v2601 = vpop.f32.mrf.mxu0
        %v2602 = vadd.f32 0.0, %v2601
        %v2603 = vpop.f32.mrf.mxu0
        %2604 = vmatprep.mubr.bf16.mxu0 0
        %2605 = vmatmul.mubr.bf16.gmra.mxu0 %v2562
        %v2606 = vpop.f32.mrf.mxu0
        %v2607 = vadd.f32 0.0, %v2606
        %v2608 = vpop.f32.mrf.mxu0
        %v2609 = vpop.f32.mrf.mxu0
        %v2610 = vadd.f32 0.0, %v2609
        %v2611 = vpop.f32.mrf.mxu0
        %2612 = vdwg.mxu0
        %v2613 = vadd.f32 %v2537, %v2599
        %v2614 = vadd.f32 %v2538, %v2602
        %v2615 = vadd.f32 %v2539, %v2607
        %v2616 = vadd.f32 %v2540, %v2610
        %v2617 = vld [vmem:[%s8] sm:$0x1]
        %v2619 = vlaneseq
        %v2620 = vshrl.u32 %v2619, 7
        %v2621 = vsub.s32 0, %v2620
        %v2622 = vrot.slane %v2617, %v2621
        %v2624 = vadd.f32 %v2613, %v2622
        %v2625 = vadd.f32 %v2614, %v2622
        %v2626 = vadd.f32 %v2615, %v2622
        %v2627 = vadd.f32 %v2616, %v2622
        %v2628 = vld [vmem:[%s685] sm:$0xff]
        %v2629 = vld [vmem:[%s685 + $0x8] sm:$0xff]
        %v2630 = vld [vmem:[%s685 + $0x10] sm:$0xff]
        %v2631 = vld [vmem:[%s685 + $0x18] sm:$0xff]
        %v2632 = vadd.f32 %v2624, %v2628
        %v2633 = vadd.f32 %v2625, %v2629
        %v2634 = vadd.f32 %v2626, %v2630
        %v2635 = vadd.f32 %v2627, %v2631
        %2636 = vadd.xlane.f32.xlu0 %v2632
        %v2637 = vpop.xlane.xlu0 %2636
        %2638 = vadd.xlane.f32.xlu0 %v2633
        %v2639 = vpop.xlane.xlu0 %2638
        %2640 = vadd.xlane.f32.xlu0 %v2634
        %v2641 = vpop.xlane.xlu0 %2640
        %2642 = vadd.xlane.f32.xlu0 %v2635
        %v2643 = vpop.xlane.xlu0 %2642
        %v2644 = vrcp.pop 128.0
        %v2645 = vmul.f32 %v2637, %v2644
        %v2646 = vmul.f32 %v2639, %v2644
        %v2647 = vmul.f32 %v2641, %v2644
        %v2648 = vmul.f32 %v2643, %v2644
        %v2649 = vsub.f32 %v2632, %v2645
        %v2650 = vsub.f32 %v2633, %v2646
        %v2651 = vsub.f32 %v2634, %v2647
        %v2652 = vsub.f32 %v2635, %v2648
        %v2653 = vmul.f32 %v2649, %v2649
        %v2654 = vmul.f32 %v2650, %v2650
        %v2655 = vmul.f32 %v2651, %v2651
        %v2656 = vmul.f32 %v2652, %v2652
        %2657 = vadd.xlane.f32.xlu0 %v2653
        %v2658 = vpop.xlane.xlu0 %2657
        %2659 = vadd.xlane.f32.xlu0 %v2654
        %v2660 = vpop.xlane.xlu0 %2659
        %2661 = vadd.xlane.f32.xlu0 %v2655
        %v2662 = vpop.xlane.xlu0 %2661
        %2663 = vadd.xlane.f32.xlu0 %v2656
        %v2664 = vpop.xlane.xlu0 %2663
        %v2665 = vmul.f32 %v2658, %v2644
        %v2666 = vmul.f32 %v2660, %v2644
        %v2667 = vmul.f32 %v2662, %v2644
        %v2668 = vmul.f32 %v2664, %v2644
        %v2669 = vadd.f32 %v2665, 1e-05
        %v2670 = vadd.f32 %v2666, 1e-05
        %v2671 = vadd.f32 %v2667, 1e-05
        %v2672 = vadd.f32 %v2668, 1e-05
        %v2673 = vrsqrt.pop %v2669
        %v2674 = vrsqrt.pop %v2670
        %v2675 = vrsqrt.pop %v2671
        %v2676 = vrsqrt.pop %v2672
        %v2677 = vmul.f32 %v2649, %v2673
        %v2678 = vmul.f32 %v2650, %v2674
        %v2679 = vmul.f32 %v2651, %v2675
        %v2680 = vmul.f32 %v2652, %v2676
        %v2681 = vld [vmem:[%s9] sm:$0x1]
        %v2683 = vlaneseq
        %v2684 = vshrl.u32 %v2683, 7
        %v2685 = vsub.s32 0, %v2684
        %v2686 = vrot.slane %v2681, %v2685
        %v2688 = vmul.f32 %v2677, %v2686
        %v2689 = vmul.f32 %v2678, %v2686
        %v2690 = vmul.f32 %v2679, %v2686
        %v2691 = vmul.f32 %v2680, %v2686
        %v2692 = vld [vmem:[%s10] sm:$0x1]
        %v2694 = vlaneseq
        %v2695 = vshrl.u32 %v2694, 7
        %v2696 = vsub.s32 0, %v2695
        %v2697 = vrot.slane %v2692, %v2696
        %v2699 = vadd.f32 %v2688, %v2697
        %v2700 = vadd.f32 %v2689, %v2697
        %v2701 = vadd.f32 %v2690, %v2697
        %v2702 = vadd.f32 %v2691, %v2697
        %v2703 = vpack.c.bf16 %v2700, %v2699
        %v2704 = vpack.c.bf16 %v2702, %v2701
        %v2705 = vld [vmem:[#allocation16] sm:$0xff]
        %v2706 = vld [vmem:[#allocation16 + $0x8] sm:$0xff]
        %v2707 = vld [vmem:[#allocation16 + $0x10] sm:$0xff]
        %v2708 = vld [vmem:[#allocation16 + $0x18] sm:$0xff]
        %v2709 = vld [vmem:[#allocation16 + $0x20] sm:$0xff]
        %v2710 = vld [vmem:[#allocation16 + $0x28] sm:$0xff]
        %v2711 = vld [vmem:[#allocation16 + $0x30] sm:$0xff]
        %v2712 = vld [vmem:[#allocation16 + $0x38] sm:$0xff]
        %v2713 = vld [vmem:[#allocation16 + $0x40] sm:$0xff]
        %v2714 = vld [vmem:[#allocation16 + $0x48] sm:$0xff]
        %v2715 = vld [vmem:[#allocation16 + $0x50] sm:$0xff]
        %v2716 = vld [vmem:[#allocation16 + $0x58] sm:$0xff]
        %v2717 = vld [vmem:[#allocation16 + $0x60] sm:$0xff]
        %v2718 = vld [vmem:[#allocation16 + $0x68] sm:$0xff]
        %v2719 = vld [vmem:[#allocation16 + $0x70] sm:$0xff]
        %v2720 = vld [vmem:[#allocation16 + $0x78] sm:$0xff]
        %v2721 = vld [vmem:[#allocation16 + $0x80] sm:$0xff]
        %v2722 = vld [vmem:[#allocation16 + $0x88] sm:$0xff]
        %v2723 = vld [vmem:[#allocation16 + $0x90] sm:$0xff]
        %v2724 = vld [vmem:[#allocation16 + $0x98] sm:$0xff]
        %v2725 = vld [vmem:[#allocation16 + $0xa0] sm:$0xff]
        %v2726 = vld [vmem:[#allocation16 + $0xa8] sm:$0xff]
        %v2727 = vld [vmem:[#allocation16 + $0xb0] sm:$0xff]
        %v2728 = vld [vmem:[#allocation16 + $0xb8] sm:$0xff]
        %v2729 = vld [vmem:[#allocation16 + $0xc0] sm:$0xff]
        %v2730 = vld [vmem:[#allocation16 + $0xc8] sm:$0xff]
        %v2731 = vld [vmem:[#allocation16 + $0xd0] sm:$0xff]
        %v2732 = vld [vmem:[#allocation16 + $0xd8] sm:$0xff]
        %v2733 = vld [vmem:[#allocation16 + $0xe0] sm:$0xff]
        %v2734 = vld [vmem:[#allocation16 + $0xe8] sm:$0xff]
        %v2735 = vld [vmem:[#allocation16 + $0xf0] sm:$0xff]
        %v2736 = vld [vmem:[#allocation16 + $0xf8] sm:$0xff]
        %v2737 = vld [vmem:[%s12] sm:$0xf]
        %v2739 = vlaneseq
        %v2740 = vshrl.u32 %v2739, 7
        %v2741 = vsub.s32 0, %v2740
        %v2742 = vrot.slane %v2737, %v2741
        %v2743 = vlaneseq
        %v2744 = vshrl.u32 %v2743, 7
        %v2745 = vsub.s32 1, %v2744
        %v2746 = vrot.slane %v2737, %v2745
        %v2747 = vlaneseq
        %v2748 = vshrl.u32 %v2747, 7
        %v2749 = vsub.s32 2, %v2748
        %v2750 = vrot.slane %v2737, %v2749
        %v2751 = vlaneseq
        %v2752 = vshrl.u32 %v2751, 7
        %v2753 = vsub.s32 3, %v2752
        %v2754 = vrot.slane %v2737, %v2753
        %v2791 = vunpack.c.l.b16 %v2705
        %v2792 = vunpack.c.h.b16 %v2705
        %v2793 = vunpack.c.l.b16 %v2706
        %v2794 = vunpack.c.h.b16 %v2706
        %v2795 = vunpack.c.l.b16 %v2707
        %v2796 = vunpack.c.h.b16 %v2707
        %v2797 = vunpack.c.l.b16 %v2708
        %v2798 = vunpack.c.h.b16 %v2708
        %v2799 = vunpack.c.l.b16 %v2709
        %v2800 = vunpack.c.h.b16 %v2709
        %v2801 = vunpack.c.l.b16 %v2710
        %v2802 = vunpack.c.h.b16 %v2710
        %v2803 = vunpack.c.l.b16 %v2711
        %v2804 = vunpack.c.h.b16 %v2711
        %v2805 = vunpack.c.l.b16 %v2712
        %v2806 = vunpack.c.h.b16 %v2712
        %v2807 = vunpack.c.l.b16 %v2713
        %v2808 = vunpack.c.h.b16 %v2713
        %v2809 = vunpack.c.l.b16 %v2714
        %v2810 = vunpack.c.h.b16 %v2714
        %v2811 = vunpack.c.l.b16 %v2715
        %v2812 = vunpack.c.h.b16 %v2715
        %v2813 = vunpack.c.l.b16 %v2716
        %v2814 = vunpack.c.h.b16 %v2716
        %v2815 = vunpack.c.l.b16 %v2717
        %v2816 = vunpack.c.h.b16 %v2717
        %v2817 = vunpack.c.l.b16 %v2718
        %v2818 = vunpack.c.h.b16 %v2718
        %v2819 = vunpack.c.l.b16 %v2719
        %v2820 = vunpack.c.h.b16 %v2719
        %v2821 = vunpack.c.l.b16 %v2720
        %v2822 = vunpack.c.h.b16 %v2720
        %v2823 = vunpack.c.l.b16 %v2721
        %v2824 = vunpack.c.h.b16 %v2721
        %v2825 = vunpack.c.l.b16 %v2722
        %v2826 = vunpack.c.h.b16 %v2722
        %v2827 = vunpack.c.l.b16 %v2723
        %v2828 = vunpack.c.h.b16 %v2723
        %v2829 = vunpack.c.l.b16 %v2724
        %v2830 = vunpack.c.h.b16 %v2724
        %v2831 = vunpack.c.l.b16 %v2725
        %v2832 = vunpack.c.h.b16 %v2725
        %v2833 = vunpack.c.l.b16 %v2726
        %v2834 = vunpack.c.h.b16 %v2726
        %v2835 = vunpack.c.l.b16 %v2727
        %v2836 = vunpack.c.h.b16 %v2727
        %v2837 = vunpack.c.l.b16 %v2728
        %v2838 = vunpack.c.h.b16 %v2728
        %v2839 = vunpack.c.l.b16 %v2729
        %v2840 = vunpack.c.h.b16 %v2729
        %v2841 = vunpack.c.l.b16 %v2730
        %v2842 = vunpack.c.h.b16 %v2730
        %v2843 = vunpack.c.l.b16 %v2731
        %v2844 = vunpack.c.h.b16 %v2731
        %v2845 = vunpack.c.l.b16 %v2732
        %v2846 = vunpack.c.h.b16 %v2732
        %v2847 = vunpack.c.l.b16 %v2733
        %v2848 = vunpack.c.h.b16 %v2733
        %v2849 = vunpack.c.l.b16 %v2734
        %v2850 = vunpack.c.h.b16 %v2734
        %v2851 = vunpack.c.l.b16 %v2735
        %v2852 = vunpack.c.h.b16 %v2735
        %v2853 = vunpack.c.l.b16 %v2736
        %v2854 = vunpack.c.h.b16 %v2736
        %v2855 = vpack.c.b16 %v2795, %v2791
        %v2856 = vpack.c.b16 %v2796, %v2792
        %v2857 = vpack.c.b16 %v2797, %v2793
        %v2858 = vpack.c.b16 %v2798, %v2794
        %v2859 = vpack.c.b16 %v2803, %v2799
        %v2860 = vpack.c.b16 %v2804, %v2800
        %v2861 = vpack.c.b16 %v2805, %v2801
        %v2862 = vpack.c.b16 %v2806, %v2802
        %v2863 = vpack.c.b16 %v2811, %v2807
        %v2864 = vpack.c.b16 %v2812, %v2808
        %v2865 = vpack.c.b16 %v2813, %v2809
        %v2866 = vpack.c.b16 %v2814, %v2810
        %v2867 = vpack.c.b16 %v2819, %v2815
        %v2868 = vpack.c.b16 %v2820, %v2816
        %v2869 = vpack.c.b16 %v2821, %v2817
        %v2870 = vpack.c.b16 %v2822, %v2818
        %v2871 = vpack.c.b16 %v2827, %v2823
        %v2872 = vpack.c.b16 %v2828, %v2824
        %v2873 = vpack.c.b16 %v2829, %v2825
        %v2874 = vpack.c.b16 %v2830, %v2826
        %v2875 = vpack.c.b16 %v2835, %v2831
        %v2876 = vpack.c.b16 %v2836, %v2832
        %v2877 = vpack.c.b16 %v2837, %v2833
        %v2878 = vpack.c.b16 %v2838, %v2834
        %v2879 = vpack.c.b16 %v2843, %v2839
        %v2880 = vpack.c.b16 %v2844, %v2840
        %v2881 = vpack.c.b16 %v2845, %v2841
        %v2882 = vpack.c.b16 %v2846, %v2842
        %v2883 = vpack.c.b16 %v2851, %v2847
        %v2884 = vpack.c.b16 %v2852, %v2848
        %v2885 = vpack.c.b16 %v2853, %v2849
        %v2886 = vpack.c.b16 %v2854, %v2850
        %2919 = vmatprep.subr.bf16.mxu0 %v2884
        %2920 = vmatpush1.bf16.msra.mxu0 %v2883
        %2921 = vmatprep.subr.bf16.mxu0 %v2880
        %2922 = vmatpush1.bf16.msra.mxu0 %v2879
        %2923 = vmatprep.subr.bf16.mxu0 %v2876
        %2924 = vmatpush1.bf16.msra.mxu0 %v2875
        %2925 = vmatprep.subr.bf16.mxu0 %v2872
        %2926 = vmatpush1.bf16.msra.mxu0 %v2871
        %2927 = vmatprep.subr.bf16.mxu0 %v2868
        %2928 = vmatpush1.bf16.msra.mxu0 %v2867
        %2929 = vmatprep.subr.bf16.mxu0 %v2864
        %2930 = vmatpush1.bf16.msra.mxu0 %v2863
        %2931 = vmatprep.subr.bf16.mxu0 %v2860
        %2932 = vmatpush1.bf16.msra.mxu0 %v2859
        %2933 = vmatprep.subr.bf16.mxu0 %v2856
        %2934 = vmatpush1.bf16.msra.mxu0 %v2855
        %2935 = vmatprep.subr.bf16.mxu0 0
        %2936 = vmatpush2.bf16.msra.mxu0 0
        %2937 = vmatprep.subr.bf16.mxu0 0
        %2938 = vmatpush2.bf16.msra.mxu0 0
        %2939 = vmatprep.subr.bf16.mxu0 0
        %2940 = vmatpush2.bf16.msra.mxu0 0
        %2941 = vmatprep.subr.bf16.mxu0 0
        %2942 = vmatpush2.bf16.msra.mxu0 0
        %2943 = vmatprep.subr.bf16.mxu0 0
        %2944 = vmatpush2.bf16.msra.mxu0 0
        %2945 = vmatprep.subr.bf16.mxu0 0
        %2946 = vmatpush2.bf16.msra.mxu0 0
        %2947 = vmatprep.subr.bf16.mxu0 0
        %2948 = vmatpush2.bf16.msra.mxu0 0
        %2949 = vmatprep.subr.bf16.mxu0 0
        %2950 = vmatpush2.bf16.msra.mxu0 0
        %2951 = vmatprep.mubr.bf16.mxu0 0
        %2952 = vmatmul.mubr.bf16.gmra.mxu0 %v2703
        %v2953 = vpop.f32.mrf.mxu0
        %v2954 = vadd.f32 %v2742, %v2953
        %v2955 = vpop.f32.mrf.mxu0
        %v2956 = vadd.f32 %v2746, %v2955
        %v2957 = vpop.f32.mrf.mxu0
        %v2958 = vadd.f32 %v2742, %v2957
        %v2959 = vpop.f32.mrf.mxu0
        %v2960 = vadd.f32 %v2746, %v2959
        %2961 = vmatprep.mubr.bf16.mxu0 0
        %2962 = vmatmul.mubr.bf16.gmra.mxu0 %v2704
        %v2963 = vpop.f32.mrf.mxu0
        %v2964 = vadd.f32 %v2742, %v2963
        %v2965 = vpop.f32.mrf.mxu0
        %v2966 = vadd.f32 %v2746, %v2965
        %v2967 = vpop.f32.mrf.mxu0
        %v2968 = vadd.f32 %v2742, %v2967
        %v2969 = vpop.f32.mrf.mxu0
        %v2970 = vadd.f32 %v2746, %v2969
        %2971 = vdwg.mxu0
        %2972 = vmatprep.subr.bf16.mxu0 %v2886
        %2973 = vmatpush1.bf16.msra.mxu0 %v2885
        %2974 = vmatprep.subr.bf16.mxu0 %v2882
        %2975 = vmatpush1.bf16.msra.mxu0 %v2881
        %2976 = vmatprep.subr.bf16.mxu0 %v2878
        %2977 = vmatpush1.bf16.msra.mxu0 %v2877
        %2978 = vmatprep.subr.bf16.mxu0 %v2874
        %2979 = vmatpush1.bf16.msra.mxu0 %v2873
        %2980 = vmatprep.subr.bf16.mxu0 %v2870
        %2981 = vmatpush1.bf16.msra.mxu0 %v2869
        %2982 = vmatprep.subr.bf16.mxu0 %v2866
        %2983 = vmatpush1.bf16.msra.mxu0 %v2865
        %2984 = vmatprep.subr.bf16.mxu0 %v2862
        %2985 = vmatpush1.bf16.msra.mxu0 %v2861
        %2986 = vmatprep.subr.bf16.mxu0 %v2858
        %2987 = vmatpush1.bf16.msra.mxu0 %v2857
        %2988 = vmatprep.subr.bf16.mxu0 0
        %2989 = vmatpush2.bf16.msra.mxu0 0
        %2990 = vmatprep.subr.bf16.mxu0 0
        %2991 = vmatpush2.bf16.msra.mxu0 0
        %2992 = vmatprep.subr.bf16.mxu0 0
        %2993 = vmatpush2.bf16.msra.mxu0 0
        %2994 = vmatprep.subr.bf16.mxu0 0
        %2995 = vmatpush2.bf16.msra.mxu0 0
        %2996 = vmatprep.subr.bf16.mxu0 0
        %2997 = vmatpush2.bf16.msra.mxu0 0
        %2998 = vmatprep.subr.bf16.mxu0 0
        %2999 = vmatpush2.bf16.msra.mxu0 0
        %3000 = vmatprep.subr.bf16.mxu0 0
        %3001 = vmatpush2.bf16.msra.mxu0 0
        %3002 = vmatprep.subr.bf16.mxu0 0
        %3003 = vmatpush2.bf16.msra.mxu0 0
        %3004 = vmatprep.mubr.bf16.mxu0 0
        %3005 = vmatmul.mubr.bf16.gmra.mxu0 %v2703
        %v3006 = vpop.f32.mrf.mxu0
        %v3007 = vadd.f32 %v2750, %v3006
        %v3008 = vpop.f32.mrf.mxu0
        %v3009 = vadd.f32 %v2754, %v3008
        %v3010 = vpop.f32.mrf.mxu0
        %v3011 = vadd.f32 %v2750, %v3010
        %v3012 = vpop.f32.mrf.mxu0
        %v3013 = vadd.f32 %v2754, %v3012
        %3014 = vmatprep.mubr.bf16.mxu0 0
        %3015 = vmatmul.mubr.bf16.gmra.mxu0 %v2704
        %v3016 = vpop.f32.mrf.mxu0
        %v3017 = vadd.f32 %v2750, %v3016
        %v3018 = vpop.f32.mrf.mxu0
        %v3019 = vadd.f32 %v2754, %v3018
        %v3020 = vpop.f32.mrf.mxu0
        %v3021 = vadd.f32 %v2750, %v3020
        %v3022 = vpop.f32.mrf.mxu0
        %v3023 = vadd.f32 %v2754, %v3022
        %3024 = vdwg.mxu0
        %v3025 = vmax.f32 %v2954, 0.0
        %v3026 = vmax.f32 %v2956, 0.0
        %v3027 = vmax.f32 %v3007, 0.0
        %v3028 = vmax.f32 %v3009, 0.0
        %v3029 = vmax.f32 %v2958, 0.0
        %v3030 = vmax.f32 %v2960, 0.0
        %v3031 = vmax.f32 %v3011, 0.0
        %v3032 = vmax.f32 %v3013, 0.0
        %v3033 = vmax.f32 %v2964, 0.0
        %v3034 = vmax.f32 %v2966, 0.0
        %v3035 = vmax.f32 %v3017, 0.0
        %v3036 = vmax.f32 %v3019, 0.0
        %v3037 = vmax.f32 %v2968, 0.0
        %v3038 = vmax.f32 %v2970, 0.0
        %v3039 = vmax.f32 %v3021, 0.0
        %v3040 = vmax.f32 %v3023, 0.0
        %v3041 = vpack.c.bf16 %v3029, %v3025
        %v3042 = vpack.c.bf16 %v3030, %v3026
        %v3043 = vpack.c.bf16 %v3031, %v3027
        %v3044 = vpack.c.bf16 %v3032, %v3028
        %v3045 = vpack.c.bf16 %v3037, %v3033
        %v3046 = vpack.c.bf16 %v3038, %v3034
        %v3047 = vpack.c.bf16 %v3039, %v3035
        %v3048 = vpack.c.bf16 %v3040, %v3036
        %v3049 = vld [vmem:[#allocation17] sm:$0xf]
        %v3050 = vld [vmem:[#allocation17 + $0x4] sm:$0xf]
        %v3051 = vld [vmem:[#allocation17 + $0x8] sm:$0xf]
        %v3052 = vld [vmem:[#allocation17 + $0xc] sm:$0xf]
        %v3053 = vld [vmem:[#allocation17 + $0x10] sm:$0xf]
        %v3054 = vld [vmem:[#allocation17 + $0x14] sm:$0xf]
        %v3055 = vld [vmem:[#allocation17 + $0x18] sm:$0xf]
        %v3056 = vld [vmem:[#allocation17 + $0x1c] sm:$0xf]
        %v3057 = vld [vmem:[#allocation17 + $0x20] sm:$0xf]
        %v3058 = vld [vmem:[#allocation17 + $0x24] sm:$0xf]
        %v3059 = vld [vmem:[#allocation17 + $0x28] sm:$0xf]
        %v3060 = vld [vmem:[#allocation17 + $0x2c] sm:$0xf]
        %v3061 = vld [vmem:[#allocation17 + $0x30] sm:$0xf]
        %v3062 = vld [vmem:[#allocation17 + $0x34] sm:$0xf]
        %v3063 = vld [vmem:[#allocation17 + $0x38] sm:$0xf]
        %v3064 = vld [vmem:[#allocation17 + $0x3c] sm:$0xf]
        %v3065 = vld [vmem:[#allocation17 + $0x40] sm:$0xf]
        %v3066 = vld [vmem:[#allocation17 + $0x44] sm:$0xf]
        %v3067 = vld [vmem:[#allocation17 + $0x48] sm:$0xf]
        %v3068 = vld [vmem:[#allocation17 + $0x4c] sm:$0xf]
        %v3069 = vld [vmem:[#allocation17 + $0x50] sm:$0xf]
        %v3070 = vld [vmem:[#allocation17 + $0x54] sm:$0xf]
        %v3071 = vld [vmem:[#allocation17 + $0x58] sm:$0xf]
        %v3072 = vld [vmem:[#allocation17 + $0x5c] sm:$0xf]
        %v3073 = vld [vmem:[#allocation17 + $0x60] sm:$0xf]
        %v3074 = vld [vmem:[#allocation17 + $0x64] sm:$0xf]
        %v3075 = vld [vmem:[#allocation17 + $0x68] sm:$0xf]
        %v3076 = vld [vmem:[#allocation17 + $0x6c] sm:$0xf]
        %v3077 = vld [vmem:[#allocation17 + $0x70] sm:$0xf]
        %v3078 = vld [vmem:[#allocation17 + $0x74] sm:$0xf]
        %v3079 = vld [vmem:[#allocation17 + $0x78] sm:$0xf]
        %v3080 = vld [vmem:[#allocation17 + $0x7c] sm:$0xf]
        %v3081 = vld [vmem:[#allocation17 + $0x80] sm:$0xf]
        %v3082 = vld [vmem:[#allocation17 + $0x84] sm:$0xf]
        %v3083 = vld [vmem:[#allocation17 + $0x88] sm:$0xf]
        %v3084 = vld [vmem:[#allocation17 + $0x8c] sm:$0xf]
        %v3085 = vld [vmem:[#allocation17 + $0x90] sm:$0xf]
        %v3086 = vld [vmem:[#allocation17 + $0x94] sm:$0xf]
        %v3087 = vld [vmem:[#allocation17 + $0x98] sm:$0xf]
        %v3088 = vld [vmem:[#allocation17 + $0x9c] sm:$0xf]
        %v3089 = vld [vmem:[#allocation17 + $0xa0] sm:$0xf]
        %v3090 = vld [vmem:[#allocation17 + $0xa4] sm:$0xf]
        %v3091 = vld [vmem:[#allocation17 + $0xa8] sm:$0xf]
        %v3092 = vld [vmem:[#allocation17 + $0xac] sm:$0xf]
        %v3093 = vld [vmem:[#allocation17 + $0xb0] sm:$0xf]
        %v3094 = vld [vmem:[#allocation17 + $0xb4] sm:$0xf]
        %v3095 = vld [vmem:[#allocation17 + $0xb8] sm:$0xf]
        %v3096 = vld [vmem:[#allocation17 + $0xbc] sm:$0xf]
        %v3097 = vld [vmem:[#allocation17 + $0xc0] sm:$0xf]
        %v3098 = vld [vmem:[#allocation17 + $0xc4] sm:$0xf]
        %v3099 = vld [vmem:[#allocation17 + $0xc8] sm:$0xf]
        %v3100 = vld [vmem:[#allocation17 + $0xcc] sm:$0xf]
        %v3101 = vld [vmem:[#allocation17 + $0xd0] sm:$0xf]
        %v3102 = vld [vmem:[#allocation17 + $0xd4] sm:$0xf]
        %v3103 = vld [vmem:[#allocation17 + $0xd8] sm:$0xf]
        %v3104 = vld [vmem:[#allocation17 + $0xdc] sm:$0xf]
        %v3105 = vld [vmem:[#allocation17 + $0xe0] sm:$0xf]
        %v3106 = vld [vmem:[#allocation17 + $0xe4] sm:$0xf]
        %v3107 = vld [vmem:[#allocation17 + $0xe8] sm:$0xf]
        %v3108 = vld [vmem:[#allocation17 + $0xec] sm:$0xf]
        %v3109 = vld [vmem:[#allocation17 + $0xf0] sm:$0xf]
        %v3110 = vld [vmem:[#allocation17 + $0xf4] sm:$0xf]
        %v3111 = vld [vmem:[#allocation17 + $0xf8] sm:$0xf]
        %v3112 = vld [vmem:[#allocation17 + $0xfc] sm:$0xf]
        %v3113 = vld [vmem:[%s14] sm:$0x1]
        %v3115 = vlaneseq
        %v3116 = vshrl.u32 %v3115, 7
        %v3117 = vsub.s32 0, %v3116
        %v3118 = vrot.slane %v3113, %v3117
        %v3184 = vunpack.c.l.b16 %v3049
        %v3185 = vunpack.c.l.b16 %v3050
        %v3186 = vunpack.c.l.b16 %v3051
        %v3187 = vunpack.c.l.b16 %v3052
        %v3188 = vunpack.c.l.b16 %v3053
        %v3189 = vunpack.c.l.b16 %v3054
        %v3190 = vunpack.c.l.b16 %v3055
        %v3191 = vunpack.c.l.b16 %v3056
        %v3192 = vunpack.c.l.b16 %v3057
        %v3193 = vunpack.c.l.b16 %v3058
        %v3194 = vunpack.c.l.b16 %v3059
        %v3195 = vunpack.c.l.b16 %v3060
        %v3196 = vunpack.c.l.b16 %v3061
        %v3197 = vunpack.c.l.b16 %v3062
        %v3198 = vunpack.c.l.b16 %v3063
        %v3199 = vunpack.c.l.b16 %v3064
        %v3200 = vunpack.c.l.b16 %v3065
        %v3201 = vunpack.c.l.b16 %v3066
        %v3202 = vunpack.c.l.b16 %v3067
        %v3203 = vunpack.c.l.b16 %v3068
        %v3204 = vunpack.c.l.b16 %v3069
        %v3205 = vunpack.c.l.b16 %v3070
        %v3206 = vunpack.c.l.b16 %v3071
        %v3207 = vunpack.c.l.b16 %v3072
        %v3208 = vunpack.c.l.b16 %v3073
        %v3209 = vunpack.c.l.b16 %v3074
        %v3210 = vunpack.c.l.b16 %v3075
        %v3211 = vunpack.c.l.b16 %v3076
        %v3212 = vunpack.c.l.b16 %v3077
        %v3213 = vunpack.c.l.b16 %v3078
        %v3214 = vunpack.c.l.b16 %v3079
        %v3215 = vunpack.c.l.b16 %v3080
        %v3216 = vunpack.c.l.b16 %v3081
        %v3217 = vunpack.c.l.b16 %v3082
        %v3218 = vunpack.c.l.b16 %v3083
        %v3219 = vunpack.c.l.b16 %v3084
        %v3220 = vunpack.c.l.b16 %v3085
        %v3221 = vunpack.c.l.b16 %v3086
        %v3222 = vunpack.c.l.b16 %v3087
        %v3223 = vunpack.c.l.b16 %v3088
        %v3224 = vunpack.c.l.b16 %v3089
        %v3225 = vunpack.c.l.b16 %v3090
        %v3226 = vunpack.c.l.b16 %v3091
        %v3227 = vunpack.c.l.b16 %v3092
        %v3228 = vunpack.c.l.b16 %v3093
        %v3229 = vunpack.c.l.b16 %v3094
        %v3230 = vunpack.c.l.b16 %v3095
        %v3231 = vunpack.c.l.b16 %v3096
        %v3232 = vunpack.c.l.b16 %v3097
        %v3233 = vunpack.c.l.b16 %v3098
        %v3234 = vunpack.c.l.b16 %v3099
        %v3235 = vunpack.c.l.b16 %v3100
        %v3236 = vunpack.c.l.b16 %v3101
        %v3237 = vunpack.c.l.b16 %v3102
        %v3238 = vunpack.c.l.b16 %v3103
        %v3239 = vunpack.c.l.b16 %v3104
        %v3240 = vunpack.c.l.b16 %v3105
        %v3241 = vunpack.c.l.b16 %v3106
        %v3242 = vunpack.c.l.b16 %v3107
        %v3243 = vunpack.c.l.b16 %v3108
        %v3244 = vunpack.c.l.b16 %v3109
        %v3245 = vunpack.c.l.b16 %v3110
        %v3246 = vunpack.c.l.b16 %v3111
        %v3247 = vunpack.c.l.b16 %v3112
        %v3248 = vpack.c.b16 %v3185, %v3184
        %v3249 = vpack.c.b16 %v3187, %v3186
        %v3250 = vpack.c.b16 %v3189, %v3188
        %v3251 = vpack.c.b16 %v3191, %v3190
        %v3252 = vpack.c.b16 %v3193, %v3192
        %v3253 = vpack.c.b16 %v3195, %v3194
        %v3254 = vpack.c.b16 %v3197, %v3196
        %v3255 = vpack.c.b16 %v3199, %v3198
        %v3256 = vpack.c.b16 %v3201, %v3200
        %v3257 = vpack.c.b16 %v3203, %v3202
        %v3258 = vpack.c.b16 %v3205, %v3204
        %v3259 = vpack.c.b16 %v3207, %v3206
        %v3260 = vpack.c.b16 %v3209, %v3208
        %v3261 = vpack.c.b16 %v3211, %v3210
        %v3262 = vpack.c.b16 %v3213, %v3212
        %v3263 = vpack.c.b16 %v3215, %v3214
        %v3264 = vpack.c.b16 %v3217, %v3216
        %v3265 = vpack.c.b16 %v3219, %v3218
        %v3266 = vpack.c.b16 %v3221, %v3220
        %v3267 = vpack.c.b16 %v3223, %v3222
        %v3268 = vpack.c.b16 %v3225, %v3224
        %v3269 = vpack.c.b16 %v3227, %v3226
        %v3270 = vpack.c.b16 %v3229, %v3228
        %v3271 = vpack.c.b16 %v3231, %v3230
        %v3272 = vpack.c.b16 %v3233, %v3232
        %v3273 = vpack.c.b16 %v3235, %v3234
        %v3274 = vpack.c.b16 %v3237, %v3236
        %v3275 = vpack.c.b16 %v3239, %v3238
        %v3276 = vpack.c.b16 %v3241, %v3240
        %v3277 = vpack.c.b16 %v3243, %v3242
        %v3278 = vpack.c.b16 %v3245, %v3244
        %v3279 = vpack.c.b16 %v3247, %v3246
        %3312 = vmatprep.subr.bf16.mxu0 0
        %3313 = vmatpush1.bf16.msra.mxu0 %v3255
        %3314 = vmatprep.subr.bf16.mxu0 0
        %3315 = vmatpush1.bf16.msra.mxu0 %v3254
        %3316 = vmatprep.subr.bf16.mxu0 0
        %3317 = vmatpush1.bf16.msra.mxu0 %v3253
        %3318 = vmatprep.subr.bf16.mxu0 0
        %3319 = vmatpush1.bf16.msra.mxu0 %v3252
        %3320 = vmatprep.subr.bf16.mxu0 0
        %3321 = vmatpush1.bf16.msra.mxu0 %v3251
        %3322 = vmatprep.subr.bf16.mxu0 0
        %3323 = vmatpush1.bf16.msra.mxu0 %v3250
        %3324 = vmatprep.subr.bf16.mxu0 0
        %3325 = vmatpush1.bf16.msra.mxu0 %v3249
        %3326 = vmatprep.subr.bf16.mxu0 0
        %3327 = vmatpush1.bf16.msra.mxu0 %v3248
        %3328 = vmatprep.subr.bf16.mxu0 0
        %3329 = vmatpush2.bf16.msra.mxu0 %v3263
        %3330 = vmatprep.subr.bf16.mxu0 0
        %3331 = vmatpush2.bf16.msra.mxu0 %v3262
        %3332 = vmatprep.subr.bf16.mxu0 0
        %3333 = vmatpush2.bf16.msra.mxu0 %v3261
        %3334 = vmatprep.subr.bf16.mxu0 0
        %3335 = vmatpush2.bf16.msra.mxu0 %v3260
        %3336 = vmatprep.subr.bf16.mxu0 0
        %3337 = vmatpush2.bf16.msra.mxu0 %v3259
        %3338 = vmatprep.subr.bf16.mxu0 0
        %3339 = vmatpush2.bf16.msra.mxu0 %v3258
        %3340 = vmatprep.subr.bf16.mxu0 0
        %3341 = vmatpush2.bf16.msra.mxu0 %v3257
        %3342 = vmatprep.subr.bf16.mxu0 0
        %3343 = vmatpush2.bf16.msra.mxu0 %v3256
        %3344 = vmatprep.mubr.bf16.mxu0 %v3042
        %3345 = vmatmul.mubr.bf16.gmra.mxu0 %v3041
        %v3346 = vpop.f32.mrf.mxu0
        %v3347 = vadd.f32 %v3118, %v3346
        %v3348 = vpop.f32.mrf.mxu0
        %v3349 = vpop.f32.mrf.mxu0
        %v3350 = vadd.f32 %v3118, %v3349
        %v3351 = vpop.f32.mrf.mxu0
        %3352 = vmatprep.mubr.bf16.mxu0 %v3046
        %3353 = vmatmul.mubr.bf16.gmra.mxu0 %v3045
        %v3354 = vpop.f32.mrf.mxu0
        %v3355 = vadd.f32 %v3118, %v3354
        %v3356 = vpop.f32.mrf.mxu0
        %v3357 = vpop.f32.mrf.mxu0
        %v3358 = vadd.f32 %v3118, %v3357
        %v3359 = vpop.f32.mrf.mxu0
        %3360 = vdwg.mxu0
        %3361 = vmatprep.subr.bf16.mxu0 0
        %3362 = vmatpush1.bf16.msra.mxu0 %v3271
        %3363 = vmatprep.subr.bf16.mxu0 0
        %3364 = vmatpush1.bf16.msra.mxu0 %v3270
        %3365 = vmatprep.subr.bf16.mxu0 0
        %3366 = vmatpush1.bf16.msra.mxu0 %v3269
        %3367 = vmatprep.subr.bf16.mxu0 0
        %3368 = vmatpush1.bf16.msra.mxu0 %v3268
        %3369 = vmatprep.subr.bf16.mxu0 0
        %3370 = vmatpush1.bf16.msra.mxu0 %v3267
        %3371 = vmatprep.subr.bf16.mxu0 0
        %3372 = vmatpush1.bf16.msra.mxu0 %v3266
        %3373 = vmatprep.subr.bf16.mxu0 0
        %3374 = vmatpush1.bf16.msra.mxu0 %v3265
        %3375 = vmatprep.subr.bf16.mxu0 0
        %3376 = vmatpush1.bf16.msra.mxu0 %v3264
        %3377 = vmatprep.subr.bf16.mxu0 0
        %3378 = vmatpush2.bf16.msra.mxu0 %v3279
        %3379 = vmatprep.subr.bf16.mxu0 0
        %3380 = vmatpush2.bf16.msra.mxu0 %v3278
        %3381 = vmatprep.subr.bf16.mxu0 0
        %3382 = vmatpush2.bf16.msra.mxu0 %v3277
        %3383 = vmatprep.subr.bf16.mxu0 0
        %3384 = vmatpush2.bf16.msra.mxu0 %v3276
        %3385 = vmatprep.subr.bf16.mxu0 0
        %3386 = vmatpush2.bf16.msra.mxu0 %v3275
        %3387 = vmatprep.subr.bf16.mxu0 0
        %3388 = vmatpush2.bf16.msra.mxu0 %v3274
        %3389 = vmatprep.subr.bf16.mxu0 0
        %3390 = vmatpush2.bf16.msra.mxu0 %v3273
        %3391 = vmatprep.subr.bf16.mxu0 0
        %3392 = vmatpush2.bf16.msra.mxu0 %v3272
        %3393 = vmatprep.mubr.bf16.mxu0 %v3044
        %3394 = vmatmul.mubr.bf16.gmra.mxu0 %v3043
        %v3395 = vpop.f32.mrf.mxu0
        %v3396 = vadd.f32 %v3347, %v3395
        %v3397 = vpop.f32.mrf.mxu0
        %v3398 = vpop.f32.mrf.mxu0
        %v3399 = vadd.f32 %v3350, %v3398
        %v3400 = vpop.f32.mrf.mxu0
        %3401 = vmatprep.mubr.bf16.mxu0 %v3048
        %3402 = vmatmul.mubr.bf16.gmra.mxu0 %v3047
        %v3403 = vpop.f32.mrf.mxu0
        %v3404 = vadd.f32 %v3355, %v3403
        %v3405 = vpop.f32.mrf.mxu0
        %v3406 = vpop.f32.mrf.mxu0
        %v3407 = vadd.f32 %v3358, %v3406
        %v3408 = vpop.f32.mrf.mxu0
        %3409 = vdwg.mxu0
        %v3410 = vadd.f32 %v3396, %v2699
        %v3411 = vadd.f32 %v3399, %v2700
        %v3412 = vadd.f32 %v3404, %v2701
        %v3413 = vadd.f32 %v3407, %v2702
        %3414 = vadd.xlane.f32.xlu0 %v3410
        %v3415 = vpop.xlane.xlu0 %3414
        %3416 = vadd.xlane.f32.xlu0 %v3411
        %v3417 = vpop.xlane.xlu0 %3416
        %3418 = vadd.xlane.f32.xlu0 %v3412
        %v3419 = vpop.xlane.xlu0 %3418
        %3420 = vadd.xlane.f32.xlu0 %v3413
        %v3421 = vpop.xlane.xlu0 %3420
        %v3422 = vmul.f32 %v3415, %v2644
        %v3423 = vmul.f32 %v3417, %v2644
        %v3424 = vmul.f32 %v3419, %v2644
        %v3425 = vmul.f32 %v3421, %v2644
        %v3426 = vsub.f32 %v3410, %v3422
        %v3427 = vsub.f32 %v3411, %v3423
        %v3428 = vsub.f32 %v3412, %v3424
        %v3429 = vsub.f32 %v3413, %v3425
        %v3430 = vmul.f32 %v3426, %v3426
        %v3431 = vmul.f32 %v3427, %v3427
        %v3432 = vmul.f32 %v3428, %v3428
        %v3433 = vmul.f32 %v3429, %v3429
        %3434 = vadd.xlane.f32.xlu0 %v3430
        %v3435 = vpop.xlane.xlu0 %3434
        %3436 = vadd.xlane.f32.xlu0 %v3431
        %v3437 = vpop.xlane.xlu0 %3436
        %3438 = vadd.xlane.f32.xlu0 %v3432
        %v3439 = vpop.xlane.xlu0 %3438
        %3440 = vadd.xlane.f32.xlu0 %v3433
        %v3441 = vpop.xlane.xlu0 %3440
        %v3442 = vmul.f32 %v3435, %v2644
        %v3443 = vmul.f32 %v3437, %v2644
        %v3444 = vmul.f32 %v3439, %v2644
        %v3445 = vmul.f32 %v3441, %v2644
        %v3446 = vadd.f32 %v3442, 1e-05
        %v3447 = vadd.f32 %v3443, 1e-05
        %v3448 = vadd.f32 %v3444, 1e-05
        %v3449 = vadd.f32 %v3445, 1e-05
        %v3450 = vrsqrt.pop %v3446
        %v3451 = vrsqrt.pop %v3447
        %v3452 = vrsqrt.pop %v3448
        %v3453 = vrsqrt.pop %v3449
        %v3454 = vmul.f32 %v3426, %v3450
        %v3455 = vmul.f32 %v3427, %v3451
        %v3456 = vmul.f32 %v3428, %v3452
        %v3457 = vmul.f32 %v3429, %v3453
        %v3458 = vld [vmem:[%s15] sm:$0x1]
        %v3460 = vlaneseq
        %v3461 = vshrl.u32 %v3460, 7
        %v3462 = vsub.s32 0, %v3461
        %v3463 = vrot.slane %v3458, %v3462
        %v3465 = vmul.f32 %v3454, %v3463
        %v3466 = vmul.f32 %v3455, %v3463
        %v3467 = vmul.f32 %v3456, %v3463
        %v3468 = vmul.f32 %v3457, %v3463
        %v3469 = vld [vmem:[%s16] sm:$0x1]
        %v3471 = vlaneseq
        %v3472 = vshrl.u32 %v3471, 7
        %v3473 = vsub.s32 0, %v3472
        %v3474 = vrot.slane %v3469, %v3473
        %v3476 = vadd.f32 %v3465, %v3474
        %v3477 = vadd.f32 %v3466, %v3474
        %v3478 = vadd.f32 %v3467, %v3474
        %v3479 = vadd.f32 %v3468, %v3474
        %3480 = vst [vmem:[%s774] sm:$0xff] %v3476
        %3481 = vst [vmem:[%s774 + $0x8] sm:$0xff] %v3477
        %3482 = vst [vmem:[%s774 + $0x10] sm:$0xff] %v3478
        %3483 = vst [vmem:[%s774 + $0x18] sm:$0xff] %v3479
        %s3484 = sand.u32 %s428, 1
        %s3485 = scalar_lea.sflag [#allocation4], %s3484
        %s3486 = sand.u32 %s428, 1
        %s3487 = smul.addr %s3486, 32
        %s3488 = scalar_lea.vmem [#allocation19], %s3487
        // Predicated region
        $region129: #{tpu_custom_call.1} parent=87 // pred_check
          %p3489 = pneg %p438
        $region130: #{tpu_custom_call.1} parent=87 // pred_check_branch
          %3491 = sbr.rel (%p3489) target = $region132
        $region131: #{tpu_custom_call.1} parent=87 // pred_region
          %s3492 = smul.u32 2, %s43
          %s3494 = ssub.s32 512, 512
          %3495 = vsyncadd %s3485, %s3494
          %s3496 = smul.addr %s3492, 2
          %s3497 = smul.addr %s3496, 128
          %s3498 = scalar_lea.hbm %s17, %s3497
          %s3499 = sshll.u32 %s3488, 4
          %s3500 = int_to_ptr.vmem [resolvable:$true] %s3499
          %3505 = dma.vmem_to_hbm [thread:$0]  %s3500, 512, %s3498, %s3485, 128, 128, 8
        $region132: #{tpu_custom_call.1} parent=87 // pred_fallthru
          _
      $region88: #{tpu_custom_call.1} parent=5 // pred_fallthru
        _
      %p3506 = scmp.le.s32.totalorder 2, %s38
      // Predicated region
      $region133: #{tpu_custom_call.1} parent=5 // pred_check
        %p3507 = pneg %p3506
      $region134: #{tpu_custom_call.1} parent=5 // pred_check_branch
        %3509 = sbr.rel (%p3507) target = $region136
      $region135: #{tpu_custom_call.1} parent=5 // pred_region
        %s3510 = ssub.s32 %s38, 2
        // Predicated region
        $region137: #{tpu_custom_call.1} parent=135 // pred_check
          %p3511 = pneg %p444
        $region138: #{tpu_custom_call.1} parent=135 // pred_check_branch
          %3513 = sbr.rel (%p3511) target = $region140
        $region139: #{tpu_custom_call.1} parent=135 // pred_region
          %s3514 = sand.u32 %s429, 1
          %s3515 = scalar_lea.sflag [#allocation4], %s3514
          %s3516 = sand.u32 %s429, 1
          %s3517 = smul.addr %s3516, 32
          %s3518 = scalar_lea.vmem [#allocation19], %s3517
          %3519 = dma.done %s3515, 512
        $region140: #{tpu_custom_call.1} parent=135 // pred_fallthru
          _
      $region136: #{tpu_custom_call.1} parent=5 // pred_fallthru
        _
    $region6: #{tpu_custom_call.1} parent=1 // loop_footer
      %s42 = sadd.s32 1, %s38
    $region7: #{tpu_custom_call.1} parent=1 // loop_footer_branch
      %37 = sbr.rel target = $region3
    $region8: #{tpu_custom_call.1} parent=1 // loop_exit
      _
    %3520 = vsyncpa [#allocation3], 1
    %s3521 = scalar_lea.sflag [#allocation3], 1
    %3522 = vsyncpa %s3521, 1
    %3523 = vsyncpa [#allocation6], 1
    %s3524 = scalar_lea.sflag [#allocation6], 1
    %3525 = vsyncpa %s3524, 1
    %3526 = vsyncpa [#allocation9], 1
    %s3527 = scalar_lea.sflag [#allocation9], 1
    %3528 = vsyncpa %s3527, 1
    %3529 = vsyncpa [#allocation12], 1
    %3530 = vsyncpa [#allocation15], 1
    %3531 = vsyncpa [#allocation18], 1
    %3532 = vsyncpa [#allocation4], 1
    %s3533 = scalar_lea.sflag [#allocation4], 1
    %3534 = vsyncpa %s3533, 1

</llo_original>
